<compile_context>
chip_gen: v7x
topology: tpu7x:2x2x1
jax: 0.10.0
libtpu: 0.0.40
codegen_flags: <defaults>
</compile_context>

<pallas_src>
from functools import partial

import jax
import jax.numpy as jnp
import numpy as np
from jax.experimental import pallas as pl
from jax.experimental.pallas import tpu as pltpu


def _csa_kernel(x_ref, pos_ref, w_ref, gamma_ref, beta_ref, o_ref,
                qkv_ref, kT_ref, acc_ref, *, num_heads, eps):
    """One batch element per grid step.

    x_ref:      (1, C, N)  channel-major input slab for this batch
    pos_ref:    (N, C)     positional embedding (shared across batches)
    w_ref:      (C, 3C)    qkv weight^T; Q columns pre-scaled by 1/sqrt(head_dim)
    gamma/beta: (1, C)     LayerNorm affine params
    o_ref:      (1, C, N)  output slab (channel-major, same layout as input)
    qkv_ref:    (N, 3C)    f32 VMEM scratch
    kT_ref:     (C, N)     f32 VMEM scratch (hoisted K^T)
    acc_ref:    (N, C)     f32 VMEM scratch (per-head attention outputs)
    """
    C, N = x_ref.shape[1], x_ref.shape[2]
    hd = C // num_heads

    # In-kernel layout change (C, N) -> (N, C): one XLU transpose, plus pos add.
    x = x_ref[0].astype(jnp.float32).T + pos_ref[...].astype(jnp.float32)

    # Single MXU pass for the QKV projection: (N, C) @ (C, 3C).
    qkv = jnp.dot(x, w_ref[...].astype(jnp.float32),
                  preferred_element_type=jnp.float32)
    qkv_ref[...] = qkv
    # Hoist K^T once per batch: (N, C) -> (C, N).  Per-head K then becomes a
    # cheap sublane slice instead of 8 small per-head transposes.
    kT_ref[...] = qkv[:, C:2 * C].T

    # Heads fully unrolled at trace time (num_heads = 8 at these shapes).
    for h in range(num_heads):
        c0 = h * hd
        q = qkv_ref[:, c0:c0 + hd]                     # (N, hd), Q pre-scaled
        kT = kT_ref[c0:c0 + hd, :]                     # (hd, N)  sublane slice
        v = qkv_ref[:, 2 * C + c0:2 * C + c0 + hd]     # (N, hd)

        dots = jnp.dot(q, kT, preferred_element_type=jnp.float32)     # (N, N)
        dots = dots - jnp.max(dots, axis=-1, keepdims=True)
        p = jnp.exp(dots)
        denom = jnp.sum(p, axis=-1, keepdims=True)                    # (N, 1)
        o_h = jnp.dot(p, v, preferred_element_type=jnp.float32)       # (N, hd)
        # Deferred softmax normalization: scale the small (N, hd) output, not
        # the (N, N) probability matrix; approx reciprocal uses the EUP slot.
        acc_ref[:, c0:c0 + hd] = o_h * pl.reciprocal(denom, approx=True)

    # LayerNorm over the feature (last) dim + sigmoid on (N, C), then emit in
    # the channel-major (C, N) layout the wrapper expects (one XLU transpose).
    y = acc_ref[...]
    mu = jnp.mean(y, axis=-1, keepdims=True)
    var = jnp.mean((y - mu) ** 2, axis=-1, keepdims=True)
    yn = (y - mu) * jax.lax.rsqrt(var + eps)
    yn = yn * gamma_ref[...] + beta_ref[...]           # (1, C) broadcasts over rows
    o_ref[0] = jax.nn.sigmoid(yn).T.astype(o_ref.dtype)


def channel_self_attention(x, pos_embedding, w_qkv, gamma, beta,
                           *, num_heads=8, eps=1e-5):
    """x: (B, C, H, W) NCHW.  pos_embedding: (1, H*W, C).  w_qkv: (3C, C).

    Implements the is_multi_dir=False forward path of ChannleSelfAttention.
    """
    B, C, H, W = x.shape
    N = H * W
    assert C % num_heads == 0
    hd = C // num_heads
    scale = hd ** (-0.5)

    # Free reshapes only (no XLA transposes): the kernel consumes/produces the
    # native channel-major (B, C, N) layout and transposes in-kernel on the XLU.
    x_cn = x.reshape(B, C, N)
    pos = pos_embedding.reshape(N, C)
    w_t = w_qkv.T                                                 # (C, 3C)
    # Fold the 1/sqrt(head_dim) softmax scale into the Q projection columns.
    w_t = jnp.concatenate([w_t[:, :C] * scale, w_t[:, C:]], axis=1)
    gamma2 = gamma.reshape(1, C)
    beta2 = beta.reshape(1, C)

    kernel = partial(_csa_kernel, num_heads=num_heads, eps=eps)

    # Advisory cost estimate for XLA's scheduler.
    flops = B * (2 * N * C * (3 * C)                    # qkv projection
                 + num_heads * 2 * (2 * N * N * hd))    # qk^T and pv matmuls
    transcendentals = B * (num_heads * N * N + N * C)   # exp + sigmoid
    bytes_accessed = 4 * (2 * B * C * N + N * C + C * 3 * C + 2 * C)

    out_cn = pl.pallas_call(
        kernel,
        out_shape=jax.ShapeDtypeStruct((B, C, N), x.dtype),
        grid_spec=pltpu.PrefetchScalarGridSpec(
            num_scalar_prefetch=0,
            grid=(B,),
            in_specs=[
                pl.BlockSpec((1, C, N), lambda b: (b, 0, 0)),     # x (per batch)
                pl.BlockSpec((N, C), lambda b: (0, 0)),           # pos (shared)
                pl.BlockSpec((C, 3 * C), lambda b: (0, 0)),       # qkv weight^T
                pl.BlockSpec((1, C), lambda b: (0, 0)),           # gamma
                pl.BlockSpec((1, C), lambda b: (0, 0)),           # beta
            ],
            out_specs=pl.BlockSpec((1, C, N), lambda b: (b, 0, 0)),
            scratch_shapes=[
                pltpu.VMEM((N, 3 * C), jnp.float32),   # qkv
                pltpu.VMEM((C, N), jnp.float32),       # hoisted K^T
                pltpu.VMEM((N, C), jnp.float32),       # attention output
            ],
        ),
        compiler_params=pltpu.CompilerParams(
            dimension_semantics=("parallel",)),        # v7x: batch across 2 TCs
        cost_estimate=pl.CostEstimate(flops=flops,
                                      transcendentals=transcendentals,
                                      bytes_accessed=bytes_accessed),
    )(x_cn, pos, w_t, gamma2, beta2)

    # Only a free reshape remains on the output side.
    return out_cn.reshape(B, C, H, W)


def reference(x, pos_embedding, w_qkv, gamma, beta, *, num_heads=8, eps=1e-5):
    """Pure-JAX mirror of the PyTorch forward (is_multi_dir=False)."""
    B, C, H, W = x.shape
    N = H * W
    xt = jnp.transpose(x.reshape(B, C, N), (0, 2, 1)) + pos_embedding    # (B,N,C)
    qkv = xt @ w_qkv.T                                                   # (B,N,3C)
    hd = C // num_heads
    qkv = qkv.reshape(B, N, 3, num_heads, hd).transpose(2, 0, 3, 1, 4)
    q, k, v = qkv[0], qkv[1], qkv[2]                                     # (B,h,N,hd)
    dots = jnp.einsum('bhnd,bhmd->bhnm', q, k) * (hd ** (-0.5))
    attn = jax.nn.softmax(dots, axis=-1)
    o = jnp.einsum('bhnm,bhmd->bhnd', attn, v)
    o = o.transpose(0, 2, 1, 3).reshape(B, N, C)
    mu = o.mean(-1, keepdims=True)
    var = ((o - mu) ** 2).mean(-1, keepdims=True)
    o = (o - mu) / jnp.sqrt(var + eps) * gamma + beta
    o = jnp.transpose(o, (0, 2, 1)).reshape(B, C, H, W)
    return jax.nn.sigmoid(o)


if __name__ == "__main__":
    # Module config implied by the forward: channels_in = H*W, vec_len = C.
    B, C, H, W = 2, 64, 8, 8          # vec_len = 64, channels_in = 64, num_heads = 8
    num_heads = 8
    N = H * W

    key = jax.random.PRNGKey(0)
    k0, k1, k2, k3, k4 = jax.random.split(key, 5)

    x = jax.random.normal(k0, (B, C, H, W), dtype=jnp.float32)
    pos_embedding = jax.random.normal(k1, (1, N, C), dtype=jnp.float32)          # (1, channels_in, vec_len)
    w_qkv = jax.random.normal(k2, (3 * C, C), dtype=jnp.float32) / jnp.sqrt(C)   # Linear(vec_len, 3*vec_len, bias=False)
    gamma = 1.0 + 0.1 * jax.random.normal(k3, (C,), dtype=jnp.float32)           # LayerNorm weight
    beta = 0.05 * jax.random.normal(k4, (C,), dtype=jnp.float32)                 # LayerNorm bias

    out = channel_self_attention(x, pos_embedding, w_qkv, gamma, beta,
                                 num_heads=num_heads)
    out = jax.block_until_ready(out)

    ref = reference(x, pos_embedding, w_qkv, gamma, beta, num_heads=num_heads)
    # Tolerance relaxed vs. exact-recip version because the deferred softmax
    # normalization now uses the approximate EUP reciprocal (vrcp).
    np.testing.assert_allclose(np.asarray(out), np.asarray(ref),
                               rtol=2e-3, atol=2e-3)
    print("KERNEL_OK")
</pallas_src>

<mosaic_0001>
module attributes {stable_mosaic.version = 11 : i64} {
  func.func @_csa_kernel(%arg0: i32, %arg1: memref<1x64x64xf32, #tpu.memory_space<vmem>>, %arg2: memref<64x64xf32, #tpu.memory_space<vmem>>, %arg3: memref<64x192xf32, #tpu.memory_space<vmem>>, %arg4: memref<1x64xf32, #tpu.memory_space<vmem>>, %arg5: memref<1x64xf32, #tpu.memory_space<vmem>>, %arg6: memref<1x64x64xf32, #tpu.memory_space<vmem>>, %arg7: memref<64x192xf32, #tpu.memory_space<vmem>>, %arg8: memref<64x64xf32, #tpu.memory_space<vmem>>, %arg9: memref<64x64xf32, #tpu.memory_space<vmem>>) attributes {dimension_semantics = [#tpu.dimension_semantics<parallel>], iteration_bounds = array<i64: 2>, scalar_prefetch = 0 : i64, scratch_operands = 3 : i64, tpu.core_type = #tpu.core_type<tc>, window_params = [{transform_indices = @transform_0, window_bounds = array<i64: 1, 64, 64>}, {pipeline_mode = #tpu.pipeline_mode<synchronous>, transform_indices = @transform_1, window_bounds = array<i64: 64, 64>}, {pipeline_mode = #tpu.pipeline_mode<synchronous>, transform_indices = @transform_2, window_bounds = array<i64: 64, 192>}, {pipeline_mode = #tpu.pipeline_mode<synchronous>, transform_indices = @transform_3, window_bounds = array<i64: 1, 64>}, {pipeline_mode = #tpu.pipeline_mode<synchronous>, transform_indices = @transform_4, window_bounds = array<i64: 1, 64>}, {transform_indices = @transform_5, window_bounds = array<i64: 1, 64, 64>}]} {
    %c0 = arith.constant 0 : index
    %c0_0 = arith.constant 0 : index
    %c0_1 = arith.constant 0 : index
    %0 = vector.load %arg1[%c0, %c0_0, %c0_1] : memref<1x64x64xf32, #tpu.memory_space<vmem>>, vector<1x64x64xf32>
    %1 = vector.shape_cast %0 : vector<1x64x64xf32> to vector<64x64xf32>
    %2 = tpu.transpose %1, [1, 0] : vector<64x64xf32> -> vector<64x64xf32>
    %c0_2 = arith.constant 0 : index
    %c0_3 = arith.constant 0 : index
    %3 = vector.load %arg2[%c0_2, %c0_3] : memref<64x64xf32, #tpu.memory_space<vmem>>, vector<64x64xf32>
    %4 = arith.addf %2, %3 : vector<64x64xf32>
    %c0_4 = arith.constant 0 : index
    %c0_5 = arith.constant 0 : index
    %5 = vector.load %arg3[%c0_4, %c0_5] : memref<64x192xf32, #tpu.memory_space<vmem>>, vector<64x192xf32>
    %cst = arith.constant dense<0.000000e+00> : vector<64x192xf32>
    %6 = tpu.matmul %4, %5, %cst {dimension_numbers = #tpu.dot_dimension_numbers<[1], [0], [0], [1], [0, 0, 1, 1], [], []>} : vector<64x64xf32>, vector<64x192xf32>, vector<64x192xf32> -> vector<64x192xf32>
    %c0_6 = arith.constant 0 : index
    %c0_7 = arith.constant 0 : index
    %7 = vector.load %arg7[%c0_6, %c0_7] : memref<64x192xf32, #tpu.memory_space<vmem>>, vector<64x192xf32>
    tpu.vector_store %arg7[%c0_6, %c0_7], %6 {strides = array<i32>} : memref<64x192xf32, #tpu.memory_space<vmem>>, vector<64x192xf32>,
    %8 = vector.extract_strided_slice %6 {offsets = [0, 64], sizes = [64, 64], strides = [1, 1]} : vector<64x192xf32> to vector<64x64xf32>
    %9 = tpu.transpose %8, [1, 0] : vector<64x64xf32> -> vector<64x64xf32>
    %c0_8 = arith.constant 0 : index
    %c0_9 = arith.constant 0 : index
    %10 = vector.load %arg8[%c0_8, %c0_9] : memref<64x64xf32, #tpu.memory_space<vmem>>, vector<64x64xf32>
    tpu.vector_store %arg8[%c0_8, %c0_9], %9 {strides = array<i32>} : memref<64x64xf32, #tpu.memory_space<vmem>>, vector<64x64xf32>,
    %c0_10 = arith.constant 0 : index
    %c0_11 = arith.constant 0 : index
    %11 = vector.load %arg7[%c0_10, %c0_11] : memref<64x192xf32, #tpu.memory_space<vmem>>, vector<64x8xf32>
    %c0_12 = arith.constant 0 : index
    %c0_13 = arith.constant 0 : index
    %12 = vector.load %arg8[%c0_12, %c0_13] : memref<64x64xf32, #tpu.memory_space<vmem>>, vector<8x64xf32>
    %c0_14 = arith.constant 0 : index
    %c128 = arith.constant 128 : index
    %13 = vector.load %arg7[%c0_14, %c128] : memref<64x192xf32, #tpu.memory_space<vmem>>, vector<64x8xf32>
    %cst_15 = arith.constant dense<0.000000e+00> : vector<64x64xf32>
    %14 = tpu.matmul %11, %12, %cst_15 {dimension_numbers = #tpu.dot_dimension_numbers<[1], [0], [0], [1], [0, 0, 1, 1], [], []>} : vector<64x8xf32>, vector<8x64xf32>, vector<64x64xf32> -> vector<64x64xf32>
    %cst_16 = arith.constant dense<0xFF800000> : vector<64xf32>
    %15 = vector.multi_reduction <maximumf>, %14, %cst_16 [1] : vector<64x64xf32> to vector<64xf32>
    %16 = vector.shape_cast %15 : vector<64xf32> to vector<64x1xf32>
    %17 = vector.broadcast %16 : vector<64x1xf32> to vector<64x64xf32>
    %18 = arith.subf %14, %17 : vector<64x64xf32>
    %19 = math.exp %18 : vector<64x64xf32>
    %cst_17 = arith.constant dense<0.000000e+00> : vector<64xf32>
    %20 = vector.multi_reduction <add>, %19, %cst_17 [1] : vector<64x64xf32> to vector<64xf32>
    %21 = vector.shape_cast %20 : vector<64xf32> to vector<64x1xf32>
    %cst_18 = arith.constant dense<0.000000e+00> : vector<64x8xf32>
    %22 = tpu.matmul %19, %13, %cst_18 {dimension_numbers = #tpu.dot_dimension_numbers<[1], [0], [0], [1], [0, 0, 1, 1], [], []>} : vector<64x64xf32>, vector<64x8xf32>, vector<64x8xf32> -> vector<64x8xf32>
    %23 = tpu.reciprocal %21 {approx = true} : vector<64x1xf32> -> vector<64x1xf32>
    %24 = vector.broadcast %23 : vector<64x1xf32> to vector<64x8xf32>
    %25 = arith.mulf %22, %24 : vector<64x8xf32>
    %c0_19 = arith.constant 0 : index
    %c0_20 = arith.constant 0 : index
    %26 = vector.load %arg9[%c0_19, %c0_20] : memref<64x64xf32, #tpu.memory_space<vmem>>, vector<64x8xf32>
    tpu.vector_store %arg9[%c0_19, %c0_20], %25 {strides = array<i32>} : memref<64x64xf32, #tpu.memory_space<vmem>>, vector<64x8xf32>,
    %c0_21 = arith.constant 0 : index
    %c8 = arith.constant 8 : index
    %27 = vector.load %arg7[%c0_21, %c8] : memref<64x192xf32, #tpu.memory_space<vmem>>, vector<64x8xf32>
    %c8_22 = arith.constant 8 : index
    %c0_23 = arith.constant 0 : index
    %28 = vector.load %arg8[%c8_22, %c0_23] : memref<64x64xf32, #tpu.memory_space<vmem>>, vector<8x64xf32>
    %c0_24 = arith.constant 0 : index
    %c136 = arith.constant 136 : index
    %29 = vector.load %arg7[%c0_24, %c136] : memref<64x192xf32, #tpu.memory_space<vmem>>, vector<64x8xf32>
    %cst_25 = arith.constant dense<0.000000e+00> : vector<64x64xf32>
    %30 = tpu.matmul %27, %28, %cst_25 {dimension_numbers = #tpu.dot_dimension_numbers<[1], [0], [0], [1], [0, 0, 1, 1], [], []>} : vector<64x8xf32>, vector<8x64xf32>, vector<64x64xf32> -> vector<64x64xf32>
    %cst_26 = arith.constant dense<0xFF800000> : vector<64xf32>
    %31 = vector.multi_reduction <maximumf>, %30, %cst_26 [1] : vector<64x64xf32> to vector<64xf32>
    %32 = vector.shape_cast %31 : vector<64xf32> to vector<64x1xf32>
    %33 = vector.broadcast %32 : vector<64x1xf32> to vector<64x64xf32>
    %34 = arith.subf %30, %33 : vector<64x64xf32>
    %35 = math.exp %34 : vector<64x64xf32>
    %cst_27 = arith.constant dense<0.000000e+00> : vector<64xf32>
    %36 = vector.multi_reduction <add>, %35, %cst_27 [1] : vector<64x64xf32> to vector<64xf32>
    %37 = vector.shape_cast %36 : vector<64xf32> to vector<64x1xf32>
    %cst_28 = arith.constant dense<0.000000e+00> : vector<64x8xf32>
    %38 = tpu.matmul %35, %29, %cst_28 {dimension_numbers = #tpu.dot_dimension_numbers<[1], [0], [0], [1], [0, 0, 1, 1], [], []>} : vector<64x64xf32>, vector<64x8xf32>, vector<64x8xf32> -> vector<64x8xf32>
    %39 = tpu.reciprocal %37 {approx = true} : vector<64x1xf32> -> vector<64x1xf32>
    %40 = vector.broadcast %39 : vector<64x1xf32> to vector<64x8xf32>
    %41 = arith.mulf %38, %40 : vector<64x8xf32>
    %c0_29 = arith.constant 0 : index
    %c8_30 = arith.constant 8 : index
    %42 = vector.load %arg9[%c0_29, %c8_30] : memref<64x64xf32, #tpu.memory_space<vmem>>, vector<64x8xf32>
    tpu.vector_store %arg9[%c0_29, %c8_30], %41 {strides = array<i32>} : memref<64x64xf32, #tpu.memory_space<vmem>>, vector<64x8xf32>,
    %c0_31 = arith.constant 0 : index
    %c16 = arith.constant 16 : index
    %43 = vector.load %arg7[%c0_31, %c16] : memref<64x192xf32, #tpu.memory_space<vmem>>, vector<64x8xf32>
    %c16_32 = arith.constant 16 : index
    %c0_33 = arith.constant 0 : index
    %44 = vector.load %arg8[%c16_32, %c0_33] : memref<64x64xf32, #tpu.memory_space<vmem>>, vector<8x64xf32>
    %c0_34 = arith.constant 0 : index
    %c144 = arith.constant 144 : index
    %45 = vector.load %arg7[%c0_34, %c144] : memref<64x192xf32, #tpu.memory_space<vmem>>, vector<64x8xf32>
    %cst_35 = arith.constant dense<0.000000e+00> : vector<64x64xf32>
    %46 = tpu.matmul %43, %44, %cst_35 {dimension_numbers = #tpu.dot_dimension_numbers<[1], [0], [0], [1], [0, 0, 1, 1], [], []>} : vector<64x8xf32>, vector<8x64xf32>, vector<64x64xf32> -> vector<64x64xf32>
    %cst_36 = arith.constant dense<0xFF800000> : vector<64xf32>
    %47 = vector.multi_reduction <maximumf>, %46, %cst_36 [1] : vector<64x64xf32> to vector<64xf32>
    %48 = vector.shape_cast %47 : vector<64xf32> to vector<64x1xf32>
    %49 = vector.broadcast %48 : vector<64x1xf32> to vector<64x64xf32>
    %50 = arith.subf %46, %49 : vector<64x64xf32>
    %51 = math.exp %50 : vector<64x64xf32>
    %cst_37 = arith.constant dense<0.000000e+00> : vector<64xf32>
    %52 = vector.multi_reduction <add>, %51, %cst_37 [1] : vector<64x64xf32> to vector<64xf32>
    %53 = vector.shape_cast %52 : vector<64xf32> to vector<64x1xf32>
    %cst_38 = arith.constant dense<0.000000e+00> : vector<64x8xf32>
    %54 = tpu.matmul %51, %45, %cst_38 {dimension_numbers = #tpu.dot_dimension_numbers<[1], [0], [0], [1], [0, 0, 1, 1], [], []>} : vector<64x64xf32>, vector<64x8xf32>, vector<64x8xf32> -> vector<64x8xf32>
    %55 = tpu.reciprocal %53 {approx = true} : vector<64x1xf32> -> vector<64x1xf32>
    %56 = vector.broadcast %55 : vector<64x1xf32> to vector<64x8xf32>
    %57 = arith.mulf %54, %56 : vector<64x8xf32>
    %c0_39 = arith.constant 0 : index
    %c16_40 = arith.constant 16 : index
    %58 = vector.load %arg9[%c0_39, %c16_40] : memref<64x64xf32, #tpu.memory_space<vmem>>, vector<64x8xf32>
    tpu.vector_store %arg9[%c0_39, %c16_40], %57 {strides = array<i32>} : memref<64x64xf32, #tpu.memory_space<vmem>>, vector<64x8xf32>,
    %c0_41 = arith.constant 0 : index
    %c24 = arith.constant 24 : index
    %59 = vector.load %arg7[%c0_41, %c24] : memref<64x192xf32, #tpu.memory_space<vmem>>, vector<64x8xf32>
    %c24_42 = arith.constant 24 : index
    %c0_43 = arith.constant 0 : index
    %60 = vector.load %arg8[%c24_42, %c0_43] : memref<64x64xf32, #tpu.memory_space<vmem>>, vector<8x64xf32>
    %c0_44 = arith.constant 0 : index
    %c152 = arith.constant 152 : index
    %61 = vector.load %arg7[%c0_44, %c152] : memref<64x192xf32, #tpu.memory_space<vmem>>, vector<64x8xf32>
    %cst_45 = arith.constant dense<0.000000e+00> : vector<64x64xf32>
    %62 = tpu.matmul %59, %60, %cst_45 {dimension_numbers = #tpu.dot_dimension_numbers<[1], [0], [0], [1], [0, 0, 1, 1], [], []>} : vector<64x8xf32>, vector<8x64xf32>, vector<64x64xf32> -> vector<64x64xf32>
    %cst_46 = arith.constant dense<0xFF800000> : vector<64xf32>
    %63 = vector.multi_reduction <maximumf>, %62, %cst_46 [1] : vector<64x64xf32> to vector<64xf32>
    %64 = vector.shape_cast %63 : vector<64xf32> to vector<64x1xf32>
    %65 = vector.broadcast %64 : vector<64x1xf32> to vector<64x64xf32>
    %66 = arith.subf %62, %65 : vector<64x64xf32>
    %67 = math.exp %66 : vector<64x64xf32>
    %cst_47 = arith.constant dense<0.000000e+00> : vector<64xf32>
    %68 = vector.multi_reduction <add>, %67, %cst_47 [1] : vector<64x64xf32> to vector<64xf32>
    %69 = vector.shape_cast %68 : vector<64xf32> to vector<64x1xf32>
    %cst_48 = arith.constant dense<0.000000e+00> : vector<64x8xf32>
    %70 = tpu.matmul %67, %61, %cst_48 {dimension_numbers = #tpu.dot_dimension_numbers<[1], [0], [0], [1], [0, 0, 1, 1], [], []>} : vector<64x64xf32>, vector<64x8xf32>, vector<64x8xf32> -> vector<64x8xf32>
    %71 = tpu.reciprocal %69 {approx = true} : vector<64x1xf32> -> vector<64x1xf32>
    %72 = vector.broadcast %71 : vector<64x1xf32> to vector<64x8xf32>
    %73 = arith.mulf %70, %72 : vector<64x8xf32>
    %c0_49 = arith.constant 0 : index
    %c24_50 = arith.constant 24 : index
    %74 = vector.load %arg9[%c0_49, %c24_50] : memref<64x64xf32, #tpu.memory_space<vmem>>, vector<64x8xf32>
    tpu.vector_store %arg9[%c0_49, %c24_50], %73 {strides = array<i32>} : memref<64x64xf32, #tpu.memory_space<vmem>>, vector<64x8xf32>,
    %c0_51 = arith.constant 0 : index
    %c32 = arith.constant 32 : index
    %75 = vector.load %arg7[%c0_51, %c32] : memref<64x192xf32, #tpu.memory_space<vmem>>, vector<64x8xf32>
    %c32_52 = arith.constant 32 : index
    %c0_53 = arith.constant 0 : index
    %76 = vector.load %arg8[%c32_52, %c0_53] : memref<64x64xf32, #tpu.memory_space<vmem>>, vector<8x64xf32>
    %c0_54 = arith.constant 0 : index
    %c160 = arith.constant 160 : index
    %77 = vector.load %arg7[%c0_54, %c160] : memref<64x192xf32, #tpu.memory_space<vmem>>, vector<64x8xf32>
    %cst_55 = arith.constant dense<0.000000e+00> : vector<64x64xf32>
    %78 = tpu.matmul %75, %76, %cst_55 {dimension_numbers = #tpu.dot_dimension_numbers<[1], [0], [0], [1], [0, 0, 1, 1], [], []>} : vector<64x8xf32>, vector<8x64xf32>, vector<64x64xf32> -> vector<64x64xf32>
    %cst_56 = arith.constant dense<0xFF800000> : vector<64xf32>
    %79 = vector.multi_reduction <maximumf>, %78, %cst_56 [1] : vector<64x64xf32> to vector<64xf32>
    %80 = vector.shape_cast %79 : vector<64xf32> to vector<64x1xf32>
    %81 = vector.broadcast %80 : vector<64x1xf32> to vector<64x64xf32>
    %82 = arith.subf %78, %81 : vector<64x64xf32>
    %83 = math.exp %82 : vector<64x64xf32>
    %cst_57 = arith.constant dense<0.000000e+00> : vector<64xf32>
    %84 = vector.multi_reduction <add>, %83, %cst_57 [1] : vector<64x64xf32> to vector<64xf32>
    %85 = vector.shape_cast %84 : vector<64xf32> to vector<64x1xf32>
    %cst_58 = arith.constant dense<0.000000e+00> : vector<64x8xf32>
    %86 = tpu.matmul %83, %77, %cst_58 {dimension_numbers = #tpu.dot_dimension_numbers<[1], [0], [0], [1], [0, 0, 1, 1], [], []>} : vector<64x64xf32>, vector<64x8xf32>, vector<64x8xf32> -> vector<64x8xf32>
    %87 = tpu.reciprocal %85 {approx = true} : vector<64x1xf32> -> vector<64x1xf32>
    %88 = vector.broadcast %87 : vector<64x1xf32> to vector<64x8xf32>
    %89 = arith.mulf %86, %88 : vector<64x8xf32>
    %c0_59 = arith.constant 0 : index
    %c32_60 = arith.constant 32 : index
    %90 = vector.load %arg9[%c0_59, %c32_60] : memref<64x64xf32, #tpu.memory_space<vmem>>, vector<64x8xf32>
    tpu.vector_store %arg9[%c0_59, %c32_60], %89 {strides = array<i32>} : memref<64x64xf32, #tpu.memory_space<vmem>>, vector<64x8xf32>,
    %c0_61 = arith.constant 0 : index
    %c40 = arith.constant 40 : index
    %91 = vector.load %arg7[%c0_61, %c40] : memref<64x192xf32, #tpu.memory_space<vmem>>, vector<64x8xf32>
    %c40_62 = arith.constant 40 : index
    %c0_63 = arith.constant 0 : index
    %92 = vector.load %arg8[%c40_62, %c0_63] : memref<64x64xf32, #tpu.memory_space<vmem>>, vector<8x64xf32>
    %c0_64 = arith.constant 0 : index
    %c168 = arith.constant 168 : index
    %93 = vector.load %arg7[%c0_64, %c168] : memref<64x192xf32, #tpu.memory_space<vmem>>, vector<64x8xf32>
    %cst_65 = arith.constant dense<0.000000e+00> : vector<64x64xf32>
    %94 = tpu.matmul %91, %92, %cst_65 {dimension_numbers = #tpu.dot_dimension_numbers<[1], [0], [0], [1], [0, 0, 1, 1], [], []>} : vector<64x8xf32>, vector<8x64xf32>, vector<64x64xf32> -> vector<64x64xf32>
    %cst_66 = arith.constant dense<0xFF800000> : vector<64xf32>
    %95 = vector.multi_reduction <maximumf>, %94, %cst_66 [1] : vector<64x64xf32> to vector<64xf32>
    %96 = vector.shape_cast %95 : vector<64xf32> to vector<64x1xf32>
    %97 = vector.broadcast %96 : vector<64x1xf32> to vector<64x64xf32>
    %98 = arith.subf %94, %97 : vector<64x64xf32>
    %99 = math.exp %98 : vector<64x64xf32>
    %cst_67 = arith.constant dense<0.000000e+00> : vector<64xf32>
    %100 = vector.multi_reduction <add>, %99, %cst_67 [1] : vector<64x64xf32> to vector<64xf32>
    %101 = vector.shape_cast %100 : vector<64xf32> to vector<64x1xf32>
    %cst_68 = arith.constant dense<0.000000e+00> : vector<64x8xf32>
    %102 = tpu.matmul %99, %93, %cst_68 {dimension_numbers = #tpu.dot_dimension_numbers<[1], [0], [0], [1], [0, 0, 1, 1], [], []>} : vector<64x64xf32>, vector<64x8xf32>, vector<64x8xf32> -> vector<64x8xf32>
    %103 = tpu.reciprocal %101 {approx = true} : vector<64x1xf32> -> vector<64x1xf32>
    %104 = vector.broadcast %103 : vector<64x1xf32> to vector<64x8xf32>
    %105 = arith.mulf %102, %104 : vector<64x8xf32>
    %c0_69 = arith.constant 0 : index
    %c40_70 = arith.constant 40 : index
    %106 = vector.load %arg9[%c0_69, %c40_70] : memref<64x64xf32, #tpu.memory_space<vmem>>, vector<64x8xf32>
    tpu.vector_store %arg9[%c0_69, %c40_70], %105 {strides = array<i32>} : memref<64x64xf32, #tpu.memory_space<vmem>>, vector<64x8xf32>,
    %c0_71 = arith.constant 0 : index
    %c48 = arith.constant 48 : index
    %107 = vector.load %arg7[%c0_71, %c48] : memref<64x192xf32, #tpu.memory_space<vmem>>, vector<64x8xf32>
    %c48_72 = arith.constant 48 : index
    %c0_73 = arith.constant 0 : index
    %108 = vector.load %arg8[%c48_72, %c0_73] : memref<64x64xf32, #tpu.memory_space<vmem>>, vector<8x64xf32>
    %c0_74 = arith.constant 0 : index
    %c176 = arith.constant 176 : index
    %109 = vector.load %arg7[%c0_74, %c176] : memref<64x192xf32, #tpu.memory_space<vmem>>, vector<64x8xf32>
    %cst_75 = arith.constant dense<0.000000e+00> : vector<64x64xf32>
    %110 = tpu.matmul %107, %108, %cst_75 {dimension_numbers = #tpu.dot_dimension_numbers<[1], [0], [0], [1], [0, 0, 1, 1], [], []>} : vector<64x8xf32>, vector<8x64xf32>, vector<64x64xf32> -> vector<64x64xf32>
    %cst_76 = arith.constant dense<0xFF800000> : vector<64xf32>
    %111 = vector.multi_reduction <maximumf>, %110, %cst_76 [1] : vector<64x64xf32> to vector<64xf32>
    %112 = vector.shape_cast %111 : vector<64xf32> to vector<64x1xf32>
    %113 = vector.broadcast %112 : vector<64x1xf32> to vector<64x64xf32>
    %114 = arith.subf %110, %113 : vector<64x64xf32>
    %115 = math.exp %114 : vector<64x64xf32>
    %cst_77 = arith.constant dense<0.000000e+00> : vector<64xf32>
    %116 = vector.multi_reduction <add>, %115, %cst_77 [1] : vector<64x64xf32> to vector<64xf32>
    %117 = vector.shape_cast %116 : vector<64xf32> to vector<64x1xf32>
    %cst_78 = arith.constant dense<0.000000e+00> : vector<64x8xf32>
    %118 = tpu.matmul %115, %109, %cst_78 {dimension_numbers = #tpu.dot_dimension_numbers<[1], [0], [0], [1], [0, 0, 1, 1], [], []>} : vector<64x64xf32>, vector<64x8xf32>, vector<64x8xf32> -> vector<64x8xf32>
    %119 = tpu.reciprocal %117 {approx = true} : vector<64x1xf32> -> vector<64x1xf32>
    %120 = vector.broadcast %119 : vector<64x1xf32> to vector<64x8xf32>
    %121 = arith.mulf %118, %120 : vector<64x8xf32>
    %c0_79 = arith.constant 0 : index
    %c48_80 = arith.constant 48 : index
    %122 = vector.load %arg9[%c0_79, %c48_80] : memref<64x64xf32, #tpu.memory_space<vmem>>, vector<64x8xf32>
    tpu.vector_store %arg9[%c0_79, %c48_80], %121 {strides = array<i32>} : memref<64x64xf32, #tpu.memory_space<vmem>>, vector<64x8xf32>,
    %c0_81 = arith.constant 0 : index
    %c56 = arith.constant 56 : index
    %123 = vector.load %arg7[%c0_81, %c56] : memref<64x192xf32, #tpu.memory_space<vmem>>, vector<64x8xf32>
    %c56_82 = arith.constant 56 : index
    %c0_83 = arith.constant 0 : index
    %124 = vector.load %arg8[%c56_82, %c0_83] : memref<64x64xf32, #tpu.memory_space<vmem>>, vector<8x64xf32>
    %c0_84 = arith.constant 0 : index
    %c184 = arith.constant 184 : index
    %125 = vector.load %arg7[%c0_84, %c184] : memref<64x192xf32, #tpu.memory_space<vmem>>, vector<64x8xf32>
    %cst_85 = arith.constant dense<0.000000e+00> : vector<64x64xf32>
    %126 = tpu.matmul %123, %124, %cst_85 {dimension_numbers = #tpu.dot_dimension_numbers<[1], [0], [0], [1], [0, 0, 1, 1], [], []>} : vector<64x8xf32>, vector<8x64xf32>, vector<64x64xf32> -> vector<64x64xf32>
    %cst_86 = arith.constant dense<0xFF800000> : vector<64xf32>
    %127 = vector.multi_reduction <maximumf>, %126, %cst_86 [1] : vector<64x64xf32> to vector<64xf32>
    %128 = vector.shape_cast %127 : vector<64xf32> to vector<64x1xf32>
    %129 = vector.broadcast %128 : vector<64x1xf32> to vector<64x64xf32>
    %130 = arith.subf %126, %129 : vector<64x64xf32>
    %131 = math.exp %130 : vector<64x64xf32>
    %cst_87 = arith.constant dense<0.000000e+00> : vector<64xf32>
    %132 = vector.multi_reduction <add>, %131, %cst_87 [1] : vector<64x64xf32> to vector<64xf32>
    %133 = vector.shape_cast %132 : vector<64xf32> to vector<64x1xf32>
    %cst_88 = arith.constant dense<0.000000e+00> : vector<64x8xf32>
    %134 = tpu.matmul %131, %125, %cst_88 {dimension_numbers = #tpu.dot_dimension_numbers<[1], [0], [0], [1], [0, 0, 1, 1], [], []>} : vector<64x64xf32>, vector<64x8xf32>, vector<64x8xf32> -> vector<64x8xf32>
    %135 = tpu.reciprocal %133 {approx = true} : vector<64x1xf32> -> vector<64x1xf32>
    %136 = vector.broadcast %135 : vector<64x1xf32> to vector<64x8xf32>
    %137 = arith.mulf %134, %136 : vector<64x8xf32>
    %c0_89 = arith.constant 0 : index
    %c56_90 = arith.constant 56 : index
    %138 = vector.load %arg9[%c0_89, %c56_90] : memref<64x64xf32, #tpu.memory_space<vmem>>, vector<64x8xf32>
    tpu.vector_store %arg9[%c0_89, %c56_90], %137 {strides = array<i32>} : memref<64x64xf32, #tpu.memory_space<vmem>>, vector<64x8xf32>,
    %c0_91 = arith.constant 0 : index
    %c0_92 = arith.constant 0 : index
    %139 = vector.load %arg9[%c0_91, %c0_92] : memref<64x64xf32, #tpu.memory_space<vmem>>, vector<64x64xf32>
    %cst_93 = arith.constant dense<0.000000e+00> : vector<64xf32>
    %140 = vector.multi_reduction <add>, %139, %cst_93 [1] : vector<64x64xf32> to vector<64xf32>
    %141 = vector.shape_cast %140 : vector<64xf32> to vector<64x1xf32>
    %cst_94 = arith.constant 6.400000e+01 : f32
    %142 = vector.broadcast %cst_94 : f32 to vector<64x1xf32>
    %143 = arith.divf %141, %142 : vector<64x1xf32>
    %144 = vector.broadcast %143 : vector<64x1xf32> to vector<64x64xf32>
    %145 = arith.subf %139, %144 : vector<64x64xf32>
    %146 = arith.mulf %145, %145 : vector<64x64xf32>
    %cst_95 = arith.constant dense<0.000000e+00> : vector<64xf32>
    %147 = vector.multi_reduction <add>, %146, %cst_95 [1] : vector<64x64xf32> to vector<64xf32>
    %148 = vector.shape_cast %147 : vector<64xf32> to vector<64x1xf32>
    %cst_96 = arith.constant 6.400000e+01 : f32
    %149 = vector.broadcast %cst_96 : f32 to vector<64x1xf32>
    %150 = arith.divf %148, %149 : vector<64x1xf32>
    %151 = vector.broadcast %143 : vector<64x1xf32> to vector<64x64xf32>
    %152 = arith.subf %139, %151 : vector<64x64xf32>
    %cst_97 = arith.constant 9.99999974E-6 : f32
    %153 = vector.broadcast %cst_97 : f32 to vector<64x1xf32>
    %154 = arith.addf %150, %153 : vector<64x1xf32>
    %155 = math.rsqrt %154 : vector<64x1xf32>
    %156 = vector.broadcast %155 : vector<64x1xf32> to vector<64x64xf32>
    %157 = arith.mulf %152, %156 : vector<64x64xf32>
    %c0_98 = arith.constant 0 : index
    %c0_99 = arith.constant 0 : index
    %158 = vector.load %arg4[%c0_98, %c0_99] : memref<1x64xf32, #tpu.memory_space<vmem>>, vector<1x64xf32>
    %159 = vector.broadcast %158 : vector<1x64xf32> to vector<64x64xf32>
    %160 = arith.mulf %157, %159 : vector<64x64xf32>
    %c0_100 = arith.constant 0 : index
    %c0_101 = arith.constant 0 : index
    %161 = vector.load %arg5[%c0_100, %c0_101] : memref<1x64xf32, #tpu.memory_space<vmem>>, vector<1x64xf32>
    %162 = vector.broadcast %161 : vector<1x64xf32> to vector<64x64xf32>
    %163 = arith.addf %160, %162 : vector<64x64xf32>
    %164 = arith.negf %163 : vector<64x64xf32>
    %165 = math.exp %164 : vector<64x64xf32>
    %cst_102 = arith.constant 1.000000e+00 : f32
    %166 = vector.broadcast %cst_102 : f32 to vector<64x64xf32>
    %167 = arith.addf %166, %165 : vector<64x64xf32>
    %168 = arith.divf %166, %167 : vector<64x64xf32>
    %169 = tpu.transpose %168, [1, 0] : vector<64x64xf32> -> vector<64x64xf32>
    %c0_103 = arith.constant 0 : index
    %c0_104 = arith.constant 0 : index
    %c0_105 = arith.constant 0 : index
    %170 = vector.load %arg6[%c0_103, %c0_104, %c0_105] : memref<1x64x64xf32, #tpu.memory_space<vmem>>, vector<1x64x64xf32>
    %171 = vector.shape_cast %170 : vector<1x64x64xf32> to vector<64x64xf32>
    %172 = vector.shape_cast %169 : vector<64x64xf32> to vector<1x64x64xf32>
    tpu.vector_store %arg6[%c0_103, %c0_104, %c0_105], %172 {strides = array<i32>} : memref<1x64x64xf32, #tpu.memory_space<vmem>>, vector<1x64x64xf32>,
    return
  }
  func.func @transform_0(%arg0: i32) -> (i32, i32, i32) {
    %c0_i32 = arith.constant 0 : i32
    %c0_i32_0 = arith.constant 0 : i32
    %c0_i32_1 = arith.constant 0 : i32
    return %arg0, %c0_i32, %c0_i32_0 : i32, i32, i32
  }
  func.func @transform_1(%arg0: i32) -> (i32, i32) {
    %c0_i32 = arith.constant 0 : i32
    %c0_i32_0 = arith.constant 0 : i32
    %c0_i32_1 = arith.constant 0 : i32
    return %c0_i32, %c0_i32_0 : i32, i32
  }
  func.func @transform_2(%arg0: i32) -> (i32, i32) {
    %c0_i32 = arith.constant 0 : i32
    %c0_i32_0 = arith.constant 0 : i32
    %c0_i32_1 = arith.constant 0 : i32
    return %c0_i32, %c0_i32_0 : i32, i32
  }
  func.func @transform_3(%arg0: i32) -> (i32, i32) {
    %c0_i32 = arith.constant 0 : i32
    %c0_i32_0 = arith.constant 0 : i32
    %c0_i32_1 = arith.constant 0 : i32
    return %c0_i32, %c0_i32_0 : i32, i32
  }
  func.func @transform_4(%arg0: i32) -> (i32, i32) {
    %c0_i32 = arith.constant 0 : i32
    %c0_i32_0 = arith.constant 0 : i32
    %c0_i32_1 = arith.constant 0 : i32
    return %c0_i32, %c0_i32_0 : i32, i32
  }
  func.func @transform_5(%arg0: i32) -> (i32, i32, i32) {
    %c0_i32 = arith.constant 0 : i32
    %c0_i32_0 = arith.constant 0 : i32
    %c0_i32_1 = arith.constant 0 : i32
    return %arg0, %c0_i32, %c0_i32_0 : i32, i32, i32
  }
}

</mosaic_0001>

<llo_original>
// kernel: tpu_custom_call.1
$region0: #{tpu_custom_call.1}
  #allocation0 [shape = 'u32[]', space=smem, size = 0x4, offset = 0x4, fixed_abs, tag = 'smem constant byte address 0x4 - core index']
  #allocation1 [shape = 'u32[144,128]{1,0:T(1,128)}', space=vmem, size = 0x12000, scoped, tag = 'internal scratch']
  #allocation2 [shape = 'f32[64,192]{1,0:T(8,128)}', space=vmem, size = 0x10000, scoped, tag = 'scratch operand']
  #allocation3 [shape = 'f32[64,64]{1,0:T(8,128)}', space=vmem, size = 0x8000, scoped, tag = 'scratch operand']
  #allocation4 [shape = 'f32[64,64]{1,0:T(8,128)}', space=vmem, size = 0x8000, scoped, tag = 'scratch operand']
  %s0 = inlined_call_operand.hbm [shape: f32[2,64,64], index: 0, kind: input, shape index: {}]
  %s1 = inlined_call_operand.hbm [shape: f32[64,64], index: 1, kind: input, shape index: {}]
  %s2 = inlined_call_operand.hbm [shape: f32[64,192], index: 2, kind: input, shape index: {}]
  %s3 = inlined_call_operand.vmem [shape: f32[1,64], index: 3, kind: input, shape index: {}]
  %s4 = inlined_call_operand.vmem [shape: f32[1,64], index: 4, kind: input, shape index: {}]
  %s5 = inlined_call_operand.hbm [shape: f32[2,64,64], index: 5, kind: output, shape index: {}]
  %s6 = sld [smem:[#allocation0]]
  $region65: #{tpu_custom_call.1} parent=0
    _
  %s8 = ssub.s32 1, %s6
  %s9 = scalar_select 0, %s8, %s6
  $region1: #{tpu_custom_call.1} parent=0
    #allocation5 [shape = 'u8[65536]{0}', space=vmem, size = 0x10000, scoped, tag = 'input window, operand 0']
    #allocation6 [shape = 's32[2]{0}', space=sflag, size = 0x8, scoped, tag = 'scoped memory for tpu_custom_call.1']
    #allocation7 [shape = 's32[2]{0}', space=sflag, size = 0x8, scoped, tag = 'scoped memory for tpu_custom_call.1']
    #allocation8 [shape = 'u8[32768]{0}', space=vmem, size = 0x8000, scoped, tag = 'input window, operand 1, single buffered']
    #allocation9 [shape = 's32[1]{0}', space=sflag, size = 0x4, scoped, tag = 'scoped memory for tpu_custom_call.1']
    #allocation10 [shape = 'u8[65536]{0}', space=vmem, size = 0x10000, scoped, tag = 'input window, operand 2, single buffered']
    #allocation11 [shape = 'u8[65536]{0}', space=vmem, size = 0x10000, scoped, tag = 'output window, operand 0']
    %10 = vsyncpa [#allocation6], 0
    %s11 = scalar_lea.sflag [#allocation6], 1
    %12 = vsyncpa %s11, 0
    %13 = vsyncpa [#allocation9], 0
    %14 = vsyncpa [#allocation7], 0
    %s15 = scalar_lea.sflag [#allocation7], 1
    %16 = vsyncpa %s15, 0
    loop: start=0, step=1, limit=4
    $region2: #{tpu_custom_call.1} parent=1 // loop_pre_header
      _
    $region3: #{tpu_custom_call.1} parent=1 // loop_header
      %s18 = sphi 0, %s22
      %p19 = scmp.ge.s32.totalorder %s18, 4
      %s28 = sphi 0, %s30
      %s31 = sphi 0, %s28
      %s32 = sphi 0, %s31
      %s48 = sphi 0, %s32
      %s52 = sphi 0, %s52
      %s54 = sphi 0, %s52
      %s55 = sphi 0, %s54
      %s69 = sphi 0, %s55
      %s73 = sphi 0, %s73
      %s75 = sphi 0, %s73
      %s76 = sphi 0, %s75
      %s90 = sphi 0, %s76
      %s94 = sphi 0, %s94
      %s96 = sphi 0, %s94
      %s97 = sphi 0, %s96
      %s111 = sphi 0, %s97
      %s115 = sphi 0, %s115
      %s117 = sphi 0, %s115
      %s118 = sphi 0, %s117
      %s132 = sphi 0, %s118
      %s138 = sphi 0, %s140
      %s141 = sphi 0, %s138
      %s142 = sphi 0, %s141
      %s158 = sphi 0, %s142
    $region4: #{tpu_custom_call.1} parent=1 // loop_header_branch
      %21 = sbr.rel (%p19) target = $region8
    $region5: #{tpu_custom_call.1} parent=1 // loop_body
      %s23 = ssub.s32 %s18, 1
      %s24 = ssub.s32 %s18, 2
      %s25 = sadd.s32 %s18, 1
      %s26 = ssub.s32 %s18, %s25
      %p27 = scmp.eq.s32.totalorder %s26, 0
      %s29 = sadd.s32 %s28, 1
      %s30 = scalar_select %p27, %s28, %s29
      %p33 = pneg %p27
      %p34 = scmp.eq.s32.totalorder %s18, 1
      %p35 = por %p33, %p34
      %p36 = scmp.ne.s32.totalorder %s28, %s31
      %p37 = scmp.eq.s32.totalorder %s18, 0
      %p38 = por %p36, %p37
      %p39 = scmp.ne.s32.totalorder %s28, %s31
      %p40 = scmp.eq.s32.totalorder %s23, 1
      %p41 = por %p39, %p40
      %p42 = scmp.ne.s32.totalorder %s31, %s32
      %p43 = scmp.eq.s32.totalorder %s23, 0
      %p44 = por %p42, %p43
      %p45 = scmp.ne.s32.totalorder %s31, %s32
      %p46 = scmp.eq.s32.totalorder %s24, 1
      %p47 = por %p45, %p46
      %p49 = scmp.ne.s32.totalorder %s32, %s48
      %p50 = scmp.eq.s32.totalorder %s24, 0
      %p51 = por %p49, %p50
      %s53 = sadd.s32 %s52, 1
      %p56 = scmp.eq.s32.totalorder %s18, 1
      %p57 = scmp.ne.s32.totalorder %s52, %s54
      %p58 = scmp.eq.s32.totalorder %s18, 0
      %p59 = por %p57, %p58
      %p60 = scmp.ne.s32.totalorder %s52, %s54
      %p61 = scmp.eq.s32.totalorder %s23, 1
      %p62 = por %p60, %p61
      %p63 = scmp.ne.s32.totalorder %s54, %s55
      %p64 = scmp.eq.s32.totalorder %s23, 0
      %p65 = por %p63, %p64
      %p66 = scmp.ne.s32.totalorder %s54, %s55
      %p67 = scmp.eq.s32.totalorder %s24, 1
      %p68 = por %p66, %p67
      %p70 = scmp.ne.s32.totalorder %s55, %s69
      %p71 = scmp.eq.s32.totalorder %s24, 0
      %p72 = por %p70, %p71
      %s74 = sadd.s32 %s73, 1
      %p77 = scmp.eq.s32.totalorder %s18, 1
      %p78 = scmp.ne.s32.totalorder %s73, %s75
      %p79 = scmp.eq.s32.totalorder %s18, 0
      %p80 = por %p78, %p79
      %p81 = scmp.ne.s32.totalorder %s73, %s75
      %p82 = scmp.eq.s32.totalorder %s23, 1
      %p83 = por %p81, %p82
      %p84 = scmp.ne.s32.totalorder %s75, %s76
      %p85 = scmp.eq.s32.totalorder %s23, 0
      %p86 = por %p84, %p85
      %p87 = scmp.ne.s32.totalorder %s75, %s76
      %p88 = scmp.eq.s32.totalorder %s24, 1
      %p89 = por %p87, %p88
      %p91 = scmp.ne.s32.totalorder %s76, %s90
      %p92 = scmp.eq.s32.totalorder %s24, 0
      %p93 = por %p91, %p92
      %s95 = sadd.s32 %s94, 1
      %p98 = scmp.eq.s32.totalorder %s18, 1
      %p99 = scmp.ne.s32.totalorder %s94, %s96
      %p100 = scmp.eq.s32.totalorder %s18, 0
      %p101 = por %p99, %p100
      %p102 = scmp.ne.s32.totalorder %s94, %s96
      %p103 = scmp.eq.s32.totalorder %s23, 1
      %p104 = por %p102, %p103
      %p105 = scmp.ne.s32.totalorder %s96, %s97
      %p106 = scmp.eq.s32.totalorder %s23, 0
      %p107 = por %p105, %p106
      %p108 = scmp.ne.s32.totalorder %s96, %s97
      %p109 = scmp.eq.s32.totalorder %s24, 1
      %p110 = por %p108, %p109
      %p112 = scmp.ne.s32.totalorder %s97, %s111
      %p113 = scmp.eq.s32.totalorder %s24, 0
      %p114 = por %p112, %p113
      %s116 = sadd.s32 %s115, 1
      %p119 = scmp.eq.s32.totalorder %s18, 1
      %p120 = scmp.ne.s32.totalorder %s115, %s117
      %p121 = scmp.eq.s32.totalorder %s18, 0
      %p122 = por %p120, %p121
      %p123 = scmp.ne.s32.totalorder %s115, %s117
      %p124 = scmp.eq.s32.totalorder %s23, 1
      %p125 = por %p123, %p124
      %p126 = scmp.ne.s32.totalorder %s117, %s118
      %p127 = scmp.eq.s32.totalorder %s23, 0
      %p128 = por %p126, %p127
      %p129 = scmp.ne.s32.totalorder %s117, %s118
      %p130 = scmp.eq.s32.totalorder %s24, 1
      %p131 = por %p129, %p130
      %p133 = scmp.ne.s32.totalorder %s118, %s132
      %p134 = scmp.eq.s32.totalorder %s24, 0
      %p135 = por %p133, %p134
      %s136 = ssub.s32 %s18, %s25
      %p137 = scmp.eq.s32.totalorder %s136, 0
      %s139 = sadd.s32 %s138, 1
      %s140 = scalar_select %p137, %s138, %s139
      %p143 = pneg %p137
      %p144 = scmp.eq.s32.totalorder %s18, 1
      %p145 = por %p143, %p144
      %p146 = scmp.ne.s32.totalorder %s138, %s141
      %p147 = scmp.eq.s32.totalorder %s18, 0
      %p148 = por %p146, %p147
      %p149 = scmp.ne.s32.totalorder %s138, %s141
      %p150 = scmp.eq.s32.totalorder %s23, 1
      %p151 = por %p149, %p150
      %p152 = scmp.ne.s32.totalorder %s141, %s142
      %p153 = scmp.eq.s32.totalorder %s23, 0
      %p154 = por %p152, %p153
      %p155 = scmp.ne.s32.totalorder %s141, %s142
      %p156 = scmp.eq.s32.totalorder %s24, 1
      %p157 = por %p155, %p156
      %p159 = scmp.ne.s32.totalorder %s142, %s158
      %p160 = scmp.eq.s32.totalorder %s24, 0
      %p161 = por %p159, %p160
      %p162 = scmp.le.s32.totalorder 1, %s18
      %p163 = scmp.lt.s32.totalorder %s18, 3
      %p164 = pnand %p162, %p163
      %p165 = pneg %p164
      // Predicated region
      $region9: #{tpu_custom_call.1} parent=5 // pred_check
        _
      $region10: #{tpu_custom_call.1} parent=5 // pred_check_branch
        %167 = sbr.rel (%p164) target = $region12
      $region11: #{tpu_custom_call.1} parent=5 // pred_region
        %s168 = ssub.s32 %s18, 1
        // Predicated region
        $region13: #{tpu_custom_call.1} parent=11 // pred_check
          %p169 = pneg %p65
        $region14: #{tpu_custom_call.1} parent=11 // pred_check_branch
          %171 = sbr.rel (%p169) target = $region16
        $region15: #{tpu_custom_call.1} parent=11 // pred_region
          %s173 = ssub.s32 1024, 1024
          %174 = vsyncadd [#allocation9], %s173
          %s175 = sshll.u32 [#allocation8], 4
          %s176 = int_to_ptr.vmem [resolvable:$true] %s175
          %181 = dma.hbm_to_vmem [thread:$0]  %s1, 1024, %s176, [#allocation9], 128, 128, 8
        $region16: #{tpu_custom_call.1} parent=11 // pred_fallthru
          _
        // Predicated region
        $region17: #{tpu_custom_call.1} parent=11 // pred_check
          %p182 = pneg %p86
        $region18: #{tpu_custom_call.1} parent=11 // pred_check_branch
          %184 = sbr.rel (%p182) target = $region20
        $region19: #{tpu_custom_call.1} parent=11 // pred_region
          %s186 = ssub.s32 2048, 2048
          %187 = vsyncadd [#allocation9], %s186
          %s188 = sshll.u32 [#allocation10], 4
          %s189 = int_to_ptr.vmem [resolvable:$true] %s188
          %194 = dma.hbm_to_vmem [thread:$0]  %s2, 2048, %s189, [#allocation9], 256, 256, 16
        $region20: #{tpu_custom_call.1} parent=11 // pred_fallthru
          _
        // Predicated region
        $region21: #{tpu_custom_call.1} parent=11 // pred_check
          %p195 = pneg %p107
        $region22: #{tpu_custom_call.1} parent=11 // pred_check_branch
          %197 = sbr.rel (%p195) target = $region24
        $region23: #{tpu_custom_call.1} parent=11 // pred_region
          _
        $region24: #{tpu_custom_call.1} parent=11 // pred_fallthru
          _
        // Predicated region
        $region25: #{tpu_custom_call.1} parent=11 // pred_check
          %p198 = pneg %p128
        $region26: #{tpu_custom_call.1} parent=11 // pred_check_branch
          %200 = sbr.rel (%p198) target = $region28
        $region27: #{tpu_custom_call.1} parent=11 // pred_region
          _
        $region28: #{tpu_custom_call.1} parent=11 // pred_fallthru
          _
      $region12: #{tpu_custom_call.1} parent=5 // pred_fallthru
        _
      %p201 = scmp.lt.s32.totalorder %s18, 2
      // Predicated region
      $region29: #{tpu_custom_call.1} parent=5 // pred_check
        %p202 = pneg %p201
      $region30: #{tpu_custom_call.1} parent=5 // pred_check_branch
        %204 = sbr.rel (%p202) target = $region32
      $region31: #{tpu_custom_call.1} parent=5 // pred_region
        // Predicated region
        $region33: #{tpu_custom_call.1} parent=31 // pred_check
          %p205 = pneg %p38
        $region34: #{tpu_custom_call.1} parent=31 // pred_check_branch
          %207 = sbr.rel (%p205) target = $region36
        $region35: #{tpu_custom_call.1} parent=31 // pred_region
          %s208 = sand.u32 %s28, 1
          %s209 = scalar_lea.sflag [#allocation6], %s208
          %s210 = sand.u32 %s28, 1
          %s211 = smul.addr %s210, 64
          %s212 = scalar_lea.vmem [#allocation5], %s211
          %s214 = ssub.s32 1024, 1024
          %215 = vsyncadd %s209, %s214
          %s216 = smul.addr %s18, 8
          %s217 = smul.addr %s216, 128
          %s218 = scalar_lea.hbm %s0, %s217
          %s219 = sshll.u32 %s212, 4
          %s220 = int_to_ptr.vmem [resolvable:$true] %s219
          %225 = dma.hbm_to_vmem [thread:$0]  %s218, 1024, %s220, %s209, 128, 128, 8
        $region36: #{tpu_custom_call.1} parent=31 // pred_fallthru
          _
      $region32: #{tpu_custom_call.1} parent=5 // pred_fallthru
        _
      %p226 = scmp.le.s32.totalorder 1, %s18
      %p227 = scmp.lt.s32.totalorder %s18, 3
      %p228 = pnand %p226, %p227
      %p229 = pneg %p228
      // Predicated region
      $region37: #{tpu_custom_call.1} parent=5 // pred_check
        _
      $region38: #{tpu_custom_call.1} parent=5 // pred_check_branch
        %231 = sbr.rel (%p228) target = $region40
      $region39: #{tpu_custom_call.1} parent=5 // pred_region
        %s232 = ssub.s32 %s18, 1
        %s233 = sand.u32 %s31, 1
        %s234 = scalar_lea.sflag [#allocation6], %s233
        %s235 = sand.u32 %s31, 1
        %s236 = smul.addr %s235, 64
        %s237 = scalar_lea.vmem [#allocation5], %s236
        // Predicated region
        $region41: #{tpu_custom_call.1} parent=39 // pred_check
          %p238 = pneg %p44
        $region42: #{tpu_custom_call.1} parent=39 // pred_check_branch
          %240 = sbr.rel (%p238) target = $region44
        $region43: #{tpu_custom_call.1} parent=39 // pred_region
          %241 = dma.done %s234, 1024
        $region44: #{tpu_custom_call.1} parent=39 // pred_fallthru
          _
        // Predicated region
        $region45: #{tpu_custom_call.1} parent=39 // pred_check
          %p242 = pneg %p65
        $region46: #{tpu_custom_call.1} parent=39 // pred_check_branch
          %244 = sbr.rel (%p242) target = $region48
        $region47: #{tpu_custom_call.1} parent=39 // pred_region
          %245 = dma.done [#allocation9], 1024
        $region48: #{tpu_custom_call.1} parent=39 // pred_fallthru
          _
        // Predicated region
        $region49: #{tpu_custom_call.1} parent=39 // pred_check
          %p246 = pneg %p86
        $region50: #{tpu_custom_call.1} parent=39 // pred_check_branch
          %248 = sbr.rel (%p246) target = $region52
        $region51: #{tpu_custom_call.1} parent=39 // pred_region
          %249 = dma.done [#allocation9], 2048
        $region52: #{tpu_custom_call.1} parent=39 // pred_fallthru
          _
        %s250 = sand.u32 %s31, 1
        %s251 = scalar_lea.sflag [#allocation6], %s250
        %s252 = sand.u32 %s31, 1
        %s253 = smul.addr %s252, 64
        %s254 = scalar_lea.vmem [#allocation5], %s253
        %p255 = pneg %p44
        %p256 = pneg %p41
        %p257 = pneg %p65
        %p258 = pneg %p62
        %p259 = pneg %p86
        %p260 = pneg %p83
        %p261 = pneg %p107
        %p262 = pneg %p104
        %p263 = pneg %p128
        %p264 = pneg %p125
        %p265 = pneg %p154
        %p266 = pneg %p151
        %s267 = sand.u32 %s141, 1
        %s268 = scalar_lea.sflag [#allocation7], %s267
        %s269 = sand.u32 %s141, 1
        %s270 = smul.addr %s269, 64
        %s271 = scalar_lea.vmem [#allocation11], %s270
        %v272 = vld [vmem:[%s237] sm:$0xff]
        %v273 = vld [vmem:[%s237 + $0x8] sm:$0xff]
        %v274 = vld [vmem:[%s237 + $0x10] sm:$0xff]
        %v275 = vld [vmem:[%s237 + $0x18] sm:$0xff]
        %v276 = vld [vmem:[%s237 + $0x20] sm:$0xff]
        %v277 = vld [vmem:[%s237 + $0x28] sm:$0xff]
        %v278 = vld [vmem:[%s237 + $0x30] sm:$0xff]
        %v279 = vld [vmem:[%s237 + $0x38] sm:$0xff]
        %280 = vxpose.xlu0.b32.start [1/16] %v272, 128
        %281 = vxpose.xlu0.b32.cont [2/16] %v273, 128
        %282 = vxpose.xlu0.b32.cont [3/16] %v274, 128
        %283 = vxpose.xlu0.b32.cont [4/16] %v275, 128
        %284 = vxpose.xlu0.b32.cont [5/16] %v276, 128
        %285 = vxpose.xlu0.b32.cont [6/16] %v277, 128
        %286 = vxpose.xlu0.b32.cont [7/16] %v278, 128
        %287 = vxpose.xlu0.b32.cont [8/16] %v279, 128
        %288 = vxpose.xlu0.b32.cont [9/16] 0.0, 128
        %289 = vxpose.xlu0.b32.cont [10/16] 0.0, 128
        %290 = vxpose.xlu0.b32.cont [11/16] 0.0, 128
        %291 = vxpose.xlu0.b32.cont [12/16] 0.0, 128
        %292 = vxpose.xlu0.b32.cont [13/16] 0.0, 128
        %293 = vxpose.xlu0.b32.cont [14/16] 0.0, 128
        %294 = vxpose.xlu0.b32.cont [15/16] 0.0, 128
        %295 = vxpose.xlu0.b32.end [16/16] 0.0, 128
        %v296 = vpop.trf.xlu0
        %v297 = vpop.trf.xlu0
        %v298 = vpop.trf.xlu0
        %v299 = vpop.trf.xlu0
        %v300 = vpop.trf.xlu0
        %v301 = vpop.trf.xlu0
        %v302 = vpop.trf.xlu0
        %v303 = vpop.trf.xlu0
        %v304 = vpop.trf.xlu0
        %v305 = vpop.trf.xlu0
        %v306 = vpop.trf.xlu0
        %v307 = vpop.trf.xlu0
        %v308 = vpop.trf.xlu0
        %v309 = vpop.trf.xlu0
        %v310 = vpop.trf.xlu0
        %v311 = vpop.trf.xlu0
        %v312 = vld [vmem:[#allocation8] sm:$0xff]
        %v313 = vld [vmem:[#allocation8 + $0x8] sm:$0xff]
        %v314 = vld [vmem:[#allocation8 + $0x10] sm:$0xff]
        %v315 = vld [vmem:[#allocation8 + $0x18] sm:$0xff]
        %v316 = vld [vmem:[#allocation8 + $0x20] sm:$0xff]
        %v317 = vld [vmem:[#allocation8 + $0x28] sm:$0xff]
        %v318 = vld [vmem:[#allocation8 + $0x30] sm:$0xff]
        %v319 = vld [vmem:[#allocation8 + $0x38] sm:$0xff]
        %v320 = vadd.f32 %v296, %v312
        %v321 = vadd.f32 %v297, %v313
        %v322 = vadd.f32 %v298, %v314
        %v323 = vadd.f32 %v299, %v315
        %v324 = vadd.f32 %v300, %v316
        %v325 = vadd.f32 %v301, %v317
        %v326 = vadd.f32 %v302, %v318
        %v327 = vadd.f32 %v303, %v319
        %v328 = vld [vmem:[#allocation10] sm:$0xff]
        %v329 = vld [vmem:[#allocation10 + $0x8] sm:$0xff]
        %v330 = vld [vmem:[#allocation10 + $0x10] sm:$0xff]
        %v331 = vld [vmem:[#allocation10 + $0x18] sm:$0xff]
        %v332 = vld [vmem:[#allocation10 + $0x20] sm:$0xff]
        %v333 = vld [vmem:[#allocation10 + $0x28] sm:$0xff]
        %v334 = vld [vmem:[#allocation10 + $0x30] sm:$0xff]
        %v335 = vld [vmem:[#allocation10 + $0x38] sm:$0xff]
        %v336 = vld [vmem:[#allocation10 + $0x40] sm:$0xff]
        %v337 = vld [vmem:[#allocation10 + $0x48] sm:$0xff]
        %v338 = vld [vmem:[#allocation10 + $0x50] sm:$0xff]
        %v339 = vld [vmem:[#allocation10 + $0x58] sm:$0xff]
        %v340 = vld [vmem:[#allocation10 + $0x60] sm:$0xff]
        %v341 = vld [vmem:[#allocation10 + $0x68] sm:$0xff]
        %v342 = vld [vmem:[#allocation10 + $0x70] sm:$0xff]
        %v343 = vld [vmem:[#allocation10 + $0x78] sm:$0xff]
        %vm344 = vcmask 523264
        %v346 = vsel %vm344, %v320, 0
        %v349 = vsel %vm344, %v321, 0
        %v352 = vsel %vm344, %v322, 0
        %v355 = vsel %vm344, %v323, 0
        %v358 = vsel %vm344, %v324, 0
        %v361 = vsel %vm344, %v325, 0
        %v364 = vsel %vm344, %v326, 0
        %v367 = vsel %vm344, %v327, 0
        %369 = vmatprep.subr.mxu0 %v329
        %370 = vmatpush1.msra.mxu0 %v328
        %371 = vmatprep.subr.mxu0 %v331
        %372 = vmatpush1.msra.mxu0 %v330
        %373 = vmatprep.subr.mxu0 %v333
        %374 = vmatpush1.msra.mxu0 %v332
        %375 = vmatprep.subr.mxu0 %v335
        %376 = vmatpush1.msra.mxu0 %v334
        %377 = vmatprep.subr.mxu0 %v337
        %378 = vmatpush1.msra.mxu0 %v336
        %379 = vmatprep.subr.mxu0 %v339
        %380 = vmatpush1.msra.mxu0 %v338
        %381 = vmatprep.subr.mxu0 %v341
        %382 = vmatpush1.msra.mxu0 %v340
        %383 = vmatprep.subr.mxu0 %v343
        %384 = vmatpush1.msra.mxu0 %v342
        %385 = vmatprep.subr.mxu0 0.0
        %386 = vmatpush1.msra.mxu0 0.0
        %387 = vmatprep.subr.mxu0 0.0
        %388 = vmatpush1.msra.mxu0 0.0
        %389 = vmatprep.subr.mxu0 0.0
        %390 = vmatpush1.msra.mxu0 0.0
        %391 = vmatprep.subr.mxu0 0.0
        %392 = vmatpush1.msra.mxu0 0.0
        %393 = vmatprep.subr.mxu0 0.0
        %394 = vmatpush1.msra.mxu0 0.0
        %395 = vmatprep.subr.mxu0 0.0
        %396 = vmatpush1.msra.mxu0 0.0
        %397 = vmatprep.subr.mxu0 0.0
        %398 = vmatpush1.msra.mxu0 0.0
        %399 = vmatprep.subr.mxu0 0.0
        %400 = vmatpush1.msra.mxu0 0.0
        %401 = vmatprep.subr.mxu0 0.0
        %402 = vmatpush1.msra.mxu0 0.0
        %403 = vmatprep.subr.mxu0 0.0
        %404 = vmatpush1.msra.mxu0 0.0
        %405 = vmatprep.subr.mxu0 0.0
        %406 = vmatpush1.msra.mxu0 0.0
        %407 = vmatprep.subr.mxu0 0.0
        %408 = vmatpush1.msra.mxu0 0.0
        %409 = vmatprep.subr.mxu0 0.0
        %410 = vmatpush1.msra.mxu0 0.0
        %411 = vmatprep.subr.mxu0 0.0
        %412 = vmatpush1.msra.mxu0 0.0
        %413 = vmatprep.subr.mxu0 0.0
        %414 = vmatpush1.msra.mxu0 0.0
        %415 = vmatprep.subr.mxu0 0.0
        %416 = vmatpush1.msra.mxu0 0.0
        %417 = vmatprep.subr.mxu0 0.0
        %418 = vmatpush1.msra.mxu0 0.0
        %419 = vmatprep.subr.mxu0 0.0
        %420 = vmatpush1.msra.mxu0 0.0
        %421 = vmatprep.subr.mxu0 0.0
        %422 = vmatpush1.msra.mxu0 0.0
        %423 = vmatprep.subr.mxu0 0.0
        %424 = vmatpush1.msra.mxu0 0.0
        %425 = vmatprep.subr.mxu0 0.0
        %426 = vmatpush1.msra.mxu0 0.0
        %427 = vmatprep.subr.mxu0 0.0
        %428 = vmatpush1.msra.mxu0 0.0
        %429 = vmatprep.subr.mxu0 0.0
        %430 = vmatpush1.msra.mxu0 0.0
        %431 = vmatprep.subr.mxu0 0.0
        %432 = vmatpush1.msra.mxu0 0.0
        %433 = vmatprep.mubr.f32.mxu0 0.0
        %434 = vmatmul.mubr.f32.gmra.mrb[0].mxu0 %v346
        %v435 = vpop.f32.mrb[0].mxu0
        %v436 = vadd.f32 0.0, %v435
        %v437 = vpop.f32.mrb[0].mxu0
        %v438 = vadd.f32 0.0, %v437
        %439 = vmatprep.mubr.f32.mxu0 0.0
        %440 = vmatmul.mubr.f32.gmra.mrb[0].mxu0 %v349
        %v441 = vpop.f32.mrb[0].mxu0
        %v442 = vadd.f32 0.0, %v441
        %v443 = vpop.f32.mrb[0].mxu0
        %v444 = vadd.f32 0.0, %v443
        %445 = vmatprep.mubr.f32.mxu0 0.0
        %446 = vmatmul.mubr.f32.gmra.mrb[0].mxu0 %v352
        %v447 = vpop.f32.mrb[0].mxu0
        %v448 = vadd.f32 0.0, %v447
        %v449 = vpop.f32.mrb[0].mxu0
        %v450 = vadd.f32 0.0, %v449
        %451 = vmatprep.mubr.f32.mxu0 0.0
        %452 = vmatmul.mubr.f32.gmra.mrb[0].mxu0 %v355
        %v453 = vpop.f32.mrb[0].mxu0
        %v454 = vadd.f32 0.0, %v453
        %v455 = vpop.f32.mrb[0].mxu0
        %v456 = vadd.f32 0.0, %v455
        %457 = vmatprep.mubr.f32.mxu0 0.0
        %458 = vmatmul.mubr.f32.gmra.mrb[0].mxu0 %v358
        %v459 = vpop.f32.mrb[0].mxu0
        %v460 = vadd.f32 0.0, %v459
        %v461 = vpop.f32.mrb[0].mxu0
        %v462 = vadd.f32 0.0, %v461
        %463 = vmatprep.mubr.f32.mxu0 0.0
        %464 = vmatmul.mubr.f32.gmra.mrb[0].mxu0 %v361
        %v465 = vpop.f32.mrb[0].mxu0
        %v466 = vadd.f32 0.0, %v465
        %v467 = vpop.f32.mrb[0].mxu0
        %v468 = vadd.f32 0.0, %v467
        %469 = vmatprep.mubr.f32.mxu0 0.0
        %470 = vmatmul.mubr.f32.gmra.mrb[0].mxu0 %v364
        %v471 = vpop.f32.mrb[0].mxu0
        %v472 = vadd.f32 0.0, %v471
        %v473 = vpop.f32.mrb[0].mxu0
        %v474 = vadd.f32 0.0, %v473
        %475 = vmatprep.mubr.f32.mxu0 0.0
        %476 = vmatmul.mubr.f32.gmra.mrb[0].mxu0 %v367
        %v477 = vpop.f32.mrb[0].mxu0
        %v478 = vadd.f32 0.0, %v477
        %v479 = vpop.f32.mrb[0].mxu0
        %v480 = vadd.f32 0.0, %v479
        %481 = vdwg.mxu0
        %482 = vst [vmem:[#allocation2] sm:$0xff] %v436
        %483 = vst.msk [vmem:[#allocation2 + $0x8] sm:$0xff] %vm344, %v438
        %484 = vst [vmem:[#allocation2 + $0x10] sm:$0xff] %v442
        %485 = vst.msk [vmem:[#allocation2 + $0x18] sm:$0xff] %vm344, %v444
        %486 = vst [vmem:[#allocation2 + $0x20] sm:$0xff] %v448
        %487 = vst.msk [vmem:[#allocation2 + $0x28] sm:$0xff] %vm344, %v450
        %488 = vst [vmem:[#allocation2 + $0x30] sm:$0xff] %v454
        %489 = vst.msk [vmem:[#allocation2 + $0x38] sm:$0xff] %vm344, %v456
        %490 = vst [vmem:[#allocation2 + $0x40] sm:$0xff] %v460
        %491 = vst.msk [vmem:[#allocation2 + $0x48] sm:$0xff] %vm344, %v462
        %492 = vst [vmem:[#allocation2 + $0x50] sm:$0xff] %v466
        %493 = vst.msk [vmem:[#allocation2 + $0x58] sm:$0xff] %vm344, %v468
        %494 = vst [vmem:[#allocation2 + $0x60] sm:$0xff] %v472
        %495 = vst.msk [vmem:[#allocation2 + $0x68] sm:$0xff] %vm344, %v474
        %496 = vst [vmem:[#allocation2 + $0x70] sm:$0xff] %v478
        %497 = vst.msk [vmem:[#allocation2 + $0x78] sm:$0xff] %vm344, %v480
        %506 = vrot.lane.b32.xlu0 %v436, 64
        %v507 = vpop.permute.xlu0 %506
        %508 = vrot.lane.b32.xlu0 %v442, 64
        %v509 = vpop.permute.xlu0 %508
        %510 = vrot.lane.b32.xlu0 %v448, 64
        %v511 = vpop.permute.xlu0 %510
        %512 = vrot.lane.b32.xlu0 %v454, 64
        %v513 = vpop.permute.xlu0 %512
        %514 = vrot.lane.b32.xlu0 %v460, 64
        %v515 = vpop.permute.xlu0 %514
        %516 = vrot.lane.b32.xlu0 %v466, 64
        %v517 = vpop.permute.xlu0 %516
        %518 = vrot.lane.b32.xlu0 %v472, 64
        %v519 = vpop.permute.xlu0 %518
        %520 = vrot.lane.b32.xlu0 %v478, 64
        %v521 = vpop.permute.xlu0 %520
        %530 = vxpose.xlu0.b32.start [1/16] %v507, 128
        %531 = vxpose.xlu0.b32.cont [2/16] %v509, 128
        %532 = vxpose.xlu0.b32.cont [3/16] %v511, 128
        %533 = vxpose.xlu0.b32.cont [4/16] %v513, 128
        %534 = vxpose.xlu0.b32.cont [5/16] %v515, 128
        %535 = vxpose.xlu0.b32.cont [6/16] %v517, 128
        %536 = vxpose.xlu0.b32.cont [7/16] %v519, 128
        %537 = vxpose.xlu0.b32.cont [8/16] %v521, 128
        %538 = vxpose.xlu0.b32.cont [9/16] 0.0, 128
        %539 = vxpose.xlu0.b32.cont [10/16] 0.0, 128
        %540 = vxpose.xlu0.b32.cont [11/16] 0.0, 128
        %541 = vxpose.xlu0.b32.cont [12/16] 0.0, 128
        %542 = vxpose.xlu0.b32.cont [13/16] 0.0, 128
        %543 = vxpose.xlu0.b32.cont [14/16] 0.0, 128
        %544 = vxpose.xlu0.b32.cont [15/16] 0.0, 128
        %545 = vxpose.xlu0.b32.end [16/16] 0.0, 128
        %v546 = vpop.trf.xlu0
        %v547 = vpop.trf.xlu0
        %v548 = vpop.trf.xlu0
        %v549 = vpop.trf.xlu0
        %v550 = vpop.trf.xlu0
        %v551 = vpop.trf.xlu0
        %v552 = vpop.trf.xlu0
        %v553 = vpop.trf.xlu0
        %v554 = vpop.trf.xlu0
        %v555 = vpop.trf.xlu0
        %v556 = vpop.trf.xlu0
        %v557 = vpop.trf.xlu0
        %v558 = vpop.trf.xlu0
        %v559 = vpop.trf.xlu0
        %v560 = vpop.trf.xlu0
        %v561 = vpop.trf.xlu0
        %562 = vst.msk [vmem:[#allocation3] sm:$0xff] %vm344, %v546
        %563 = vst.msk [vmem:[#allocation3 + $0x8] sm:$0xff] %vm344, %v547
        %564 = vst.msk [vmem:[#allocation3 + $0x10] sm:$0xff] %vm344, %v548
        %565 = vst.msk [vmem:[#allocation3 + $0x18] sm:$0xff] %vm344, %v549
        %566 = vst.msk [vmem:[#allocation3 + $0x20] sm:$0xff] %vm344, %v550
        %567 = vst.msk [vmem:[#allocation3 + $0x28] sm:$0xff] %vm344, %v551
        %568 = vst.msk [vmem:[#allocation3 + $0x30] sm:$0xff] %vm344, %v552
        %569 = vst.msk [vmem:[#allocation3 + $0x38] sm:$0xff] %vm344, %v553
        %v570 = vld [vmem:[#allocation2] sm:$0xff]
        %v571 = vld [vmem:[#allocation2 + $0x10] sm:$0xff]
        %v572 = vld [vmem:[#allocation2 + $0x20] sm:$0xff]
        %v573 = vld [vmem:[#allocation2 + $0x30] sm:$0xff]
        %v574 = vld [vmem:[#allocation2 + $0x40] sm:$0xff]
        %v575 = vld [vmem:[#allocation2 + $0x50] sm:$0xff]
        %v576 = vld [vmem:[#allocation2 + $0x60] sm:$0xff]
        %v577 = vld [vmem:[#allocation2 + $0x70] sm:$0xff]
        %v578 = vld [vmem:[#allocation3] sm:$0xff]
        %v579 = vld [vmem:[#allocation2 + $0x8] sm:$0xff]
        %v580 = vld [vmem:[#allocation2 + $0x18] sm:$0xff]
        %v581 = vld [vmem:[#allocation2 + $0x28] sm:$0xff]
        %v582 = vld [vmem:[#allocation2 + $0x38] sm:$0xff]
        %v583 = vld [vmem:[#allocation2 + $0x48] sm:$0xff]
        %v584 = vld [vmem:[#allocation2 + $0x58] sm:$0xff]
        %v585 = vld [vmem:[#allocation2 + $0x68] sm:$0xff]
        %v586 = vld [vmem:[#allocation2 + $0x78] sm:$0xff]
        %vm587 = vcmask 64512
        %v589 = vsel %vm587, %v570, 0
        %v592 = vsel %vm587, %v571, 0
        %v595 = vsel %vm587, %v572, 0
        %v598 = vsel %vm587, %v573, 0
        %v601 = vsel %vm587, %v574, 0
        %v604 = vsel %vm587, %v575, 0
        %v607 = vsel %vm587, %v576, 0
        %v610 = vsel %vm587, %v577, 0
        %612 = vmatprep.subr.mxu0 0.0
        %613 = vmatpush1.msra.mxu0 %v578
        %614 = vmatprep.subr.mxu0 0.0
        %615 = vmatpush1.msra.mxu0 0.0
        %616 = vmatprep.subr.mxu0 0.0
        %617 = vmatpush1.msra.mxu0 0.0
        %618 = vmatprep.subr.mxu0 0.0
        %619 = vmatpush1.msra.mxu0 0.0
        %620 = vmatprep.subr.mxu0 0.0
        %621 = vmatpush1.msra.mxu0 0.0
        %622 = vmatprep.subr.mxu0 0.0
        %623 = vmatpush1.msra.mxu0 0.0
        %624 = vmatprep.subr.mxu0 0.0
        %625 = vmatpush1.msra.mxu0 0.0
        %626 = vmatprep.subr.mxu0 0.0
        %627 = vmatpush1.msra.mxu0 0.0
        %628 = vmatprep.subr.mxu0 0.0
        %629 = vmatpush1.msra.mxu0 0.0
        %630 = vmatprep.subr.mxu0 0.0
        %631 = vmatpush1.msra.mxu0 0.0
        %632 = vmatprep.subr.mxu0 0.0
        %633 = vmatpush1.msra.mxu0 0.0
        %634 = vmatprep.subr.mxu0 0.0
        %635 = vmatpush1.msra.mxu0 0.0
        %636 = vmatprep.subr.mxu0 0.0
        %637 = vmatpush1.msra.mxu0 0.0
        %638 = vmatprep.subr.mxu0 0.0
        %639 = vmatpush1.msra.mxu0 0.0
        %640 = vmatprep.subr.mxu0 0.0
        %641 = vmatpush1.msra.mxu0 0.0
        %642 = vmatprep.subr.mxu0 0.0
        %643 = vmatpush1.msra.mxu0 0.0
        %644 = vmatprep.subr.mxu0 0.0
        %645 = vmatpush1.msra.mxu0 0.0
        %646 = vmatprep.subr.mxu0 0.0
        %647 = vmatpush1.msra.mxu0 0.0
        %648 = vmatprep.subr.mxu0 0.0
        %649 = vmatpush1.msra.mxu0 0.0
        %650 = vmatprep.subr.mxu0 0.0
        %651 = vmatpush1.msra.mxu0 0.0
        %652 = vmatprep.subr.mxu0 0.0
        %653 = vmatpush1.msra.mxu0 0.0
        %654 = vmatprep.subr.mxu0 0.0
        %655 = vmatpush1.msra.mxu0 0.0
        %656 = vmatprep.subr.mxu0 0.0
        %657 = vmatpush1.msra.mxu0 0.0
        %658 = vmatprep.subr.mxu0 0.0
        %659 = vmatpush1.msra.mxu0 0.0
        %660 = vmatprep.subr.mxu0 0.0
        %661 = vmatpush1.msra.mxu0 0.0
        %662 = vmatprep.subr.mxu0 0.0
        %663 = vmatpush1.msra.mxu0 0.0
        %664 = vmatprep.subr.mxu0 0.0
        %665 = vmatpush1.msra.mxu0 0.0
        %666 = vmatprep.subr.mxu0 0.0
        %667 = vmatpush1.msra.mxu0 0.0
        %668 = vmatprep.subr.mxu0 0.0
        %669 = vmatpush1.msra.mxu0 0.0
        %670 = vmatprep.subr.mxu0 0.0
        %671 = vmatpush1.msra.mxu0 0.0
        %672 = vmatprep.subr.mxu0 0.0
        %673 = vmatpush1.msra.mxu0 0.0
        %674 = vmatprep.subr.mxu0 0.0
        %675 = vmatpush1.msra.mxu0 0.0
        %676 = vmatprep.mubr.f32.mxu0 0.0
        %677 = vmatmul.mubr.f32.gmra.mrb[0].mxu0 %v589
        %v678 = vpop.f32.mrb[0].mxu0
        %v679 = vadd.f32 0.0, %v678
        %v680 = vpop.f32.mrb[0].mxu0
        %681 = vmatprep.mubr.f32.mxu0 0.0
        %682 = vmatmul.mubr.f32.gmra.mrb[0].mxu0 %v592
        %v683 = vpop.f32.mrb[0].mxu0
        %v684 = vadd.f32 0.0, %v683
        %v685 = vpop.f32.mrb[0].mxu0
        %686 = vmatprep.mubr.f32.mxu0 0.0
        %687 = vmatmul.mubr.f32.gmra.mrb[0].mxu0 %v595
        %v688 = vpop.f32.mrb[0].mxu0
        %v689 = vadd.f32 0.0, %v688
        %v690 = vpop.f32.mrb[0].mxu0
        %691 = vmatprep.mubr.f32.mxu0 0.0
        %692 = vmatmul.mubr.f32.gmra.mrb[0].mxu0 %v598
        %v693 = vpop.f32.mrb[0].mxu0
        %v694 = vadd.f32 0.0, %v693
        %v695 = vpop.f32.mrb[0].mxu0
        %696 = vmatprep.mubr.f32.mxu0 0.0
        %697 = vmatmul.mubr.f32.gmra.mrb[0].mxu0 %v601
        %v698 = vpop.f32.mrb[0].mxu0
        %v699 = vadd.f32 0.0, %v698
        %v700 = vpop.f32.mrb[0].mxu0
        %701 = vmatprep.mubr.f32.mxu0 0.0
        %702 = vmatmul.mubr.f32.gmra.mrb[0].mxu0 %v604
        %v703 = vpop.f32.mrb[0].mxu0
        %v704 = vadd.f32 0.0, %v703
        %v705 = vpop.f32.mrb[0].mxu0
        %706 = vmatprep.mubr.f32.mxu0 0.0
        %707 = vmatmul.mubr.f32.gmra.mrb[0].mxu0 %v607
        %v708 = vpop.f32.mrb[0].mxu0
        %v709 = vadd.f32 0.0, %v708
        %v710 = vpop.f32.mrb[0].mxu0
        %711 = vmatprep.mubr.f32.mxu0 0.0
        %712 = vmatmul.mubr.f32.gmra.mrb[0].mxu0 %v610
        %v713 = vpop.f32.mrb[0].mxu0
        %v714 = vadd.f32 0.0, %v713
        %v715 = vpop.f32.mrb[0].mxu0
        %716 = vdwg.mxu0
        %v717 = vsel %vm344, %v679, -inf
        %718 = vmax.xlane.f32.xlu0 %v717
        %v719 = vpop.xlane.xlu0 %718
        %v720 = vsel %vm344, %v684, -inf
        %721 = vmax.xlane.f32.xlu0 %v720
        %v722 = vpop.xlane.xlu0 %721
        %v723 = vsel %vm344, %v689, -inf
        %724 = vmax.xlane.f32.xlu0 %v723
        %v725 = vpop.xlane.xlu0 %724
        %v726 = vsel %vm344, %v694, -inf
        %727 = vmax.xlane.f32.xlu0 %v726
        %v728 = vpop.xlane.xlu0 %727
        %v729 = vsel %vm344, %v699, -inf
        %730 = vmax.xlane.f32.xlu0 %v729
        %v731 = vpop.xlane.xlu0 %730
        %v732 = vsel %vm344, %v704, -inf
        %733 = vmax.xlane.f32.xlu0 %v732
        %v734 = vpop.xlane.xlu0 %733
        %v735 = vsel %vm344, %v709, -inf
        %736 = vmax.xlane.f32.xlu0 %v735
        %v737 = vpop.xlane.xlu0 %736
        %v738 = vsel %vm344, %v714, -inf
        %739 = vmax.xlane.f32.xlu0 %v738
        %v740 = vpop.xlane.xlu0 %739
        %v741 = vsub.f32 %v679, %v719
        %v742 = vsub.f32 %v684, %v722
        %v743 = vsub.f32 %v689, %v725
        %v744 = vsub.f32 %v694, %v728
        %v745 = vsub.f32 %v699, %v731
        %v746 = vsub.f32 %v704, %v734
        %v747 = vsub.f32 %v709, %v737
        %v748 = vsub.f32 %v714, %v740
        %v749 = vmul.f32 %v741, 1.442695
        %v750 = vpow.pop %v749
        %v751 = vmul.f32 %v742, 1.442695
        %v752 = vpow.pop %v751
        %v753 = vmul.f32 %v743, 1.442695
        %v754 = vpow.pop %v753
        %v755 = vmul.f32 %v744, 1.442695
        %v756 = vpow.pop %v755
        %v757 = vmul.f32 %v745, 1.442695
        %v758 = vpow.pop %v757
        %v759 = vmul.f32 %v746, 1.442695
        %v760 = vpow.pop %v759
        %v761 = vmul.f32 %v747, 1.442695
        %v762 = vpow.pop %v761
        %v763 = vmul.f32 %v748, 1.442695
        %v764 = vpow.pop %v763
        %v765 = vsel %vm344, %v750, 0.0
        %766 = vadd.xlane.f32.xlu0 %v765
        %v767 = vpop.xlane.xlu0 %766
        %v768 = vsel %vm344, %v752, 0.0
        %769 = vadd.xlane.f32.xlu0 %v768
        %v770 = vpop.xlane.xlu0 %769
        %v771 = vsel %vm344, %v754, 0.0
        %772 = vadd.xlane.f32.xlu0 %v771
        %v773 = vpop.xlane.xlu0 %772
        %v774 = vsel %vm344, %v756, 0.0
        %775 = vadd.xlane.f32.xlu0 %v774
        %v776 = vpop.xlane.xlu0 %775
        %v777 = vsel %vm344, %v758, 0.0
        %778 = vadd.xlane.f32.xlu0 %v777
        %v779 = vpop.xlane.xlu0 %778
        %v780 = vsel %vm344, %v760, 0.0
        %781 = vadd.xlane.f32.xlu0 %v780
        %v782 = vpop.xlane.xlu0 %781
        %v783 = vsel %vm344, %v762, 0.0
        %784 = vadd.xlane.f32.xlu0 %v783
        %v785 = vpop.xlane.xlu0 %784
        %v786 = vsel %vm344, %v764, 0.0
        %787 = vadd.xlane.f32.xlu0 %v786
        %v788 = vpop.xlane.xlu0 %787
        %v790 = vsel %vm344, %v750, 0
        %v793 = vsel %vm344, %v752, 0
        %v796 = vsel %vm344, %v754, 0
        %v799 = vsel %vm344, %v756, 0
        %v802 = vsel %vm344, %v758, 0
        %v805 = vsel %vm344, %v760, 0
        %v808 = vsel %vm344, %v762, 0
        %v811 = vsel %vm344, %v764, 0
        %813 = vmatprep.subr.mxu0 0.0
        %814 = vmatpush1.msra.mxu0 %v579
        %815 = vmatprep.subr.mxu0 0.0
        %816 = vmatpush1.msra.mxu0 %v580
        %817 = vmatprep.subr.mxu0 0.0
        %818 = vmatpush1.msra.mxu0 %v581
        %819 = vmatprep.subr.mxu0 0.0
        %820 = vmatpush1.msra.mxu0 %v582
        %821 = vmatprep.subr.mxu0 0.0
        %822 = vmatpush1.msra.mxu0 %v583
        %823 = vmatprep.subr.mxu0 0.0
        %824 = vmatpush1.msra.mxu0 %v584
        %825 = vmatprep.subr.mxu0 0.0
        %826 = vmatpush1.msra.mxu0 %v585
        %827 = vmatprep.subr.mxu0 0.0
        %828 = vmatpush1.msra.mxu0 %v586
        %829 = vmatprep.subr.mxu0 0.0
        %830 = vmatpush1.msra.mxu0 0.0
        %831 = vmatprep.subr.mxu0 0.0
        %832 = vmatpush1.msra.mxu0 0.0
        %833 = vmatprep.subr.mxu0 0.0
        %834 = vmatpush1.msra.mxu0 0.0
        %835 = vmatprep.subr.mxu0 0.0
        %836 = vmatpush1.msra.mxu0 0.0
        %837 = vmatprep.subr.mxu0 0.0
        %838 = vmatpush1.msra.mxu0 0.0
        %839 = vmatprep.subr.mxu0 0.0
        %840 = vmatpush1.msra.mxu0 0.0
        %841 = vmatprep.subr.mxu0 0.0
        %842 = vmatpush1.msra.mxu0 0.0
        %843 = vmatprep.subr.mxu0 0.0
        %844 = vmatpush1.msra.mxu0 0.0
        %845 = vmatprep.subr.mxu0 0.0
        %846 = vmatpush1.msra.mxu0 0.0
        %847 = vmatprep.subr.mxu0 0.0
        %848 = vmatpush1.msra.mxu0 0.0
        %849 = vmatprep.subr.mxu0 0.0
        %850 = vmatpush1.msra.mxu0 0.0
        %851 = vmatprep.subr.mxu0 0.0
        %852 = vmatpush1.msra.mxu0 0.0
        %853 = vmatprep.subr.mxu0 0.0
        %854 = vmatpush1.msra.mxu0 0.0
        %855 = vmatprep.subr.mxu0 0.0
        %856 = vmatpush1.msra.mxu0 0.0
        %857 = vmatprep.subr.mxu0 0.0
        %858 = vmatpush1.msra.mxu0 0.0
        %859 = vmatprep.subr.mxu0 0.0
        %860 = vmatpush1.msra.mxu0 0.0
        %861 = vmatprep.subr.mxu0 0.0
        %862 = vmatpush1.msra.mxu0 0.0
        %863 = vmatprep.subr.mxu0 0.0
        %864 = vmatpush1.msra.mxu0 0.0
        %865 = vmatprep.subr.mxu0 0.0
        %866 = vmatpush1.msra.mxu0 0.0
        %867 = vmatprep.subr.mxu0 0.0
        %868 = vmatpush1.msra.mxu0 0.0
        %869 = vmatprep.subr.mxu0 0.0
        %870 = vmatpush1.msra.mxu0 0.0
        %871 = vmatprep.subr.mxu0 0.0
        %872 = vmatpush1.msra.mxu0 0.0
        %873 = vmatprep.subr.mxu0 0.0
        %874 = vmatpush1.msra.mxu0 0.0
        %875 = vmatprep.subr.mxu0 0.0
        %876 = vmatpush1.msra.mxu0 0.0
        %877 = vmatprep.mubr.f32.mxu0 0.0
        %878 = vmatmul.mubr.f32.gmra.mrb[0].mxu0 %v790
        %v879 = vpop.f32.mrb[0].mxu0
        %v880 = vadd.f32 0.0, %v879
        %v881 = vpop.f32.mrb[0].mxu0
        %882 = vmatprep.mubr.f32.mxu0 0.0
        %883 = vmatmul.mubr.f32.gmra.mrb[0].mxu0 %v793
        %v884 = vpop.f32.mrb[0].mxu0
        %v885 = vadd.f32 0.0, %v884
        %v886 = vpop.f32.mrb[0].mxu0
        %887 = vmatprep.mubr.f32.mxu0 0.0
        %888 = vmatmul.mubr.f32.gmra.mrb[0].mxu0 %v796
        %v889 = vpop.f32.mrb[0].mxu0
        %v890 = vadd.f32 0.0, %v889
        %v891 = vpop.f32.mrb[0].mxu0
        %892 = vmatprep.mubr.f32.mxu0 0.0
        %893 = vmatmul.mubr.f32.gmra.mrb[0].mxu0 %v799
        %v894 = vpop.f32.mrb[0].mxu0
        %v895 = vadd.f32 0.0, %v894
        %v896 = vpop.f32.mrb[0].mxu0
        %897 = vmatprep.mubr.f32.mxu0 0.0
        %898 = vmatmul.mubr.f32.gmra.mrb[0].mxu0 %v802
        %v899 = vpop.f32.mrb[0].mxu0
        %v900 = vadd.f32 0.0, %v899
        %v901 = vpop.f32.mrb[0].mxu0
        %902 = vmatprep.mubr.f32.mxu0 0.0
        %903 = vmatmul.mubr.f32.gmra.mrb[0].mxu0 %v805
        %v904 = vpop.f32.mrb[0].mxu0
        %v905 = vadd.f32 0.0, %v904
        %v906 = vpop.f32.mrb[0].mxu0
        %907 = vmatprep.mubr.f32.mxu0 0.0
        %908 = vmatmul.mubr.f32.gmra.mrb[0].mxu0 %v808
        %v909 = vpop.f32.mrb[0].mxu0
        %v910 = vadd.f32 0.0, %v909
        %v911 = vpop.f32.mrb[0].mxu0
        %912 = vmatprep.mubr.f32.mxu0 0.0
        %913 = vmatmul.mubr.f32.gmra.mrb[0].mxu0 %v811
        %v914 = vpop.f32.mrb[0].mxu0
        %v915 = vadd.f32 0.0, %v914
        %v916 = vpop.f32.mrb[0].mxu0
        %917 = vdwg.mxu0
        %v918 = vrcp.pop %v767
        %v919 = vrcp.pop %v770
        %v920 = vrcp.pop %v773
        %v921 = vrcp.pop %v776
        %v922 = vrcp.pop %v779
        %v923 = vrcp.pop %v782
        %v924 = vrcp.pop %v785
        %v925 = vrcp.pop %v788
        %v926 = vmul.f32 %v880, %v918
        %v927 = vmul.f32 %v885, %v919
        %v928 = vmul.f32 %v890, %v920
        %v929 = vmul.f32 %v895, %v921
        %v930 = vmul.f32 %v900, %v922
        %v931 = vmul.f32 %v905, %v923
        %v932 = vmul.f32 %v910, %v924
        %v933 = vmul.f32 %v915, %v925
        %934 = vst.msk [vmem:[#allocation4] sm:$0xff] %vm587, %v926
        %935 = vst.msk [vmem:[#allocation4 + $0x8] sm:$0xff] %vm587, %v927
        %936 = vst.msk [vmem:[#allocation4 + $0x10] sm:$0xff] %vm587, %v928
        %937 = vst.msk [vmem:[#allocation4 + $0x18] sm:$0xff] %vm587, %v929
        %938 = vst.msk [vmem:[#allocation4 + $0x20] sm:$0xff] %vm587, %v930
        %939 = vst.msk [vmem:[#allocation4 + $0x28] sm:$0xff] %vm587, %v931
        %940 = vst.msk [vmem:[#allocation4 + $0x30] sm:$0xff] %vm587, %v932
        %941 = vst.msk [vmem:[#allocation4 + $0x38] sm:$0xff] %vm587, %v933
        %v942 = vld [vmem:[#allocation2] sm:$0xff]
        %v943 = vld [vmem:[#allocation2 + $0x10] sm:$0xff]
        %v944 = vld [vmem:[#allocation2 + $0x20] sm:$0xff]
        %v945 = vld [vmem:[#allocation2 + $0x30] sm:$0xff]
        %v946 = vld [vmem:[#allocation2 + $0x40] sm:$0xff]
        %v947 = vld [vmem:[#allocation2 + $0x50] sm:$0xff]
        %v948 = vld [vmem:[#allocation2 + $0x60] sm:$0xff]
        %v949 = vld [vmem:[#allocation2 + $0x70] sm:$0xff]
        %v950 = vld [vmem:[#allocation3 + $0x8] sm:$0xff]
        %v951 = vld [vmem:[#allocation2 + $0x8] sm:$0xff]
        %v952 = vld [vmem:[#allocation2 + $0x18] sm:$0xff]
        %v953 = vld [vmem:[#allocation2 + $0x28] sm:$0xff]
        %v954 = vld [vmem:[#allocation2 + $0x38] sm:$0xff]
        %v955 = vld [vmem:[#allocation2 + $0x48] sm:$0xff]
        %v956 = vld [vmem:[#allocation2 + $0x58] sm:$0xff]
        %v957 = vld [vmem:[#allocation2 + $0x68] sm:$0xff]
        %v958 = vld [vmem:[#allocation2 + $0x78] sm:$0xff]
        %967 = vrot.lane.b32.xlu0 %v942, 120
        %v968 = vpop.permute.xlu0 %967
        %969 = vrot.lane.b32.xlu0 %v943, 120
        %v970 = vpop.permute.xlu0 %969
        %971 = vrot.lane.b32.xlu0 %v944, 120
        %v972 = vpop.permute.xlu0 %971
        %973 = vrot.lane.b32.xlu0 %v945, 120
        %v974 = vpop.permute.xlu0 %973
        %975 = vrot.lane.b32.xlu0 %v946, 120
        %v976 = vpop.permute.xlu0 %975
        %977 = vrot.lane.b32.xlu0 %v947, 120
        %v978 = vpop.permute.xlu0 %977
        %979 = vrot.lane.b32.xlu0 %v948, 120
        %v980 = vpop.permute.xlu0 %979
        %981 = vrot.lane.b32.xlu0 %v949, 120
        %v982 = vpop.permute.xlu0 %981
        %v983 = vsel %vm587, %v968, 0
        %v985 = vsel %vm587, %v970, 0
        %v987 = vsel %vm587, %v972, 0
        %v989 = vsel %vm587, %v974, 0
        %v991 = vsel %vm587, %v976, 0
        %v993 = vsel %vm587, %v978, 0
        %v995 = vsel %vm587, %v980, 0
        %v997 = vsel %vm587, %v982, 0
        %999 = vmatprep.subr.mxu0 0.0
        %1000 = vmatpush1.msra.mxu0 %v950
        %1001 = vmatprep.subr.mxu0 0.0
        %1002 = vmatpush1.msra.mxu0 0.0
        %1003 = vmatprep.subr.mxu0 0.0
        %1004 = vmatpush1.msra.mxu0 0.0
        %1005 = vmatprep.subr.mxu0 0.0
        %1006 = vmatpush1.msra.mxu0 0.0
        %1007 = vmatprep.subr.mxu0 0.0
        %1008 = vmatpush1.msra.mxu0 0.0
        %1009 = vmatprep.subr.mxu0 0.0
        %1010 = vmatpush1.msra.mxu0 0.0
        %1011 = vmatprep.subr.mxu0 0.0
        %1012 = vmatpush1.msra.mxu0 0.0
        %1013 = vmatprep.subr.mxu0 0.0
        %1014 = vmatpush1.msra.mxu0 0.0
        %1015 = vmatprep.subr.mxu0 0.0
        %1016 = vmatpush1.msra.mxu0 0.0
        %1017 = vmatprep.subr.mxu0 0.0
        %1018 = vmatpush1.msra.mxu0 0.0
        %1019 = vmatprep.subr.mxu0 0.0
        %1020 = vmatpush1.msra.mxu0 0.0
        %1021 = vmatprep.subr.mxu0 0.0
        %1022 = vmatpush1.msra.mxu0 0.0
        %1023 = vmatprep.subr.mxu0 0.0
        %1024 = vmatpush1.msra.mxu0 0.0
        %1025 = vmatprep.subr.mxu0 0.0
        %1026 = vmatpush1.msra.mxu0 0.0
        %1027 = vmatprep.subr.mxu0 0.0
        %1028 = vmatpush1.msra.mxu0 0.0
        %1029 = vmatprep.subr.mxu0 0.0
        %1030 = vmatpush1.msra.mxu0 0.0
        %1031 = vmatprep.subr.mxu0 0.0
        %1032 = vmatpush1.msra.mxu0 0.0
        %1033 = vmatprep.subr.mxu0 0.0
        %1034 = vmatpush1.msra.mxu0 0.0
        %1035 = vmatprep.subr.mxu0 0.0
        %1036 = vmatpush1.msra.mxu0 0.0
        %1037 = vmatprep.subr.mxu0 0.0
        %1038 = vmatpush1.msra.mxu0 0.0
        %1039 = vmatprep.subr.mxu0 0.0
        %1040 = vmatpush1.msra.mxu0 0.0
        %1041 = vmatprep.subr.mxu0 0.0
        %1042 = vmatpush1.msra.mxu0 0.0
        %1043 = vmatprep.subr.mxu0 0.0
        %1044 = vmatpush1.msra.mxu0 0.0
        %1045 = vmatprep.subr.mxu0 0.0
        %1046 = vmatpush1.msra.mxu0 0.0
        %1047 = vmatprep.subr.mxu0 0.0
        %1048 = vmatpush1.msra.mxu0 0.0
        %1049 = vmatprep.subr.mxu0 0.0
        %1050 = vmatpush1.msra.mxu0 0.0
        %1051 = vmatprep.subr.mxu0 0.0
        %1052 = vmatpush1.msra.mxu0 0.0
        %1053 = vmatprep.subr.mxu0 0.0
        %1054 = vmatpush1.msra.mxu0 0.0
        %1055 = vmatprep.subr.mxu0 0.0
        %1056 = vmatpush1.msra.mxu0 0.0
        %1057 = vmatprep.subr.mxu0 0.0
        %1058 = vmatpush1.msra.mxu0 0.0
        %1059 = vmatprep.subr.mxu0 0.0
        %1060 = vmatpush1.msra.mxu0 0.0
        %1061 = vmatprep.subr.mxu0 0.0
        %1062 = vmatpush1.msra.mxu0 0.0
        %1063 = vmatprep.mubr.f32.mxu0 0.0
        %1064 = vmatmul.mubr.f32.gmra.mrb[0].mxu0 %v983
        %v1065 = vpop.f32.mrb[0].mxu0
        %v1066 = vadd.f32 0.0, %v1065
        %v1067 = vpop.f32.mrb[0].mxu0
        %1068 = vmatprep.mubr.f32.mxu0 0.0
        %1069 = vmatmul.mubr.f32.gmra.mrb[0].mxu0 %v985
        %v1070 = vpop.f32.mrb[0].mxu0
        %v1071 = vadd.f32 0.0, %v1070
        %v1072 = vpop.f32.mrb[0].mxu0
        %1073 = vmatprep.mubr.f32.mxu0 0.0
        %1074 = vmatmul.mubr.f32.gmra.mrb[0].mxu0 %v987
        %v1075 = vpop.f32.mrb[0].mxu0
        %v1076 = vadd.f32 0.0, %v1075
        %v1077 = vpop.f32.mrb[0].mxu0
        %1078 = vmatprep.mubr.f32.mxu0 0.0
        %1079 = vmatmul.mubr.f32.gmra.mrb[0].mxu0 %v989
        %v1080 = vpop.f32.mrb[0].mxu0
        %v1081 = vadd.f32 0.0, %v1080
        %v1082 = vpop.f32.mrb[0].mxu0
        %1083 = vmatprep.mubr.f32.mxu0 0.0
        %1084 = vmatmul.mubr.f32.gmra.mrb[0].mxu0 %v991
        %v1085 = vpop.f32.mrb[0].mxu0
        %v1086 = vadd.f32 0.0, %v1085
        %v1087 = vpop.f32.mrb[0].mxu0
        %1088 = vmatprep.mubr.f32.mxu0 0.0
        %1089 = vmatmul.mubr.f32.gmra.mrb[0].mxu0 %v993
        %v1090 = vpop.f32.mrb[0].mxu0
        %v1091 = vadd.f32 0.0, %v1090
        %v1092 = vpop.f32.mrb[0].mxu0
        %1093 = vmatprep.mubr.f32.mxu0 0.0
        %1094 = vmatmul.mubr.f32.gmra.mrb[0].mxu0 %v995
        %v1095 = vpop.f32.mrb[0].mxu0
        %v1096 = vadd.f32 0.0, %v1095
        %v1097 = vpop.f32.mrb[0].mxu0
        %1098 = vmatprep.mubr.f32.mxu0 0.0
        %1099 = vmatmul.mubr.f32.gmra.mrb[0].mxu0 %v997
        %v1100 = vpop.f32.mrb[0].mxu0
        %v1101 = vadd.f32 0.0, %v1100
        %v1102 = vpop.f32.mrb[0].mxu0
        %1103 = vdwg.mxu0
        %v1104 = vsel %vm344, %v1066, -inf
        %1105 = vmax.xlane.f32.xlu0 %v1104
        %v1106 = vpop.xlane.xlu0 %1105
        %v1107 = vsel %vm344, %v1071, -inf
        %1108 = vmax.xlane.f32.xlu0 %v1107
        %v1109 = vpop.xlane.xlu0 %1108
        %v1110 = vsel %vm344, %v1076, -inf
        %1111 = vmax.xlane.f32.xlu0 %v1110
        %v1112 = vpop.xlane.xlu0 %1111
        %v1113 = vsel %vm344, %v1081, -inf
        %1114 = vmax.xlane.f32.xlu0 %v1113
        %v1115 = vpop.xlane.xlu0 %1114
        %v1116 = vsel %vm344, %v1086, -inf
        %1117 = vmax.xlane.f32.xlu0 %v1116
        %v1118 = vpop.xlane.xlu0 %1117
        %v1119 = vsel %vm344, %v1091, -inf
        %1120 = vmax.xlane.f32.xlu0 %v1119
        %v1121 = vpop.xlane.xlu0 %1120
        %v1122 = vsel %vm344, %v1096, -inf
        %1123 = vmax.xlane.f32.xlu0 %v1122
        %v1124 = vpop.xlane.xlu0 %1123
        %v1125 = vsel %vm344, %v1101, -inf
        %1126 = vmax.xlane.f32.xlu0 %v1125
        %v1127 = vpop.xlane.xlu0 %1126
        %v1128 = vsub.f32 %v1066, %v1106
        %v1129 = vsub.f32 %v1071, %v1109
        %v1130 = vsub.f32 %v1076, %v1112
        %v1131 = vsub.f32 %v1081, %v1115
        %v1132 = vsub.f32 %v1086, %v1118
        %v1133 = vsub.f32 %v1091, %v1121
        %v1134 = vsub.f32 %v1096, %v1124
        %v1135 = vsub.f32 %v1101, %v1127
        %v1136 = vmul.f32 %v1128, 1.442695
        %v1137 = vpow.pop %v1136
        %v1138 = vmul.f32 %v1129, 1.442695
        %v1139 = vpow.pop %v1138
        %v1140 = vmul.f32 %v1130, 1.442695
        %v1141 = vpow.pop %v1140
        %v1142 = vmul.f32 %v1131, 1.442695
        %v1143 = vpow.pop %v1142
        %v1144 = vmul.f32 %v1132, 1.442695
        %v1145 = vpow.pop %v1144
        %v1146 = vmul.f32 %v1133, 1.442695
        %v1147 = vpow.pop %v1146
        %v1148 = vmul.f32 %v1134, 1.442695
        %v1149 = vpow.pop %v1148
        %v1150 = vmul.f32 %v1135, 1.442695
        %v1151 = vpow.pop %v1150
        %v1152 = vsel %vm344, %v1137, 0.0
        %1153 = vadd.xlane.f32.xlu0 %v1152
        %v1154 = vpop.xlane.xlu0 %1153
        %v1155 = vsel %vm344, %v1139, 0.0
        %1156 = vadd.xlane.f32.xlu0 %v1155
        %v1157 = vpop.xlane.xlu0 %1156
        %v1158 = vsel %vm344, %v1141, 0.0
        %1159 = vadd.xlane.f32.xlu0 %v1158
        %v1160 = vpop.xlane.xlu0 %1159
        %v1161 = vsel %vm344, %v1143, 0.0
        %1162 = vadd.xlane.f32.xlu0 %v1161
        %v1163 = vpop.xlane.xlu0 %1162
        %v1164 = vsel %vm344, %v1145, 0.0
        %1165 = vadd.xlane.f32.xlu0 %v1164
        %v1166 = vpop.xlane.xlu0 %1165
        %v1167 = vsel %vm344, %v1147, 0.0
        %1168 = vadd.xlane.f32.xlu0 %v1167
        %v1169 = vpop.xlane.xlu0 %1168
        %v1170 = vsel %vm344, %v1149, 0.0
        %1171 = vadd.xlane.f32.xlu0 %v1170
        %v1172 = vpop.xlane.xlu0 %1171
        %v1173 = vsel %vm344, %v1151, 0.0
        %1174 = vadd.xlane.f32.xlu0 %v1173
        %v1175 = vpop.xlane.xlu0 %1174
        %1184 = vrot.lane.b32.xlu0 %v951, 120
        %v1185 = vpop.permute.xlu0 %1184
        %1186 = vrot.lane.b32.xlu0 %v952, 120
        %v1187 = vpop.permute.xlu0 %1186
        %1188 = vrot.lane.b32.xlu0 %v953, 120
        %v1189 = vpop.permute.xlu0 %1188
        %1190 = vrot.lane.b32.xlu0 %v954, 120
        %v1191 = vpop.permute.xlu0 %1190
        %1192 = vrot.lane.b32.xlu0 %v955, 120
        %v1193 = vpop.permute.xlu0 %1192
        %1194 = vrot.lane.b32.xlu0 %v956, 120
        %v1195 = vpop.permute.xlu0 %1194
        %1196 = vrot.lane.b32.xlu0 %v957, 120
        %v1197 = vpop.permute.xlu0 %1196
        %1198 = vrot.lane.b32.xlu0 %v958, 120
        %v1199 = vpop.permute.xlu0 %1198
        %v1209 = vsel %vm344, %v1137, 0
        %v1212 = vsel %vm344, %v1139, 0
        %v1215 = vsel %vm344, %v1141, 0
        %v1218 = vsel %vm344, %v1143, 0
        %v1221 = vsel %vm344, %v1145, 0
        %v1224 = vsel %vm344, %v1147, 0
        %v1227 = vsel %vm344, %v1149, 0
        %v1230 = vsel %vm344, %v1151, 0
        %1232 = vmatprep.subr.mxu0 0.0
        %1233 = vmatpush1.msra.mxu0 %v1185
        %1234 = vmatprep.subr.mxu0 0.0
        %1235 = vmatpush1.msra.mxu0 %v1187
        %1236 = vmatprep.subr.mxu0 0.0
        %1237 = vmatpush1.msra.mxu0 %v1189
        %1238 = vmatprep.subr.mxu0 0.0
        %1239 = vmatpush1.msra.mxu0 %v1191
        %1240 = vmatprep.subr.mxu0 0.0
        %1241 = vmatpush1.msra.mxu0 %v1193
        %1242 = vmatprep.subr.mxu0 0.0
        %1243 = vmatpush1.msra.mxu0 %v1195
        %1244 = vmatprep.subr.mxu0 0.0
        %1245 = vmatpush1.msra.mxu0 %v1197
        %1246 = vmatprep.subr.mxu0 0.0
        %1247 = vmatpush1.msra.mxu0 %v1199
        %1248 = vmatprep.subr.mxu0 0.0
        %1249 = vmatpush1.msra.mxu0 0.0
        %1250 = vmatprep.subr.mxu0 0.0
        %1251 = vmatpush1.msra.mxu0 0.0
        %1252 = vmatprep.subr.mxu0 0.0
        %1253 = vmatpush1.msra.mxu0 0.0
        %1254 = vmatprep.subr.mxu0 0.0
        %1255 = vmatpush1.msra.mxu0 0.0
        %1256 = vmatprep.subr.mxu0 0.0
        %1257 = vmatpush1.msra.mxu0 0.0
        %1258 = vmatprep.subr.mxu0 0.0
        %1259 = vmatpush1.msra.mxu0 0.0
        %1260 = vmatprep.subr.mxu0 0.0
        %1261 = vmatpush1.msra.mxu0 0.0
        %1262 = vmatprep.subr.mxu0 0.0
        %1263 = vmatpush1.msra.mxu0 0.0
        %1264 = vmatprep.subr.mxu0 0.0
        %1265 = vmatpush1.msra.mxu0 0.0
        %1266 = vmatprep.subr.mxu0 0.0
        %1267 = vmatpush1.msra.mxu0 0.0
        %1268 = vmatprep.subr.mxu0 0.0
        %1269 = vmatpush1.msra.mxu0 0.0
        %1270 = vmatprep.subr.mxu0 0.0
        %1271 = vmatpush1.msra.mxu0 0.0
        %1272 = vmatprep.subr.mxu0 0.0
        %1273 = vmatpush1.msra.mxu0 0.0
        %1274 = vmatprep.subr.mxu0 0.0
        %1275 = vmatpush1.msra.mxu0 0.0
        %1276 = vmatprep.subr.mxu0 0.0
        %1277 = vmatpush1.msra.mxu0 0.0
        %1278 = vmatprep.subr.mxu0 0.0
        %1279 = vmatpush1.msra.mxu0 0.0
        %1280 = vmatprep.subr.mxu0 0.0
        %1281 = vmatpush1.msra.mxu0 0.0
        %1282 = vmatprep.subr.mxu0 0.0
        %1283 = vmatpush1.msra.mxu0 0.0
        %1284 = vmatprep.subr.mxu0 0.0
        %1285 = vmatpush1.msra.mxu0 0.0
        %1286 = vmatprep.subr.mxu0 0.0
        %1287 = vmatpush1.msra.mxu0 0.0
        %1288 = vmatprep.subr.mxu0 0.0
        %1289 = vmatpush1.msra.mxu0 0.0
        %1290 = vmatprep.subr.mxu0 0.0
        %1291 = vmatpush1.msra.mxu0 0.0
        %1292 = vmatprep.subr.mxu0 0.0
        %1293 = vmatpush1.msra.mxu0 0.0
        %1294 = vmatprep.subr.mxu0 0.0
        %1295 = vmatpush1.msra.mxu0 0.0
        %1296 = vmatprep.mubr.f32.mxu0 0.0
        %1297 = vmatmul.mubr.f32.gmra.mrb[0].mxu0 %v1209
        %v1298 = vpop.f32.mrb[0].mxu0
        %v1299 = vadd.f32 0.0, %v1298
        %v1300 = vpop.f32.mrb[0].mxu0
        %1301 = vmatprep.mubr.f32.mxu0 0.0
        %1302 = vmatmul.mubr.f32.gmra.mrb[0].mxu0 %v1212
        %v1303 = vpop.f32.mrb[0].mxu0
        %v1304 = vadd.f32 0.0, %v1303
        %v1305 = vpop.f32.mrb[0].mxu0
        %1306 = vmatprep.mubr.f32.mxu0 0.0
        %1307 = vmatmul.mubr.f32.gmra.mrb[0].mxu0 %v1215
        %v1308 = vpop.f32.mrb[0].mxu0
        %v1309 = vadd.f32 0.0, %v1308
        %v1310 = vpop.f32.mrb[0].mxu0
        %1311 = vmatprep.mubr.f32.mxu0 0.0
        %1312 = vmatmul.mubr.f32.gmra.mrb[0].mxu0 %v1218
        %v1313 = vpop.f32.mrb[0].mxu0
        %v1314 = vadd.f32 0.0, %v1313
        %v1315 = vpop.f32.mrb[0].mxu0
        %1316 = vmatprep.mubr.f32.mxu0 0.0
        %1317 = vmatmul.mubr.f32.gmra.mrb[0].mxu0 %v1221
        %v1318 = vpop.f32.mrb[0].mxu0
        %v1319 = vadd.f32 0.0, %v1318
        %v1320 = vpop.f32.mrb[0].mxu0
        %1321 = vmatprep.mubr.f32.mxu0 0.0
        %1322 = vmatmul.mubr.f32.gmra.mrb[0].mxu0 %v1224
        %v1323 = vpop.f32.mrb[0].mxu0
        %v1324 = vadd.f32 0.0, %v1323
        %v1325 = vpop.f32.mrb[0].mxu0
        %1326 = vmatprep.mubr.f32.mxu0 0.0
        %1327 = vmatmul.mubr.f32.gmra.mrb[0].mxu0 %v1227
        %v1328 = vpop.f32.mrb[0].mxu0
        %v1329 = vadd.f32 0.0, %v1328
        %v1330 = vpop.f32.mrb[0].mxu0
        %1331 = vmatprep.mubr.f32.mxu0 0.0
        %1332 = vmatmul.mubr.f32.gmra.mrb[0].mxu0 %v1230
        %v1333 = vpop.f32.mrb[0].mxu0
        %v1334 = vadd.f32 0.0, %v1333
        %v1335 = vpop.f32.mrb[0].mxu0
        %1336 = vdwg.mxu0
        %v1337 = vrcp.pop %v1154
        %v1338 = vrcp.pop %v1157
        %v1339 = vrcp.pop %v1160
        %v1340 = vrcp.pop %v1163
        %v1341 = vrcp.pop %v1166
        %v1342 = vrcp.pop %v1169
        %v1343 = vrcp.pop %v1172
        %v1344 = vrcp.pop %v1175
        %v1345 = vmul.f32 %v1299, %v1337
        %v1346 = vmul.f32 %v1304, %v1338
        %v1347 = vmul.f32 %v1309, %v1339
        %v1348 = vmul.f32 %v1314, %v1340
        %v1349 = vmul.f32 %v1319, %v1341
        %v1350 = vmul.f32 %v1324, %v1342
        %v1351 = vmul.f32 %v1329, %v1343
        %v1352 = vmul.f32 %v1334, %v1344
        %1361 = vrot.lane.b32.xlu0 %v1345, 8
        %v1362 = vpop.permute.xlu0 %1361
        %1363 = vrot.lane.b32.xlu0 %v1346, 8
        %v1364 = vpop.permute.xlu0 %1363
        %1365 = vrot.lane.b32.xlu0 %v1347, 8
        %v1366 = vpop.permute.xlu0 %1365
        %1367 = vrot.lane.b32.xlu0 %v1348, 8
        %v1368 = vpop.permute.xlu0 %1367
        %1369 = vrot.lane.b32.xlu0 %v1349, 8
        %v1370 = vpop.permute.xlu0 %1369
        %1371 = vrot.lane.b32.xlu0 %v1350, 8
        %v1372 = vpop.permute.xlu0 %1371
        %1373 = vrot.lane.b32.xlu0 %v1351, 8
        %v1374 = vpop.permute.xlu0 %1373
        %1375 = vrot.lane.b32.xlu0 %v1352, 8
        %v1376 = vpop.permute.xlu0 %1375
        %vm1385 = vcmask 130112
        %1386 = vst.msk [vmem:[#allocation4] sm:$0xff] %vm1385, %v1362
        %1387 = vst.msk [vmem:[#allocation4 + $0x8] sm:$0xff] %vm1385, %v1364
        %1388 = vst.msk [vmem:[#allocation4 + $0x10] sm:$0xff] %vm1385, %v1366
        %1389 = vst.msk [vmem:[#allocation4 + $0x18] sm:$0xff] %vm1385, %v1368
        %1390 = vst.msk [vmem:[#allocation4 + $0x20] sm:$0xff] %vm1385, %v1370
        %1391 = vst.msk [vmem:[#allocation4 + $0x28] sm:$0xff] %vm1385, %v1372
        %1392 = vst.msk [vmem:[#allocation4 + $0x30] sm:$0xff] %vm1385, %v1374
        %1393 = vst.msk [vmem:[#allocation4 + $0x38] sm:$0xff] %vm1385, %v1376
        %v1394 = vld [vmem:[#allocation2] sm:$0xff]
        %v1395 = vld [vmem:[#allocation2 + $0x10] sm:$0xff]
        %v1396 = vld [vmem:[#allocation2 + $0x20] sm:$0xff]
        %v1397 = vld [vmem:[#allocation2 + $0x30] sm:$0xff]
        %v1398 = vld [vmem:[#allocation2 + $0x40] sm:$0xff]
        %v1399 = vld [vmem:[#allocation2 + $0x50] sm:$0xff]
        %v1400 = vld [vmem:[#allocation2 + $0x60] sm:$0xff]
        %v1401 = vld [vmem:[#allocation2 + $0x70] sm:$0xff]
        %v1402 = vld [vmem:[#allocation3 + $0x10] sm:$0xff]
        %v1403 = vld [vmem:[#allocation2 + $0x8] sm:$0xff]
        %v1404 = vld [vmem:[#allocation2 + $0x18] sm:$0xff]
        %v1405 = vld [vmem:[#allocation2 + $0x28] sm:$0xff]
        %v1406 = vld [vmem:[#allocation2 + $0x38] sm:$0xff]
        %v1407 = vld [vmem:[#allocation2 + $0x48] sm:$0xff]
        %v1408 = vld [vmem:[#allocation2 + $0x58] sm:$0xff]
        %v1409 = vld [vmem:[#allocation2 + $0x68] sm:$0xff]
        %v1410 = vld [vmem:[#allocation2 + $0x78] sm:$0xff]
        %1419 = vrot.lane.b32.xlu0 %v1394, 112
        %v1420 = vpop.permute.xlu0 %1419
        %1421 = vrot.lane.b32.xlu0 %v1395, 112
        %v1422 = vpop.permute.xlu0 %1421
        %1423 = vrot.lane.b32.xlu0 %v1396, 112
        %v1424 = vpop.permute.xlu0 %1423
        %1425 = vrot.lane.b32.xlu0 %v1397, 112
        %v1426 = vpop.permute.xlu0 %1425
        %1427 = vrot.lane.b32.xlu0 %v1398, 112
        %v1428 = vpop.permute.xlu0 %1427
        %1429 = vrot.lane.b32.xlu0 %v1399, 112
        %v1430 = vpop.permute.xlu0 %1429
        %1431 = vrot.lane.b32.xlu0 %v1400, 112
        %v1432 = vpop.permute.xlu0 %1431
        %1433 = vrot.lane.b32.xlu0 %v1401, 112
        %v1434 = vpop.permute.xlu0 %1433
        %v1435 = vsel %vm587, %v1420, 0
        %v1437 = vsel %vm587, %v1422, 0
        %v1439 = vsel %vm587, %v1424, 0
        %v1441 = vsel %vm587, %v1426, 0
        %v1443 = vsel %vm587, %v1428, 0
        %v1445 = vsel %vm587, %v1430, 0
        %v1447 = vsel %vm587, %v1432, 0
        %v1449 = vsel %vm587, %v1434, 0
        %1451 = vmatprep.subr.mxu0 0.0
        %1452 = vmatpush1.msra.mxu0 %v1402
        %1453 = vmatprep.subr.mxu0 0.0
        %1454 = vmatpush1.msra.mxu0 0.0
        %1455 = vmatprep.subr.mxu0 0.0
        %1456 = vmatpush1.msra.mxu0 0.0
        %1457 = vmatprep.subr.mxu0 0.0
        %1458 = vmatpush1.msra.mxu0 0.0
        %1459 = vmatprep.subr.mxu0 0.0
        %1460 = vmatpush1.msra.mxu0 0.0
        %1461 = vmatprep.subr.mxu0 0.0
        %1462 = vmatpush1.msra.mxu0 0.0
        %1463 = vmatprep.subr.mxu0 0.0
        %1464 = vmatpush1.msra.mxu0 0.0
        %1465 = vmatprep.subr.mxu0 0.0
        %1466 = vmatpush1.msra.mxu0 0.0
        %1467 = vmatprep.subr.mxu0 0.0
        %1468 = vmatpush1.msra.mxu0 0.0
        %1469 = vmatprep.subr.mxu0 0.0
        %1470 = vmatpush1.msra.mxu0 0.0
        %1471 = vmatprep.subr.mxu0 0.0
        %1472 = vmatpush1.msra.mxu0 0.0
        %1473 = vmatprep.subr.mxu0 0.0
        %1474 = vmatpush1.msra.mxu0 0.0
        %1475 = vmatprep.subr.mxu0 0.0
        %1476 = vmatpush1.msra.mxu0 0.0
        %1477 = vmatprep.subr.mxu0 0.0
        %1478 = vmatpush1.msra.mxu0 0.0
        %1479 = vmatprep.subr.mxu0 0.0
        %1480 = vmatpush1.msra.mxu0 0.0
        %1481 = vmatprep.subr.mxu0 0.0
        %1482 = vmatpush1.msra.mxu0 0.0
        %1483 = vmatprep.subr.mxu0 0.0
        %1484 = vmatpush1.msra.mxu0 0.0
        %1485 = vmatprep.subr.mxu0 0.0
        %1486 = vmatpush1.msra.mxu0 0.0
        %1487 = vmatprep.subr.mxu0 0.0
        %1488 = vmatpush1.msra.mxu0 0.0
        %1489 = vmatprep.subr.mxu0 0.0
        %1490 = vmatpush1.msra.mxu0 0.0
        %1491 = vmatprep.subr.mxu0 0.0
        %1492 = vmatpush1.msra.mxu0 0.0
        %1493 = vmatprep.subr.mxu0 0.0
        %1494 = vmatpush1.msra.mxu0 0.0
        %1495 = vmatprep.subr.mxu0 0.0
        %1496 = vmatpush1.msra.mxu0 0.0
        %1497 = vmatprep.subr.mxu0 0.0
        %1498 = vmatpush1.msra.mxu0 0.0
        %1499 = vmatprep.subr.mxu0 0.0
        %1500 = vmatpush1.msra.mxu0 0.0
        %1501 = vmatprep.subr.mxu0 0.0
        %1502 = vmatpush1.msra.mxu0 0.0
        %1503 = vmatprep.subr.mxu0 0.0
        %1504 = vmatpush1.msra.mxu0 0.0
        %1505 = vmatprep.subr.mxu0 0.0
        %1506 = vmatpush1.msra.mxu0 0.0
        %1507 = vmatprep.subr.mxu0 0.0
        %1508 = vmatpush1.msra.mxu0 0.0
        %1509 = vmatprep.subr.mxu0 0.0
        %1510 = vmatpush1.msra.mxu0 0.0
        %1511 = vmatprep.subr.mxu0 0.0
        %1512 = vmatpush1.msra.mxu0 0.0
        %1513 = vmatprep.subr.mxu0 0.0
        %1514 = vmatpush1.msra.mxu0 0.0
        %1515 = vmatprep.mubr.f32.mxu0 0.0
        %1516 = vmatmul.mubr.f32.gmra.mrb[0].mxu0 %v1435
        %v1517 = vpop.f32.mrb[0].mxu0
        %v1518 = vadd.f32 0.0, %v1517
        %v1519 = vpop.f32.mrb[0].mxu0
        %1520 = vmatprep.mubr.f32.mxu0 0.0
        %1521 = vmatmul.mubr.f32.gmra.mrb[0].mxu0 %v1437
        %v1522 = vpop.f32.mrb[0].mxu0
        %v1523 = vadd.f32 0.0, %v1522
        %v1524 = vpop.f32.mrb[0].mxu0
        %1525 = vmatprep.mubr.f32.mxu0 0.0
        %1526 = vmatmul.mubr.f32.gmra.mrb[0].mxu0 %v1439
        %v1527 = vpop.f32.mrb[0].mxu0
        %v1528 = vadd.f32 0.0, %v1527
        %v1529 = vpop.f32.mrb[0].mxu0
        %1530 = vmatprep.mubr.f32.mxu0 0.0
        %1531 = vmatmul.mubr.f32.gmra.mrb[0].mxu0 %v1441
        %v1532 = vpop.f32.mrb[0].mxu0
        %v1533 = vadd.f32 0.0, %v1532
        %v1534 = vpop.f32.mrb[0].mxu0
        %1535 = vmatprep.mubr.f32.mxu0 0.0
        %1536 = vmatmul.mubr.f32.gmra.mrb[0].mxu0 %v1443
        %v1537 = vpop.f32.mrb[0].mxu0
        %v1538 = vadd.f32 0.0, %v1537
        %v1539 = vpop.f32.mrb[0].mxu0
        %1540 = vmatprep.mubr.f32.mxu0 0.0
        %1541 = vmatmul.mubr.f32.gmra.mrb[0].mxu0 %v1445
        %v1542 = vpop.f32.mrb[0].mxu0
        %v1543 = vadd.f32 0.0, %v1542
        %v1544 = vpop.f32.mrb[0].mxu0
        %1545 = vmatprep.mubr.f32.mxu0 0.0
        %1546 = vmatmul.mubr.f32.gmra.mrb[0].mxu0 %v1447
        %v1547 = vpop.f32.mrb[0].mxu0
        %v1548 = vadd.f32 0.0, %v1547
        %v1549 = vpop.f32.mrb[0].mxu0
        %1550 = vmatprep.mubr.f32.mxu0 0.0
        %1551 = vmatmul.mubr.f32.gmra.mrb[0].mxu0 %v1449
        %v1552 = vpop.f32.mrb[0].mxu0
        %v1553 = vadd.f32 0.0, %v1552
        %v1554 = vpop.f32.mrb[0].mxu0
        %1555 = vdwg.mxu0
        %v1556 = vsel %vm344, %v1518, -inf
        %1557 = vmax.xlane.f32.xlu0 %v1556
        %v1558 = vpop.xlane.xlu0 %1557
        %v1559 = vsel %vm344, %v1523, -inf
        %1560 = vmax.xlane.f32.xlu0 %v1559
        %v1561 = vpop.xlane.xlu0 %1560
        %v1562 = vsel %vm344, %v1528, -inf
        %1563 = vmax.xlane.f32.xlu0 %v1562
        %v1564 = vpop.xlane.xlu0 %1563
        %v1565 = vsel %vm344, %v1533, -inf
        %1566 = vmax.xlane.f32.xlu0 %v1565
        %v1567 = vpop.xlane.xlu0 %1566
        %v1568 = vsel %vm344, %v1538, -inf
        %1569 = vmax.xlane.f32.xlu0 %v1568
        %v1570 = vpop.xlane.xlu0 %1569
        %v1571 = vsel %vm344, %v1543, -inf
        %1572 = vmax.xlane.f32.xlu0 %v1571
        %v1573 = vpop.xlane.xlu0 %1572
        %v1574 = vsel %vm344, %v1548, -inf
        %1575 = vmax.xlane.f32.xlu0 %v1574
        %v1576 = vpop.xlane.xlu0 %1575
        %v1577 = vsel %vm344, %v1553, -inf
        %1578 = vmax.xlane.f32.xlu0 %v1577
        %v1579 = vpop.xlane.xlu0 %1578
        %v1580 = vsub.f32 %v1518, %v1558
        %v1581 = vsub.f32 %v1523, %v1561
        %v1582 = vsub.f32 %v1528, %v1564
        %v1583 = vsub.f32 %v1533, %v1567
        %v1584 = vsub.f32 %v1538, %v1570
        %v1585 = vsub.f32 %v1543, %v1573
        %v1586 = vsub.f32 %v1548, %v1576
        %v1587 = vsub.f32 %v1553, %v1579
        %v1588 = vmul.f32 %v1580, 1.442695
        %v1589 = vpow.pop %v1588
        %v1590 = vmul.f32 %v1581, 1.442695
        %v1591 = vpow.pop %v1590
        %v1592 = vmul.f32 %v1582, 1.442695
        %v1593 = vpow.pop %v1592
        %v1594 = vmul.f32 %v1583, 1.442695
        %v1595 = vpow.pop %v1594
        %v1596 = vmul.f32 %v1584, 1.442695
        %v1597 = vpow.pop %v1596
        %v1598 = vmul.f32 %v1585, 1.442695
        %v1599 = vpow.pop %v1598
        %v1600 = vmul.f32 %v1586, 1.442695
        %v1601 = vpow.pop %v1600
        %v1602 = vmul.f32 %v1587, 1.442695
        %v1603 = vpow.pop %v1602
        %v1604 = vsel %vm344, %v1589, 0.0
        %1605 = vadd.xlane.f32.xlu0 %v1604
        %v1606 = vpop.xlane.xlu0 %1605
        %v1607 = vsel %vm344, %v1591, 0.0
        %1608 = vadd.xlane.f32.xlu0 %v1607
        %v1609 = vpop.xlane.xlu0 %1608
        %v1610 = vsel %vm344, %v1593, 0.0
        %1611 = vadd.xlane.f32.xlu0 %v1610
        %v1612 = vpop.xlane.xlu0 %1611
        %v1613 = vsel %vm344, %v1595, 0.0
        %1614 = vadd.xlane.f32.xlu0 %v1613
        %v1615 = vpop.xlane.xlu0 %1614
        %v1616 = vsel %vm344, %v1597, 0.0
        %1617 = vadd.xlane.f32.xlu0 %v1616
        %v1618 = vpop.xlane.xlu0 %1617
        %v1619 = vsel %vm344, %v1599, 0.0
        %1620 = vadd.xlane.f32.xlu0 %v1619
        %v1621 = vpop.xlane.xlu0 %1620
        %v1622 = vsel %vm344, %v1601, 0.0
        %1623 = vadd.xlane.f32.xlu0 %v1622
        %v1624 = vpop.xlane.xlu0 %1623
        %v1625 = vsel %vm344, %v1603, 0.0
        %1626 = vadd.xlane.f32.xlu0 %v1625
        %v1627 = vpop.xlane.xlu0 %1626
        %1636 = vrot.lane.b32.xlu0 %v1403, 112
        %v1637 = vpop.permute.xlu0 %1636
        %1638 = vrot.lane.b32.xlu0 %v1404, 112
        %v1639 = vpop.permute.xlu0 %1638
        %1640 = vrot.lane.b32.xlu0 %v1405, 112
        %v1641 = vpop.permute.xlu0 %1640
        %1642 = vrot.lane.b32.xlu0 %v1406, 112
        %v1643 = vpop.permute.xlu0 %1642
        %1644 = vrot.lane.b32.xlu0 %v1407, 112
        %v1645 = vpop.permute.xlu0 %1644
        %1646 = vrot.lane.b32.xlu0 %v1408, 112
        %v1647 = vpop.permute.xlu0 %1646
        %1648 = vrot.lane.b32.xlu0 %v1409, 112
        %v1649 = vpop.permute.xlu0 %1648
        %1650 = vrot.lane.b32.xlu0 %v1410, 112
        %v1651 = vpop.permute.xlu0 %1650
        %v1661 = vsel %vm344, %v1589, 0
        %v1664 = vsel %vm344, %v1591, 0
        %v1667 = vsel %vm344, %v1593, 0
        %v1670 = vsel %vm344, %v1595, 0
        %v1673 = vsel %vm344, %v1597, 0
        %v1676 = vsel %vm344, %v1599, 0
        %v1679 = vsel %vm344, %v1601, 0
        %v1682 = vsel %vm344, %v1603, 0
        %1684 = vmatprep.subr.mxu0 0.0
        %1685 = vmatpush1.msra.mxu0 %v1637
        %1686 = vmatprep.subr.mxu0 0.0
        %1687 = vmatpush1.msra.mxu0 %v1639
        %1688 = vmatprep.subr.mxu0 0.0
        %1689 = vmatpush1.msra.mxu0 %v1641
        %1690 = vmatprep.subr.mxu0 0.0
        %1691 = vmatpush1.msra.mxu0 %v1643
        %1692 = vmatprep.subr.mxu0 0.0
        %1693 = vmatpush1.msra.mxu0 %v1645
        %1694 = vmatprep.subr.mxu0 0.0
        %1695 = vmatpush1.msra.mxu0 %v1647
        %1696 = vmatprep.subr.mxu0 0.0
        %1697 = vmatpush1.msra.mxu0 %v1649
        %1698 = vmatprep.subr.mxu0 0.0
        %1699 = vmatpush1.msra.mxu0 %v1651
        %1700 = vmatprep.subr.mxu0 0.0
        %1701 = vmatpush1.msra.mxu0 0.0
        %1702 = vmatprep.subr.mxu0 0.0
        %1703 = vmatpush1.msra.mxu0 0.0
        %1704 = vmatprep.subr.mxu0 0.0
        %1705 = vmatpush1.msra.mxu0 0.0
        %1706 = vmatprep.subr.mxu0 0.0
        %1707 = vmatpush1.msra.mxu0 0.0
        %1708 = vmatprep.subr.mxu0 0.0
        %1709 = vmatpush1.msra.mxu0 0.0
        %1710 = vmatprep.subr.mxu0 0.0
        %1711 = vmatpush1.msra.mxu0 0.0
        %1712 = vmatprep.subr.mxu0 0.0
        %1713 = vmatpush1.msra.mxu0 0.0
        %1714 = vmatprep.subr.mxu0 0.0
        %1715 = vmatpush1.msra.mxu0 0.0
        %1716 = vmatprep.subr.mxu0 0.0
        %1717 = vmatpush1.msra.mxu0 0.0
        %1718 = vmatprep.subr.mxu0 0.0
        %1719 = vmatpush1.msra.mxu0 0.0
        %1720 = vmatprep.subr.mxu0 0.0
        %1721 = vmatpush1.msra.mxu0 0.0
        %1722 = vmatprep.subr.mxu0 0.0
        %1723 = vmatpush1.msra.mxu0 0.0
        %1724 = vmatprep.subr.mxu0 0.0
        %1725 = vmatpush1.msra.mxu0 0.0
        %1726 = vmatprep.subr.mxu0 0.0
        %1727 = vmatpush1.msra.mxu0 0.0
        %1728 = vmatprep.subr.mxu0 0.0
        %1729 = vmatpush1.msra.mxu0 0.0
        %1730 = vmatprep.subr.mxu0 0.0
        %1731 = vmatpush1.msra.mxu0 0.0
        %1732 = vmatprep.subr.mxu0 0.0
        %1733 = vmatpush1.msra.mxu0 0.0
        %1734 = vmatprep.subr.mxu0 0.0
        %1735 = vmatpush1.msra.mxu0 0.0
        %1736 = vmatprep.subr.mxu0 0.0
        %1737 = vmatpush1.msra.mxu0 0.0
        %1738 = vmatprep.subr.mxu0 0.0
        %1739 = vmatpush1.msra.mxu0 0.0
        %1740 = vmatprep.subr.mxu0 0.0
        %1741 = vmatpush1.msra.mxu0 0.0
        %1742 = vmatprep.subr.mxu0 0.0
        %1743 = vmatpush1.msra.mxu0 0.0
        %1744 = vmatprep.subr.mxu0 0.0
        %1745 = vmatpush1.msra.mxu0 0.0
        %1746 = vmatprep.subr.mxu0 0.0
        %1747 = vmatpush1.msra.mxu0 0.0
        %1748 = vmatprep.mubr.f32.mxu0 0.0
        %1749 = vmatmul.mubr.f32.gmra.mrb[0].mxu0 %v1661
        %v1750 = vpop.f32.mrb[0].mxu0
        %v1751 = vadd.f32 0.0, %v1750
        %v1752 = vpop.f32.mrb[0].mxu0
        %1753 = vmatprep.mubr.f32.mxu0 0.0
        %1754 = vmatmul.mubr.f32.gmra.mrb[0].mxu0 %v1664
        %v1755 = vpop.f32.mrb[0].mxu0
        %v1756 = vadd.f32 0.0, %v1755
        %v1757 = vpop.f32.mrb[0].mxu0
        %1758 = vmatprep.mubr.f32.mxu0 0.0
        %1759 = vmatmul.mubr.f32.gmra.mrb[0].mxu0 %v1667
        %v1760 = vpop.f32.mrb[0].mxu0
        %v1761 = vadd.f32 0.0, %v1760
        %v1762 = vpop.f32.mrb[0].mxu0
        %1763 = vmatprep.mubr.f32.mxu0 0.0
        %1764 = vmatmul.mubr.f32.gmra.mrb[0].mxu0 %v1670
        %v1765 = vpop.f32.mrb[0].mxu0
        %v1766 = vadd.f32 0.0, %v1765
        %v1767 = vpop.f32.mrb[0].mxu0
        %1768 = vmatprep.mubr.f32.mxu0 0.0
        %1769 = vmatmul.mubr.f32.gmra.mrb[0].mxu0 %v1673
        %v1770 = vpop.f32.mrb[0].mxu0
        %v1771 = vadd.f32 0.0, %v1770
        %v1772 = vpop.f32.mrb[0].mxu0
        %1773 = vmatprep.mubr.f32.mxu0 0.0
        %1774 = vmatmul.mubr.f32.gmra.mrb[0].mxu0 %v1676
        %v1775 = vpop.f32.mrb[0].mxu0
        %v1776 = vadd.f32 0.0, %v1775
        %v1777 = vpop.f32.mrb[0].mxu0
        %1778 = vmatprep.mubr.f32.mxu0 0.0
        %1779 = vmatmul.mubr.f32.gmra.mrb[0].mxu0 %v1679
        %v1780 = vpop.f32.mrb[0].mxu0
        %v1781 = vadd.f32 0.0, %v1780
        %v1782 = vpop.f32.mrb[0].mxu0
        %1783 = vmatprep.mubr.f32.mxu0 0.0
        %1784 = vmatmul.mubr.f32.gmra.mrb[0].mxu0 %v1682
        %v1785 = vpop.f32.mrb[0].mxu0
        %v1786 = vadd.f32 0.0, %v1785
        %v1787 = vpop.f32.mrb[0].mxu0
        %1788 = vdwg.mxu0
        %v1789 = vrcp.pop %v1606
        %v1790 = vrcp.pop %v1609
        %v1791 = vrcp.pop %v1612
        %v1792 = vrcp.pop %v1615
        %v1793 = vrcp.pop %v1618
        %v1794 = vrcp.pop %v1621
        %v1795 = vrcp.pop %v1624
        %v1796 = vrcp.pop %v1627
        %v1797 = vmul.f32 %v1751, %v1789
        %v1798 = vmul.f32 %v1756, %v1790
        %v1799 = vmul.f32 %v1761, %v1791
        %v1800 = vmul.f32 %v1766, %v1792
        %v1801 = vmul.f32 %v1771, %v1793
        %v1802 = vmul.f32 %v1776, %v1794
        %v1803 = vmul.f32 %v1781, %v1795
        %v1804 = vmul.f32 %v1786, %v1796
        %1813 = vrot.lane.b32.xlu0 %v1797, 16
        %v1814 = vpop.permute.xlu0 %1813
        %1815 = vrot.lane.b32.xlu0 %v1798, 16
        %v1816 = vpop.permute.xlu0 %1815
        %1817 = vrot.lane.b32.xlu0 %v1799, 16
        %v1818 = vpop.permute.xlu0 %1817
        %1819 = vrot.lane.b32.xlu0 %v1800, 16
        %v1820 = vpop.permute.xlu0 %1819
        %1821 = vrot.lane.b32.xlu0 %v1801, 16
        %v1822 = vpop.permute.xlu0 %1821
        %1823 = vrot.lane.b32.xlu0 %v1802, 16
        %v1824 = vpop.permute.xlu0 %1823
        %1825 = vrot.lane.b32.xlu0 %v1803, 16
        %v1826 = vpop.permute.xlu0 %1825
        %1827 = vrot.lane.b32.xlu0 %v1804, 16
        %v1828 = vpop.permute.xlu0 %1827
        %vm1837 = vcmask 195712
        %1838 = vst.msk [vmem:[#allocation4] sm:$0xff] %vm1837, %v1814
        %1839 = vst.msk [vmem:[#allocation4 + $0x8] sm:$0xff] %vm1837, %v1816
        %1840 = vst.msk [vmem:[#allocation4 + $0x10] sm:$0xff] %vm1837, %v1818
        %1841 = vst.msk [vmem:[#allocation4 + $0x18] sm:$0xff] %vm1837, %v1820
        %1842 = vst.msk [vmem:[#allocation4 + $0x20] sm:$0xff] %vm1837, %v1822
        %1843 = vst.msk [vmem:[#allocation4 + $0x28] sm:$0xff] %vm1837, %v1824
        %1844 = vst.msk [vmem:[#allocation4 + $0x30] sm:$0xff] %vm1837, %v1826
        %1845 = vst.msk [vmem:[#allocation4 + $0x38] sm:$0xff] %vm1837, %v1828
        %v1846 = vld [vmem:[#allocation2] sm:$0xff]
        %v1847 = vld [vmem:[#allocation2 + $0x10] sm:$0xff]
        %v1848 = vld [vmem:[#allocation2 + $0x20] sm:$0xff]
        %v1849 = vld [vmem:[#allocation2 + $0x30] sm:$0xff]
        %v1850 = vld [vmem:[#allocation2 + $0x40] sm:$0xff]
        %v1851 = vld [vmem:[#allocation2 + $0x50] sm:$0xff]
        %v1852 = vld [vmem:[#allocation2 + $0x60] sm:$0xff]
        %v1853 = vld [vmem:[#allocation2 + $0x70] sm:$0xff]
        %v1854 = vld [vmem:[#allocation3 + $0x18] sm:$0xff]
        %v1855 = vld [vmem:[#allocation2 + $0x8] sm:$0xff]
        %v1856 = vld [vmem:[#allocation2 + $0x18] sm:$0xff]
        %v1857 = vld [vmem:[#allocation2 + $0x28] sm:$0xff]
        %v1858 = vld [vmem:[#allocation2 + $0x38] sm:$0xff]
        %v1859 = vld [vmem:[#allocation2 + $0x48] sm:$0xff]
        %v1860 = vld [vmem:[#allocation2 + $0x58] sm:$0xff]
        %v1861 = vld [vmem:[#allocation2 + $0x68] sm:$0xff]
        %v1862 = vld [vmem:[#allocation2 + $0x78] sm:$0xff]
        %1871 = vrot.lane.b32.xlu0 %v1846, 104
        %v1872 = vpop.permute.xlu0 %1871
        %1873 = vrot.lane.b32.xlu0 %v1847, 104
        %v1874 = vpop.permute.xlu0 %1873
        %1875 = vrot.lane.b32.xlu0 %v1848, 104
        %v1876 = vpop.permute.xlu0 %1875
        %1877 = vrot.lane.b32.xlu0 %v1849, 104
        %v1878 = vpop.permute.xlu0 %1877
        %1879 = vrot.lane.b32.xlu0 %v1850, 104
        %v1880 = vpop.permute.xlu0 %1879
        %1881 = vrot.lane.b32.xlu0 %v1851, 104
        %v1882 = vpop.permute.xlu0 %1881
        %1883 = vrot.lane.b32.xlu0 %v1852, 104
        %v1884 = vpop.permute.xlu0 %1883
        %1885 = vrot.lane.b32.xlu0 %v1853, 104
        %v1886 = vpop.permute.xlu0 %1885
        %v1887 = vsel %vm587, %v1872, 0
        %v1889 = vsel %vm587, %v1874, 0
        %v1891 = vsel %vm587, %v1876, 0
        %v1893 = vsel %vm587, %v1878, 0
        %v1895 = vsel %vm587, %v1880, 0
        %v1897 = vsel %vm587, %v1882, 0
        %v1899 = vsel %vm587, %v1884, 0
        %v1901 = vsel %vm587, %v1886, 0
        %1903 = vmatprep.subr.mxu0 0.0
        %1904 = vmatpush1.msra.mxu0 %v1854
        %1905 = vmatprep.subr.mxu0 0.0
        %1906 = vmatpush1.msra.mxu0 0.0
        %1907 = vmatprep.subr.mxu0 0.0
        %1908 = vmatpush1.msra.mxu0 0.0
        %1909 = vmatprep.subr.mxu0 0.0
        %1910 = vmatpush1.msra.mxu0 0.0
        %1911 = vmatprep.subr.mxu0 0.0
        %1912 = vmatpush1.msra.mxu0 0.0
        %1913 = vmatprep.subr.mxu0 0.0
        %1914 = vmatpush1.msra.mxu0 0.0
        %1915 = vmatprep.subr.mxu0 0.0
        %1916 = vmatpush1.msra.mxu0 0.0
        %1917 = vmatprep.subr.mxu0 0.0
        %1918 = vmatpush1.msra.mxu0 0.0
        %1919 = vmatprep.subr.mxu0 0.0
        %1920 = vmatpush1.msra.mxu0 0.0
        %1921 = vmatprep.subr.mxu0 0.0
        %1922 = vmatpush1.msra.mxu0 0.0
        %1923 = vmatprep.subr.mxu0 0.0
        %1924 = vmatpush1.msra.mxu0 0.0
        %1925 = vmatprep.subr.mxu0 0.0
        %1926 = vmatpush1.msra.mxu0 0.0
        %1927 = vmatprep.subr.mxu0 0.0
        %1928 = vmatpush1.msra.mxu0 0.0
        %1929 = vmatprep.subr.mxu0 0.0
        %1930 = vmatpush1.msra.mxu0 0.0
        %1931 = vmatprep.subr.mxu0 0.0
        %1932 = vmatpush1.msra.mxu0 0.0
        %1933 = vmatprep.subr.mxu0 0.0
        %1934 = vmatpush1.msra.mxu0 0.0
        %1935 = vmatprep.subr.mxu0 0.0
        %1936 = vmatpush1.msra.mxu0 0.0
        %1937 = vmatprep.subr.mxu0 0.0
        %1938 = vmatpush1.msra.mxu0 0.0
        %1939 = vmatprep.subr.mxu0 0.0
        %1940 = vmatpush1.msra.mxu0 0.0
        %1941 = vmatprep.subr.mxu0 0.0
        %1942 = vmatpush1.msra.mxu0 0.0
        %1943 = vmatprep.subr.mxu0 0.0
        %1944 = vmatpush1.msra.mxu0 0.0
        %1945 = vmatprep.subr.mxu0 0.0
        %1946 = vmatpush1.msra.mxu0 0.0
        %1947 = vmatprep.subr.mxu0 0.0
        %1948 = vmatpush1.msra.mxu0 0.0
        %1949 = vmatprep.subr.mxu0 0.0
        %1950 = vmatpush1.msra.mxu0 0.0
        %1951 = vmatprep.subr.mxu0 0.0
        %1952 = vmatpush1.msra.mxu0 0.0
        %1953 = vmatprep.subr.mxu0 0.0
        %1954 = vmatpush1.msra.mxu0 0.0
        %1955 = vmatprep.subr.mxu0 0.0
        %1956 = vmatpush1.msra.mxu0 0.0
        %1957 = vmatprep.subr.mxu0 0.0
        %1958 = vmatpush1.msra.mxu0 0.0
        %1959 = vmatprep.subr.mxu0 0.0
        %1960 = vmatpush1.msra.mxu0 0.0
        %1961 = vmatprep.subr.mxu0 0.0
        %1962 = vmatpush1.msra.mxu0 0.0
        %1963 = vmatprep.subr.mxu0 0.0
        %1964 = vmatpush1.msra.mxu0 0.0
        %1965 = vmatprep.subr.mxu0 0.0
        %1966 = vmatpush1.msra.mxu0 0.0
        %1967 = vmatprep.mubr.f32.mxu0 0.0
        %1968 = vmatmul.mubr.f32.gmra.mrb[0].mxu0 %v1887
        %v1969 = vpop.f32.mrb[0].mxu0
        %v1970 = vadd.f32 0.0, %v1969
        %v1971 = vpop.f32.mrb[0].mxu0
        %1972 = vmatprep.mubr.f32.mxu0 0.0
        %1973 = vmatmul.mubr.f32.gmra.mrb[0].mxu0 %v1889
        %v1974 = vpop.f32.mrb[0].mxu0
        %v1975 = vadd.f32 0.0, %v1974
        %v1976 = vpop.f32.mrb[0].mxu0
        %1977 = vmatprep.mubr.f32.mxu0 0.0
        %1978 = vmatmul.mubr.f32.gmra.mrb[0].mxu0 %v1891
        %v1979 = vpop.f32.mrb[0].mxu0
        %v1980 = vadd.f32 0.0, %v1979
        %v1981 = vpop.f32.mrb[0].mxu0
        %1982 = vmatprep.mubr.f32.mxu0 0.0
        %1983 = vmatmul.mubr.f32.gmra.mrb[0].mxu0 %v1893
        %v1984 = vpop.f32.mrb[0].mxu0
        %v1985 = vadd.f32 0.0, %v1984
        %v1986 = vpop.f32.mrb[0].mxu0
        %1987 = vmatprep.mubr.f32.mxu0 0.0
        %1988 = vmatmul.mubr.f32.gmra.mrb[0].mxu0 %v1895
        %v1989 = vpop.f32.mrb[0].mxu0
        %v1990 = vadd.f32 0.0, %v1989
        %v1991 = vpop.f32.mrb[0].mxu0
        %1992 = vmatprep.mubr.f32.mxu0 0.0
        %1993 = vmatmul.mubr.f32.gmra.mrb[0].mxu0 %v1897
        %v1994 = vpop.f32.mrb[0].mxu0
        %v1995 = vadd.f32 0.0, %v1994
        %v1996 = vpop.f32.mrb[0].mxu0
        %1997 = vmatprep.mubr.f32.mxu0 0.0
        %1998 = vmatmul.mubr.f32.gmra.mrb[0].mxu0 %v1899
        %v1999 = vpop.f32.mrb[0].mxu0
        %v2000 = vadd.f32 0.0, %v1999
        %v2001 = vpop.f32.mrb[0].mxu0
        %2002 = vmatprep.mubr.f32.mxu0 0.0
        %2003 = vmatmul.mubr.f32.gmra.mrb[0].mxu0 %v1901
        %v2004 = vpop.f32.mrb[0].mxu0
        %v2005 = vadd.f32 0.0, %v2004
        %v2006 = vpop.f32.mrb[0].mxu0
        %2007 = vdwg.mxu0
        %v2008 = vsel %vm344, %v1970, -inf
        %2009 = vmax.xlane.f32.xlu0 %v2008
        %v2010 = vpop.xlane.xlu0 %2009
        %v2011 = vsel %vm344, %v1975, -inf
        %2012 = vmax.xlane.f32.xlu0 %v2011
        %v2013 = vpop.xlane.xlu0 %2012
        %v2014 = vsel %vm344, %v1980, -inf
        %2015 = vmax.xlane.f32.xlu0 %v2014
        %v2016 = vpop.xlane.xlu0 %2015
        %v2017 = vsel %vm344, %v1985, -inf
        %2018 = vmax.xlane.f32.xlu0 %v2017
        %v2019 = vpop.xlane.xlu0 %2018
        %v2020 = vsel %vm344, %v1990, -inf
        %2021 = vmax.xlane.f32.xlu0 %v2020
        %v2022 = vpop.xlane.xlu0 %2021
        %v2023 = vsel %vm344, %v1995, -inf
        %2024 = vmax.xlane.f32.xlu0 %v2023
        %v2025 = vpop.xlane.xlu0 %2024
        %v2026 = vsel %vm344, %v2000, -inf
        %2027 = vmax.xlane.f32.xlu0 %v2026
        %v2028 = vpop.xlane.xlu0 %2027
        %v2029 = vsel %vm344, %v2005, -inf
        %2030 = vmax.xlane.f32.xlu0 %v2029
        %v2031 = vpop.xlane.xlu0 %2030
        %v2032 = vsub.f32 %v1970, %v2010
        %v2033 = vsub.f32 %v1975, %v2013
        %v2034 = vsub.f32 %v1980, %v2016
        %v2035 = vsub.f32 %v1985, %v2019
        %v2036 = vsub.f32 %v1990, %v2022
        %v2037 = vsub.f32 %v1995, %v2025
        %v2038 = vsub.f32 %v2000, %v2028
        %v2039 = vsub.f32 %v2005, %v2031
        %v2040 = vmul.f32 %v2032, 1.442695
        %v2041 = vpow.pop %v2040
        %v2042 = vmul.f32 %v2033, 1.442695
        %v2043 = vpow.pop %v2042
        %v2044 = vmul.f32 %v2034, 1.442695
        %v2045 = vpow.pop %v2044
        %v2046 = vmul.f32 %v2035, 1.442695
        %v2047 = vpow.pop %v2046
        %v2048 = vmul.f32 %v2036, 1.442695
        %v2049 = vpow.pop %v2048
        %v2050 = vmul.f32 %v2037, 1.442695
        %v2051 = vpow.pop %v2050
        %v2052 = vmul.f32 %v2038, 1.442695
        %v2053 = vpow.pop %v2052
        %v2054 = vmul.f32 %v2039, 1.442695
        %v2055 = vpow.pop %v2054
        %v2056 = vsel %vm344, %v2041, 0.0
        %2057 = vadd.xlane.f32.xlu0 %v2056
        %v2058 = vpop.xlane.xlu0 %2057
        %v2059 = vsel %vm344, %v2043, 0.0
        %2060 = vadd.xlane.f32.xlu0 %v2059
        %v2061 = vpop.xlane.xlu0 %2060
        %v2062 = vsel %vm344, %v2045, 0.0
        %2063 = vadd.xlane.f32.xlu0 %v2062
        %v2064 = vpop.xlane.xlu0 %2063
        %v2065 = vsel %vm344, %v2047, 0.0
        %2066 = vadd.xlane.f32.xlu0 %v2065
        %v2067 = vpop.xlane.xlu0 %2066
        %v2068 = vsel %vm344, %v2049, 0.0
        %2069 = vadd.xlane.f32.xlu0 %v2068
        %v2070 = vpop.xlane.xlu0 %2069
        %v2071 = vsel %vm344, %v2051, 0.0
        %2072 = vadd.xlane.f32.xlu0 %v2071
        %v2073 = vpop.xlane.xlu0 %2072
        %v2074 = vsel %vm344, %v2053, 0.0
        %2075 = vadd.xlane.f32.xlu0 %v2074
        %v2076 = vpop.xlane.xlu0 %2075
        %v2077 = vsel %vm344, %v2055, 0.0
        %2078 = vadd.xlane.f32.xlu0 %v2077
        %v2079 = vpop.xlane.xlu0 %2078
        %2088 = vrot.lane.b32.xlu0 %v1855, 104
        %v2089 = vpop.permute.xlu0 %2088
        %2090 = vrot.lane.b32.xlu0 %v1856, 104
        %v2091 = vpop.permute.xlu0 %2090
        %2092 = vrot.lane.b32.xlu0 %v1857, 104
        %v2093 = vpop.permute.xlu0 %2092
        %2094 = vrot.lane.b32.xlu0 %v1858, 104
        %v2095 = vpop.permute.xlu0 %2094
        %2096 = vrot.lane.b32.xlu0 %v1859, 104
        %v2097 = vpop.permute.xlu0 %2096
        %2098 = vrot.lane.b32.xlu0 %v1860, 104
        %v2099 = vpop.permute.xlu0 %2098
        %2100 = vrot.lane.b32.xlu0 %v1861, 104
        %v2101 = vpop.permute.xlu0 %2100
        %2102 = vrot.lane.b32.xlu0 %v1862, 104
        %v2103 = vpop.permute.xlu0 %2102
        %v2113 = vsel %vm344, %v2041, 0
        %v2116 = vsel %vm344, %v2043, 0
        %v2119 = vsel %vm344, %v2045, 0
        %v2122 = vsel %vm344, %v2047, 0
        %v2125 = vsel %vm344, %v2049, 0
        %v2128 = vsel %vm344, %v2051, 0
        %v2131 = vsel %vm344, %v2053, 0
        %v2134 = vsel %vm344, %v2055, 0
        %2136 = vmatprep.subr.mxu0 0.0
        %2137 = vmatpush1.msra.mxu0 %v2089
        %2138 = vmatprep.subr.mxu0 0.0
        %2139 = vmatpush1.msra.mxu0 %v2091
        %2140 = vmatprep.subr.mxu0 0.0
        %2141 = vmatpush1.msra.mxu0 %v2093
        %2142 = vmatprep.subr.mxu0 0.0
        %2143 = vmatpush1.msra.mxu0 %v2095
        %2144 = vmatprep.subr.mxu0 0.0
        %2145 = vmatpush1.msra.mxu0 %v2097
        %2146 = vmatprep.subr.mxu0 0.0
        %2147 = vmatpush1.msra.mxu0 %v2099
        %2148 = vmatprep.subr.mxu0 0.0
        %2149 = vmatpush1.msra.mxu0 %v2101
        %2150 = vmatprep.subr.mxu0 0.0
        %2151 = vmatpush1.msra.mxu0 %v2103
        %2152 = vmatprep.subr.mxu0 0.0
        %2153 = vmatpush1.msra.mxu0 0.0
        %2154 = vmatprep.subr.mxu0 0.0
        %2155 = vmatpush1.msra.mxu0 0.0
        %2156 = vmatprep.subr.mxu0 0.0
        %2157 = vmatpush1.msra.mxu0 0.0
        %2158 = vmatprep.subr.mxu0 0.0
        %2159 = vmatpush1.msra.mxu0 0.0
        %2160 = vmatprep.subr.mxu0 0.0
        %2161 = vmatpush1.msra.mxu0 0.0
        %2162 = vmatprep.subr.mxu0 0.0
        %2163 = vmatpush1.msra.mxu0 0.0
        %2164 = vmatprep.subr.mxu0 0.0
        %2165 = vmatpush1.msra.mxu0 0.0
        %2166 = vmatprep.subr.mxu0 0.0
        %2167 = vmatpush1.msra.mxu0 0.0
        %2168 = vmatprep.subr.mxu0 0.0
        %2169 = vmatpush1.msra.mxu0 0.0
        %2170 = vmatprep.subr.mxu0 0.0
        %2171 = vmatpush1.msra.mxu0 0.0
        %2172 = vmatprep.subr.mxu0 0.0
        %2173 = vmatpush1.msra.mxu0 0.0
        %2174 = vmatprep.subr.mxu0 0.0
        %2175 = vmatpush1.msra.mxu0 0.0
        %2176 = vmatprep.subr.mxu0 0.0
        %2177 = vmatpush1.msra.mxu0 0.0
        %2178 = vmatprep.subr.mxu0 0.0
        %2179 = vmatpush1.msra.mxu0 0.0
        %2180 = vmatprep.subr.mxu0 0.0
        %2181 = vmatpush1.msra.mxu0 0.0
        %2182 = vmatprep.subr.mxu0 0.0
        %2183 = vmatpush1.msra.mxu0 0.0
        %2184 = vmatprep.subr.mxu0 0.0
        %2185 = vmatpush1.msra.mxu0 0.0
        %2186 = vmatprep.subr.mxu0 0.0
        %2187 = vmatpush1.msra.mxu0 0.0
        %2188 = vmatprep.subr.mxu0 0.0
        %2189 = vmatpush1.msra.mxu0 0.0
        %2190 = vmatprep.subr.mxu0 0.0
        %2191 = vmatpush1.msra.mxu0 0.0
        %2192 = vmatprep.subr.mxu0 0.0
        %2193 = vmatpush1.msra.mxu0 0.0
        %2194 = vmatprep.subr.mxu0 0.0
        %2195 = vmatpush1.msra.mxu0 0.0
        %2196 = vmatprep.subr.mxu0 0.0
        %2197 = vmatpush1.msra.mxu0 0.0
        %2198 = vmatprep.subr.mxu0 0.0
        %2199 = vmatpush1.msra.mxu0 0.0
        %2200 = vmatprep.mubr.f32.mxu0 0.0
        %2201 = vmatmul.mubr.f32.gmra.mrb[0].mxu0 %v2113
        %v2202 = vpop.f32.mrb[0].mxu0
        %v2203 = vadd.f32 0.0, %v2202
        %v2204 = vpop.f32.mrb[0].mxu0
        %2205 = vmatprep.mubr.f32.mxu0 0.0
        %2206 = vmatmul.mubr.f32.gmra.mrb[0].mxu0 %v2116
        %v2207 = vpop.f32.mrb[0].mxu0
        %v2208 = vadd.f32 0.0, %v2207
        %v2209 = vpop.f32.mrb[0].mxu0
        %2210 = vmatprep.mubr.f32.mxu0 0.0
        %2211 = vmatmul.mubr.f32.gmra.mrb[0].mxu0 %v2119
        %v2212 = vpop.f32.mrb[0].mxu0
        %v2213 = vadd.f32 0.0, %v2212
        %v2214 = vpop.f32.mrb[0].mxu0
        %2215 = vmatprep.mubr.f32.mxu0 0.0
        %2216 = vmatmul.mubr.f32.gmra.mrb[0].mxu0 %v2122
        %v2217 = vpop.f32.mrb[0].mxu0
        %v2218 = vadd.f32 0.0, %v2217
        %v2219 = vpop.f32.mrb[0].mxu0
        %2220 = vmatprep.mubr.f32.mxu0 0.0
        %2221 = vmatmul.mubr.f32.gmra.mrb[0].mxu0 %v2125
        %v2222 = vpop.f32.mrb[0].mxu0
        %v2223 = vadd.f32 0.0, %v2222
        %v2224 = vpop.f32.mrb[0].mxu0
        %2225 = vmatprep.mubr.f32.mxu0 0.0
        %2226 = vmatmul.mubr.f32.gmra.mrb[0].mxu0 %v2128
        %v2227 = vpop.f32.mrb[0].mxu0
        %v2228 = vadd.f32 0.0, %v2227
        %v2229 = vpop.f32.mrb[0].mxu0
        %2230 = vmatprep.mubr.f32.mxu0 0.0
        %2231 = vmatmul.mubr.f32.gmra.mrb[0].mxu0 %v2131
        %v2232 = vpop.f32.mrb[0].mxu0
        %v2233 = vadd.f32 0.0, %v2232
        %v2234 = vpop.f32.mrb[0].mxu0
        %2235 = vmatprep.mubr.f32.mxu0 0.0
        %2236 = vmatmul.mubr.f32.gmra.mrb[0].mxu0 %v2134
        %v2237 = vpop.f32.mrb[0].mxu0
        %v2238 = vadd.f32 0.0, %v2237
        %v2239 = vpop.f32.mrb[0].mxu0
        %2240 = vdwg.mxu0
        %v2241 = vrcp.pop %v2058
        %v2242 = vrcp.pop %v2061
        %v2243 = vrcp.pop %v2064
        %v2244 = vrcp.pop %v2067
        %v2245 = vrcp.pop %v2070
        %v2246 = vrcp.pop %v2073
        %v2247 = vrcp.pop %v2076
        %v2248 = vrcp.pop %v2079
        %v2249 = vmul.f32 %v2203, %v2241
        %v2250 = vmul.f32 %v2208, %v2242
        %v2251 = vmul.f32 %v2213, %v2243
        %v2252 = vmul.f32 %v2218, %v2244
        %v2253 = vmul.f32 %v2223, %v2245
        %v2254 = vmul.f32 %v2228, %v2246
        %v2255 = vmul.f32 %v2233, %v2247
        %v2256 = vmul.f32 %v2238, %v2248
        %2265 = vrot.lane.b32.xlu0 %v2249, 24
        %v2266 = vpop.permute.xlu0 %2265
        %2267 = vrot.lane.b32.xlu0 %v2250, 24
        %v2268 = vpop.permute.xlu0 %2267
        %2269 = vrot.lane.b32.xlu0 %v2251, 24
        %v2270 = vpop.permute.xlu0 %2269
        %2271 = vrot.lane.b32.xlu0 %v2252, 24
        %v2272 = vpop.permute.xlu0 %2271
        %2273 = vrot.lane.b32.xlu0 %v2253, 24
        %v2274 = vpop.permute.xlu0 %2273
        %2275 = vrot.lane.b32.xlu0 %v2254, 24
        %v2276 = vpop.permute.xlu0 %2275
        %2277 = vrot.lane.b32.xlu0 %v2255, 24
        %v2278 = vpop.permute.xlu0 %2277
        %2279 = vrot.lane.b32.xlu0 %v2256, 24
        %v2280 = vpop.permute.xlu0 %2279
        %vm2289 = vcmask 261312
        %2290 = vst.msk [vmem:[#allocation4] sm:$0xff] %vm2289, %v2266
        %2291 = vst.msk [vmem:[#allocation4 + $0x8] sm:$0xff] %vm2289, %v2268
        %2292 = vst.msk [vmem:[#allocation4 + $0x10] sm:$0xff] %vm2289, %v2270
        %2293 = vst.msk [vmem:[#allocation4 + $0x18] sm:$0xff] %vm2289, %v2272
        %2294 = vst.msk [vmem:[#allocation4 + $0x20] sm:$0xff] %vm2289, %v2274
        %2295 = vst.msk [vmem:[#allocation4 + $0x28] sm:$0xff] %vm2289, %v2276
        %2296 = vst.msk [vmem:[#allocation4 + $0x30] sm:$0xff] %vm2289, %v2278
        %2297 = vst.msk [vmem:[#allocation4 + $0x38] sm:$0xff] %vm2289, %v2280
        %v2298 = vld [vmem:[#allocation2] sm:$0xff]
        %v2299 = vld [vmem:[#allocation2 + $0x10] sm:$0xff]
        %v2300 = vld [vmem:[#allocation2 + $0x20] sm:$0xff]
        %v2301 = vld [vmem:[#allocation2 + $0x30] sm:$0xff]
        %v2302 = vld [vmem:[#allocation2 + $0x40] sm:$0xff]
        %v2303 = vld [vmem:[#allocation2 + $0x50] sm:$0xff]
        %v2304 = vld [vmem:[#allocation2 + $0x60] sm:$0xff]
        %v2305 = vld [vmem:[#allocation2 + $0x70] sm:$0xff]
        %v2306 = vld [vmem:[#allocation3 + $0x20] sm:$0xff]
        %v2307 = vld [vmem:[#allocation2 + $0x8] sm:$0xff]
        %v2308 = vld [vmem:[#allocation2 + $0x18] sm:$0xff]
        %v2309 = vld [vmem:[#allocation2 + $0x28] sm:$0xff]
        %v2310 = vld [vmem:[#allocation2 + $0x38] sm:$0xff]
        %v2311 = vld [vmem:[#allocation2 + $0x48] sm:$0xff]
        %v2312 = vld [vmem:[#allocation2 + $0x58] sm:$0xff]
        %v2313 = vld [vmem:[#allocation2 + $0x68] sm:$0xff]
        %v2314 = vld [vmem:[#allocation2 + $0x78] sm:$0xff]
        %2323 = vrot.lane.b32.xlu0 %v2298, 96
        %v2324 = vpop.permute.xlu0 %2323
        %2325 = vrot.lane.b32.xlu0 %v2299, 96
        %v2326 = vpop.permute.xlu0 %2325
        %2327 = vrot.lane.b32.xlu0 %v2300, 96
        %v2328 = vpop.permute.xlu0 %2327
        %2329 = vrot.lane.b32.xlu0 %v2301, 96
        %v2330 = vpop.permute.xlu0 %2329
        %2331 = vrot.lane.b32.xlu0 %v2302, 96
        %v2332 = vpop.permute.xlu0 %2331
        %2333 = vrot.lane.b32.xlu0 %v2303, 96
        %v2334 = vpop.permute.xlu0 %2333
        %2335 = vrot.lane.b32.xlu0 %v2304, 96
        %v2336 = vpop.permute.xlu0 %2335
        %2337 = vrot.lane.b32.xlu0 %v2305, 96
        %v2338 = vpop.permute.xlu0 %2337
        %v2339 = vsel %vm587, %v2324, 0
        %v2341 = vsel %vm587, %v2326, 0
        %v2343 = vsel %vm587, %v2328, 0
        %v2345 = vsel %vm587, %v2330, 0
        %v2347 = vsel %vm587, %v2332, 0
        %v2349 = vsel %vm587, %v2334, 0
        %v2351 = vsel %vm587, %v2336, 0
        %v2353 = vsel %vm587, %v2338, 0
        %2355 = vmatprep.subr.mxu0 0.0
        %2356 = vmatpush1.msra.mxu0 %v2306
        %2357 = vmatprep.subr.mxu0 0.0
        %2358 = vmatpush1.msra.mxu0 0.0
        %2359 = vmatprep.subr.mxu0 0.0
        %2360 = vmatpush1.msra.mxu0 0.0
        %2361 = vmatprep.subr.mxu0 0.0
        %2362 = vmatpush1.msra.mxu0 0.0
        %2363 = vmatprep.subr.mxu0 0.0
        %2364 = vmatpush1.msra.mxu0 0.0
        %2365 = vmatprep.subr.mxu0 0.0
        %2366 = vmatpush1.msra.mxu0 0.0
        %2367 = vmatprep.subr.mxu0 0.0
        %2368 = vmatpush1.msra.mxu0 0.0
        %2369 = vmatprep.subr.mxu0 0.0
        %2370 = vmatpush1.msra.mxu0 0.0
        %2371 = vmatprep.subr.mxu0 0.0
        %2372 = vmatpush1.msra.mxu0 0.0
        %2373 = vmatprep.subr.mxu0 0.0
        %2374 = vmatpush1.msra.mxu0 0.0
        %2375 = vmatprep.subr.mxu0 0.0
        %2376 = vmatpush1.msra.mxu0 0.0
        %2377 = vmatprep.subr.mxu0 0.0
        %2378 = vmatpush1.msra.mxu0 0.0
        %2379 = vmatprep.subr.mxu0 0.0
        %2380 = vmatpush1.msra.mxu0 0.0
        %2381 = vmatprep.subr.mxu0 0.0
        %2382 = vmatpush1.msra.mxu0 0.0
        %2383 = vmatprep.subr.mxu0 0.0
        %2384 = vmatpush1.msra.mxu0 0.0
        %2385 = vmatprep.subr.mxu0 0.0
        %2386 = vmatpush1.msra.mxu0 0.0
        %2387 = vmatprep.subr.mxu0 0.0
        %2388 = vmatpush1.msra.mxu0 0.0
        %2389 = vmatprep.subr.mxu0 0.0
        %2390 = vmatpush1.msra.mxu0 0.0
        %2391 = vmatprep.subr.mxu0 0.0
        %2392 = vmatpush1.msra.mxu0 0.0
        %2393 = vmatprep.subr.mxu0 0.0
        %2394 = vmatpush1.msra.mxu0 0.0
        %2395 = vmatprep.subr.mxu0 0.0
        %2396 = vmatpush1.msra.mxu0 0.0
        %2397 = vmatprep.subr.mxu0 0.0
        %2398 = vmatpush1.msra.mxu0 0.0
        %2399 = vmatprep.subr.mxu0 0.0
        %2400 = vmatpush1.msra.mxu0 0.0
        %2401 = vmatprep.subr.mxu0 0.0
        %2402 = vmatpush1.msra.mxu0 0.0
        %2403 = vmatprep.subr.mxu0 0.0
        %2404 = vmatpush1.msra.mxu0 0.0
        %2405 = vmatprep.subr.mxu0 0.0
        %2406 = vmatpush1.msra.mxu0 0.0
        %2407 = vmatprep.subr.mxu0 0.0
        %2408 = vmatpush1.msra.mxu0 0.0
        %2409 = vmatprep.subr.mxu0 0.0
        %2410 = vmatpush1.msra.mxu0 0.0
        %2411 = vmatprep.subr.mxu0 0.0
        %2412 = vmatpush1.msra.mxu0 0.0
        %2413 = vmatprep.subr.mxu0 0.0
        %2414 = vmatpush1.msra.mxu0 0.0
        %2415 = vmatprep.subr.mxu0 0.0
        %2416 = vmatpush1.msra.mxu0 0.0
        %2417 = vmatprep.subr.mxu0 0.0
        %2418 = vmatpush1.msra.mxu0 0.0
        %2419 = vmatprep.mubr.f32.mxu0 0.0
        %2420 = vmatmul.mubr.f32.gmra.mrb[0].mxu0 %v2339
        %v2421 = vpop.f32.mrb[0].mxu0
        %v2422 = vadd.f32 0.0, %v2421
        %v2423 = vpop.f32.mrb[0].mxu0
        %2424 = vmatprep.mubr.f32.mxu0 0.0
        %2425 = vmatmul.mubr.f32.gmra.mrb[0].mxu0 %v2341
        %v2426 = vpop.f32.mrb[0].mxu0
        %v2427 = vadd.f32 0.0, %v2426
        %v2428 = vpop.f32.mrb[0].mxu0
        %2429 = vmatprep.mubr.f32.mxu0 0.0
        %2430 = vmatmul.mubr.f32.gmra.mrb[0].mxu0 %v2343
        %v2431 = vpop.f32.mrb[0].mxu0
        %v2432 = vadd.f32 0.0, %v2431
        %v2433 = vpop.f32.mrb[0].mxu0
        %2434 = vmatprep.mubr.f32.mxu0 0.0
        %2435 = vmatmul.mubr.f32.gmra.mrb[0].mxu0 %v2345
        %v2436 = vpop.f32.mrb[0].mxu0
        %v2437 = vadd.f32 0.0, %v2436
        %v2438 = vpop.f32.mrb[0].mxu0
        %2439 = vmatprep.mubr.f32.mxu0 0.0
        %2440 = vmatmul.mubr.f32.gmra.mrb[0].mxu0 %v2347
        %v2441 = vpop.f32.mrb[0].mxu0
        %v2442 = vadd.f32 0.0, %v2441
        %v2443 = vpop.f32.mrb[0].mxu0
        %2444 = vmatprep.mubr.f32.mxu0 0.0
        %2445 = vmatmul.mubr.f32.gmra.mrb[0].mxu0 %v2349
        %v2446 = vpop.f32.mrb[0].mxu0
        %v2447 = vadd.f32 0.0, %v2446
        %v2448 = vpop.f32.mrb[0].mxu0
        %2449 = vmatprep.mubr.f32.mxu0 0.0
        %2450 = vmatmul.mubr.f32.gmra.mrb[0].mxu0 %v2351
        %v2451 = vpop.f32.mrb[0].mxu0
        %v2452 = vadd.f32 0.0, %v2451
        %v2453 = vpop.f32.mrb[0].mxu0
        %2454 = vmatprep.mubr.f32.mxu0 0.0
        %2455 = vmatmul.mubr.f32.gmra.mrb[0].mxu0 %v2353
        %v2456 = vpop.f32.mrb[0].mxu0
        %v2457 = vadd.f32 0.0, %v2456
        %v2458 = vpop.f32.mrb[0].mxu0
        %2459 = vdwg.mxu0
        %v2460 = vsel %vm344, %v2422, -inf
        %2461 = vmax.xlane.f32.xlu0 %v2460
        %v2462 = vpop.xlane.xlu0 %2461
        %v2463 = vsel %vm344, %v2427, -inf
        %2464 = vmax.xlane.f32.xlu0 %v2463
        %v2465 = vpop.xlane.xlu0 %2464
        %v2466 = vsel %vm344, %v2432, -inf
        %2467 = vmax.xlane.f32.xlu0 %v2466
        %v2468 = vpop.xlane.xlu0 %2467
        %v2469 = vsel %vm344, %v2437, -inf
        %2470 = vmax.xlane.f32.xlu0 %v2469
        %v2471 = vpop.xlane.xlu0 %2470
        %v2472 = vsel %vm344, %v2442, -inf
        %2473 = vmax.xlane.f32.xlu0 %v2472
        %v2474 = vpop.xlane.xlu0 %2473
        %v2475 = vsel %vm344, %v2447, -inf
        %2476 = vmax.xlane.f32.xlu0 %v2475
        %v2477 = vpop.xlane.xlu0 %2476
        %v2478 = vsel %vm344, %v2452, -inf
        %2479 = vmax.xlane.f32.xlu0 %v2478
        %v2480 = vpop.xlane.xlu0 %2479
        %v2481 = vsel %vm344, %v2457, -inf
        %2482 = vmax.xlane.f32.xlu0 %v2481
        %v2483 = vpop.xlane.xlu0 %2482
        %v2484 = vsub.f32 %v2422, %v2462
        %v2485 = vsub.f32 %v2427, %v2465
        %v2486 = vsub.f32 %v2432, %v2468
        %v2487 = vsub.f32 %v2437, %v2471
        %v2488 = vsub.f32 %v2442, %v2474
        %v2489 = vsub.f32 %v2447, %v2477
        %v2490 = vsub.f32 %v2452, %v2480
        %v2491 = vsub.f32 %v2457, %v2483
        %v2492 = vmul.f32 %v2484, 1.442695
        %v2493 = vpow.pop %v2492
        %v2494 = vmul.f32 %v2485, 1.442695
        %v2495 = vpow.pop %v2494
        %v2496 = vmul.f32 %v2486, 1.442695
        %v2497 = vpow.pop %v2496
        %v2498 = vmul.f32 %v2487, 1.442695
        %v2499 = vpow.pop %v2498
        %v2500 = vmul.f32 %v2488, 1.442695
        %v2501 = vpow.pop %v2500
        %v2502 = vmul.f32 %v2489, 1.442695
        %v2503 = vpow.pop %v2502
        %v2504 = vmul.f32 %v2490, 1.442695
        %v2505 = vpow.pop %v2504
        %v2506 = vmul.f32 %v2491, 1.442695
        %v2507 = vpow.pop %v2506
        %v2508 = vsel %vm344, %v2493, 0.0
        %2509 = vadd.xlane.f32.xlu0 %v2508
        %v2510 = vpop.xlane.xlu0 %2509
        %v2511 = vsel %vm344, %v2495, 0.0
        %2512 = vadd.xlane.f32.xlu0 %v2511
        %v2513 = vpop.xlane.xlu0 %2512
        %v2514 = vsel %vm344, %v2497, 0.0
        %2515 = vadd.xlane.f32.xlu0 %v2514
        %v2516 = vpop.xlane.xlu0 %2515
        %v2517 = vsel %vm344, %v2499, 0.0
        %2518 = vadd.xlane.f32.xlu0 %v2517
        %v2519 = vpop.xlane.xlu0 %2518
        %v2520 = vsel %vm344, %v2501, 0.0
        %2521 = vadd.xlane.f32.xlu0 %v2520
        %v2522 = vpop.xlane.xlu0 %2521
        %v2523 = vsel %vm344, %v2503, 0.0
        %2524 = vadd.xlane.f32.xlu0 %v2523
        %v2525 = vpop.xlane.xlu0 %2524
        %v2526 = vsel %vm344, %v2505, 0.0
        %2527 = vadd.xlane.f32.xlu0 %v2526
        %v2528 = vpop.xlane.xlu0 %2527
        %v2529 = vsel %vm344, %v2507, 0.0
        %2530 = vadd.xlane.f32.xlu0 %v2529
        %v2531 = vpop.xlane.xlu0 %2530
        %2540 = vrot.lane.b32.xlu0 %v2307, 96
        %v2541 = vpop.permute.xlu0 %2540
        %2542 = vrot.lane.b32.xlu0 %v2308, 96
        %v2543 = vpop.permute.xlu0 %2542
        %2544 = vrot.lane.b32.xlu0 %v2309, 96
        %v2545 = vpop.permute.xlu0 %2544
        %2546 = vrot.lane.b32.xlu0 %v2310, 96
        %v2547 = vpop.permute.xlu0 %2546
        %2548 = vrot.lane.b32.xlu0 %v2311, 96
        %v2549 = vpop.permute.xlu0 %2548
        %2550 = vrot.lane.b32.xlu0 %v2312, 96
        %v2551 = vpop.permute.xlu0 %2550
        %2552 = vrot.lane.b32.xlu0 %v2313, 96
        %v2553 = vpop.permute.xlu0 %2552
        %2554 = vrot.lane.b32.xlu0 %v2314, 96
        %v2555 = vpop.permute.xlu0 %2554
        %v2565 = vsel %vm344, %v2493, 0
        %v2568 = vsel %vm344, %v2495, 0
        %v2571 = vsel %vm344, %v2497, 0
        %v2574 = vsel %vm344, %v2499, 0
        %v2577 = vsel %vm344, %v2501, 0
        %v2580 = vsel %vm344, %v2503, 0
        %v2583 = vsel %vm344, %v2505, 0
        %v2586 = vsel %vm344, %v2507, 0
        %2588 = vmatprep.subr.mxu0 0.0
        %2589 = vmatpush1.msra.mxu0 %v2541
        %2590 = vmatprep.subr.mxu0 0.0
        %2591 = vmatpush1.msra.mxu0 %v2543
        %2592 = vmatprep.subr.mxu0 0.0
        %2593 = vmatpush1.msra.mxu0 %v2545
        %2594 = vmatprep.subr.mxu0 0.0
        %2595 = vmatpush1.msra.mxu0 %v2547
        %2596 = vmatprep.subr.mxu0 0.0
        %2597 = vmatpush1.msra.mxu0 %v2549
        %2598 = vmatprep.subr.mxu0 0.0
        %2599 = vmatpush1.msra.mxu0 %v2551
        %2600 = vmatprep.subr.mxu0 0.0
        %2601 = vmatpush1.msra.mxu0 %v2553
        %2602 = vmatprep.subr.mxu0 0.0
        %2603 = vmatpush1.msra.mxu0 %v2555
        %2604 = vmatprep.subr.mxu0 0.0
        %2605 = vmatpush1.msra.mxu0 0.0
        %2606 = vmatprep.subr.mxu0 0.0
        %2607 = vmatpush1.msra.mxu0 0.0
        %2608 = vmatprep.subr.mxu0 0.0
        %2609 = vmatpush1.msra.mxu0 0.0
        %2610 = vmatprep.subr.mxu0 0.0
        %2611 = vmatpush1.msra.mxu0 0.0
        %2612 = vmatprep.subr.mxu0 0.0
        %2613 = vmatpush1.msra.mxu0 0.0
        %2614 = vmatprep.subr.mxu0 0.0
        %2615 = vmatpush1.msra.mxu0 0.0
        %2616 = vmatprep.subr.mxu0 0.0
        %2617 = vmatpush1.msra.mxu0 0.0
        %2618 = vmatprep.subr.mxu0 0.0
        %2619 = vmatpush1.msra.mxu0 0.0
        %2620 = vmatprep.subr.mxu0 0.0
        %2621 = vmatpush1.msra.mxu0 0.0
        %2622 = vmatprep.subr.mxu0 0.0
        %2623 = vmatpush1.msra.mxu0 0.0
        %2624 = vmatprep.subr.mxu0 0.0
        %2625 = vmatpush1.msra.mxu0 0.0
        %2626 = vmatprep.subr.mxu0 0.0
        %2627 = vmatpush1.msra.mxu0 0.0
        %2628 = vmatprep.subr.mxu0 0.0
        %2629 = vmatpush1.msra.mxu0 0.0
        %2630 = vmatprep.subr.mxu0 0.0
        %2631 = vmatpush1.msra.mxu0 0.0
        %2632 = vmatprep.subr.mxu0 0.0
        %2633 = vmatpush1.msra.mxu0 0.0
        %2634 = vmatprep.subr.mxu0 0.0
        %2635 = vmatpush1.msra.mxu0 0.0
        %2636 = vmatprep.subr.mxu0 0.0
        %2637 = vmatpush1.msra.mxu0 0.0
        %2638 = vmatprep.subr.mxu0 0.0
        %2639 = vmatpush1.msra.mxu0 0.0
        %2640 = vmatprep.subr.mxu0 0.0
        %2641 = vmatpush1.msra.mxu0 0.0
        %2642 = vmatprep.subr.mxu0 0.0
        %2643 = vmatpush1.msra.mxu0 0.0
        %2644 = vmatprep.subr.mxu0 0.0
        %2645 = vmatpush1.msra.mxu0 0.0
        %2646 = vmatprep.subr.mxu0 0.0
        %2647 = vmatpush1.msra.mxu0 0.0
        %2648 = vmatprep.subr.mxu0 0.0
        %2649 = vmatpush1.msra.mxu0 0.0
        %2650 = vmatprep.subr.mxu0 0.0
        %2651 = vmatpush1.msra.mxu0 0.0
        %2652 = vmatprep.mubr.f32.mxu0 0.0
        %2653 = vmatmul.mubr.f32.gmra.mrb[0].mxu0 %v2565
        %v2654 = vpop.f32.mrb[0].mxu0
        %v2655 = vadd.f32 0.0, %v2654
        %v2656 = vpop.f32.mrb[0].mxu0
        %2657 = vmatprep.mubr.f32.mxu0 0.0
        %2658 = vmatmul.mubr.f32.gmra.mrb[0].mxu0 %v2568
        %v2659 = vpop.f32.mrb[0].mxu0
        %v2660 = vadd.f32 0.0, %v2659
        %v2661 = vpop.f32.mrb[0].mxu0
        %2662 = vmatprep.mubr.f32.mxu0 0.0
        %2663 = vmatmul.mubr.f32.gmra.mrb[0].mxu0 %v2571
        %v2664 = vpop.f32.mrb[0].mxu0
        %v2665 = vadd.f32 0.0, %v2664
        %v2666 = vpop.f32.mrb[0].mxu0
        %2667 = vmatprep.mubr.f32.mxu0 0.0
        %2668 = vmatmul.mubr.f32.gmra.mrb[0].mxu0 %v2574
        %v2669 = vpop.f32.mrb[0].mxu0
        %v2670 = vadd.f32 0.0, %v2669
        %v2671 = vpop.f32.mrb[0].mxu0
        %2672 = vmatprep.mubr.f32.mxu0 0.0
        %2673 = vmatmul.mubr.f32.gmra.mrb[0].mxu0 %v2577
        %v2674 = vpop.f32.mrb[0].mxu0
        %v2675 = vadd.f32 0.0, %v2674
        %v2676 = vpop.f32.mrb[0].mxu0
        %2677 = vmatprep.mubr.f32.mxu0 0.0
        %2678 = vmatmul.mubr.f32.gmra.mrb[0].mxu0 %v2580
        %v2679 = vpop.f32.mrb[0].mxu0
        %v2680 = vadd.f32 0.0, %v2679
        %v2681 = vpop.f32.mrb[0].mxu0
        %2682 = vmatprep.mubr.f32.mxu0 0.0
        %2683 = vmatmul.mubr.f32.gmra.mrb[0].mxu0 %v2583
        %v2684 = vpop.f32.mrb[0].mxu0
        %v2685 = vadd.f32 0.0, %v2684
        %v2686 = vpop.f32.mrb[0].mxu0
        %2687 = vmatprep.mubr.f32.mxu0 0.0
        %2688 = vmatmul.mubr.f32.gmra.mrb[0].mxu0 %v2586
        %v2689 = vpop.f32.mrb[0].mxu0
        %v2690 = vadd.f32 0.0, %v2689
        %v2691 = vpop.f32.mrb[0].mxu0
        %2692 = vdwg.mxu0
        %v2693 = vrcp.pop %v2510
        %v2694 = vrcp.pop %v2513
        %v2695 = vrcp.pop %v2516
        %v2696 = vrcp.pop %v2519
        %v2697 = vrcp.pop %v2522
        %v2698 = vrcp.pop %v2525
        %v2699 = vrcp.pop %v2528
        %v2700 = vrcp.pop %v2531
        %v2701 = vmul.f32 %v2655, %v2693
        %v2702 = vmul.f32 %v2660, %v2694
        %v2703 = vmul.f32 %v2665, %v2695
        %v2704 = vmul.f32 %v2670, %v2696
        %v2705 = vmul.f32 %v2675, %v2697
        %v2706 = vmul.f32 %v2680, %v2698
        %v2707 = vmul.f32 %v2685, %v2699
        %v2708 = vmul.f32 %v2690, %v2700
        %2717 = vrot.lane.b32.xlu0 %v2701, 32
        %v2718 = vpop.permute.xlu0 %2717
        %2719 = vrot.lane.b32.xlu0 %v2702, 32
        %v2720 = vpop.permute.xlu0 %2719
        %2721 = vrot.lane.b32.xlu0 %v2703, 32
        %v2722 = vpop.permute.xlu0 %2721
        %2723 = vrot.lane.b32.xlu0 %v2704, 32
        %v2724 = vpop.permute.xlu0 %2723
        %2725 = vrot.lane.b32.xlu0 %v2705, 32
        %v2726 = vpop.permute.xlu0 %2725
        %2727 = vrot.lane.b32.xlu0 %v2706, 32
        %v2728 = vpop.permute.xlu0 %2727
        %2729 = vrot.lane.b32.xlu0 %v2707, 32
        %v2730 = vpop.permute.xlu0 %2729
        %2731 = vrot.lane.b32.xlu0 %v2708, 32
        %v2732 = vpop.permute.xlu0 %2731
        %vm2741 = vcmask 326912
        %2742 = vst.msk [vmem:[#allocation4] sm:$0xff] %vm2741, %v2718
        %2743 = vst.msk [vmem:[#allocation4 + $0x8] sm:$0xff] %vm2741, %v2720
        %2744 = vst.msk [vmem:[#allocation4 + $0x10] sm:$0xff] %vm2741, %v2722
        %2745 = vst.msk [vmem:[#allocation4 + $0x18] sm:$0xff] %vm2741, %v2724
        %2746 = vst.msk [vmem:[#allocation4 + $0x20] sm:$0xff] %vm2741, %v2726
        %2747 = vst.msk [vmem:[#allocation4 + $0x28] sm:$0xff] %vm2741, %v2728
        %2748 = vst.msk [vmem:[#allocation4 + $0x30] sm:$0xff] %vm2741, %v2730
        %2749 = vst.msk [vmem:[#allocation4 + $0x38] sm:$0xff] %vm2741, %v2732
        %v2750 = vld [vmem:[#allocation2] sm:$0xff]
        %v2751 = vld [vmem:[#allocation2 + $0x10] sm:$0xff]
        %v2752 = vld [vmem:[#allocation2 + $0x20] sm:$0xff]
        %v2753 = vld [vmem:[#allocation2 + $0x30] sm:$0xff]
        %v2754 = vld [vmem:[#allocation2 + $0x40] sm:$0xff]
        %v2755 = vld [vmem:[#allocation2 + $0x50] sm:$0xff]
        %v2756 = vld [vmem:[#allocation2 + $0x60] sm:$0xff]
        %v2757 = vld [vmem:[#allocation2 + $0x70] sm:$0xff]
        %v2758 = vld [vmem:[#allocation3 + $0x28] sm:$0xff]
        %v2759 = vld [vmem:[#allocation2 + $0x8] sm:$0xff]
        %v2760 = vld [vmem:[#allocation2 + $0x18] sm:$0xff]
        %v2761 = vld [vmem:[#allocation2 + $0x28] sm:$0xff]
        %v2762 = vld [vmem:[#allocation2 + $0x38] sm:$0xff]
        %v2763 = vld [vmem:[#allocation2 + $0x48] sm:$0xff]
        %v2764 = vld [vmem:[#allocation2 + $0x58] sm:$0xff]
        %v2765 = vld [vmem:[#allocation2 + $0x68] sm:$0xff]
        %v2766 = vld [vmem:[#allocation2 + $0x78] sm:$0xff]
        %2775 = vrot.lane.b32.xlu0 %v2750, 88
        %v2776 = vpop.permute.xlu0 %2775
        %2777 = vrot.lane.b32.xlu0 %v2751, 88
        %v2778 = vpop.permute.xlu0 %2777
        %2779 = vrot.lane.b32.xlu0 %v2752, 88
        %v2780 = vpop.permute.xlu0 %2779
        %2781 = vrot.lane.b32.xlu0 %v2753, 88
        %v2782 = vpop.permute.xlu0 %2781
        %2783 = vrot.lane.b32.xlu0 %v2754, 88
        %v2784 = vpop.permute.xlu0 %2783
        %2785 = vrot.lane.b32.xlu0 %v2755, 88
        %v2786 = vpop.permute.xlu0 %2785
        %2787 = vrot.lane.b32.xlu0 %v2756, 88
        %v2788 = vpop.permute.xlu0 %2787
        %2789 = vrot.lane.b32.xlu0 %v2757, 88
        %v2790 = vpop.permute.xlu0 %2789
        %v2791 = vsel %vm587, %v2776, 0
        %v2793 = vsel %vm587, %v2778, 0
        %v2795 = vsel %vm587, %v2780, 0
        %v2797 = vsel %vm587, %v2782, 0
        %v2799 = vsel %vm587, %v2784, 0
        %v2801 = vsel %vm587, %v2786, 0
        %v2803 = vsel %vm587, %v2788, 0
        %v2805 = vsel %vm587, %v2790, 0
        %2807 = vmatprep.subr.mxu0 0.0
        %2808 = vmatpush1.msra.mxu0 %v2758
        %2809 = vmatprep.subr.mxu0 0.0
        %2810 = vmatpush1.msra.mxu0 0.0
        %2811 = vmatprep.subr.mxu0 0.0
        %2812 = vmatpush1.msra.mxu0 0.0
        %2813 = vmatprep.subr.mxu0 0.0
        %2814 = vmatpush1.msra.mxu0 0.0
        %2815 = vmatprep.subr.mxu0 0.0
        %2816 = vmatpush1.msra.mxu0 0.0
        %2817 = vmatprep.subr.mxu0 0.0
        %2818 = vmatpush1.msra.mxu0 0.0
        %2819 = vmatprep.subr.mxu0 0.0
        %2820 = vmatpush1.msra.mxu0 0.0
        %2821 = vmatprep.subr.mxu0 0.0
        %2822 = vmatpush1.msra.mxu0 0.0
        %2823 = vmatprep.subr.mxu0 0.0
        %2824 = vmatpush1.msra.mxu0 0.0
        %2825 = vmatprep.subr.mxu0 0.0
        %2826 = vmatpush1.msra.mxu0 0.0
        %2827 = vmatprep.subr.mxu0 0.0
        %2828 = vmatpush1.msra.mxu0 0.0
        %2829 = vmatprep.subr.mxu0 0.0
        %2830 = vmatpush1.msra.mxu0 0.0
        %2831 = vmatprep.subr.mxu0 0.0
        %2832 = vmatpush1.msra.mxu0 0.0
        %2833 = vmatprep.subr.mxu0 0.0
        %2834 = vmatpush1.msra.mxu0 0.0
        %2835 = vmatprep.subr.mxu0 0.0
        %2836 = vmatpush1.msra.mxu0 0.0
        %2837 = vmatprep.subr.mxu0 0.0
        %2838 = vmatpush1.msra.mxu0 0.0
        %2839 = vmatprep.subr.mxu0 0.0
        %2840 = vmatpush1.msra.mxu0 0.0
        %2841 = vmatprep.subr.mxu0 0.0
        %2842 = vmatpush1.msra.mxu0 0.0
        %2843 = vmatprep.subr.mxu0 0.0
        %2844 = vmatpush1.msra.mxu0 0.0
        %2845 = vmatprep.subr.mxu0 0.0
        %2846 = vmatpush1.msra.mxu0 0.0
        %2847 = vmatprep.subr.mxu0 0.0
        %2848 = vmatpush1.msra.mxu0 0.0
        %2849 = vmatprep.subr.mxu0 0.0
        %2850 = vmatpush1.msra.mxu0 0.0
        %2851 = vmatprep.subr.mxu0 0.0
        %2852 = vmatpush1.msra.mxu0 0.0
        %2853 = vmatprep.subr.mxu0 0.0
        %2854 = vmatpush1.msra.mxu0 0.0
        %2855 = vmatprep.subr.mxu0 0.0
        %2856 = vmatpush1.msra.mxu0 0.0
        %2857 = vmatprep.subr.mxu0 0.0
        %2858 = vmatpush1.msra.mxu0 0.0
        %2859 = vmatprep.subr.mxu0 0.0
        %2860 = vmatpush1.msra.mxu0 0.0
        %2861 = vmatprep.subr.mxu0 0.0
        %2862 = vmatpush1.msra.mxu0 0.0
        %2863 = vmatprep.subr.mxu0 0.0
        %2864 = vmatpush1.msra.mxu0 0.0
        %2865 = vmatprep.subr.mxu0 0.0
        %2866 = vmatpush1.msra.mxu0 0.0
        %2867 = vmatprep.subr.mxu0 0.0
        %2868 = vmatpush1.msra.mxu0 0.0
        %2869 = vmatprep.subr.mxu0 0.0
        %2870 = vmatpush1.msra.mxu0 0.0
        %2871 = vmatprep.mubr.f32.mxu0 0.0
        %2872 = vmatmul.mubr.f32.gmra.mrb[0].mxu0 %v2791
        %v2873 = vpop.f32.mrb[0].mxu0
        %v2874 = vadd.f32 0.0, %v2873
        %v2875 = vpop.f32.mrb[0].mxu0
        %2876 = vmatprep.mubr.f32.mxu0 0.0
        %2877 = vmatmul.mubr.f32.gmra.mrb[0].mxu0 %v2793
        %v2878 = vpop.f32.mrb[0].mxu0
        %v2879 = vadd.f32 0.0, %v2878
        %v2880 = vpop.f32.mrb[0].mxu0
        %2881 = vmatprep.mubr.f32.mxu0 0.0
        %2882 = vmatmul.mubr.f32.gmra.mrb[0].mxu0 %v2795
        %v2883 = vpop.f32.mrb[0].mxu0
        %v2884 = vadd.f32 0.0, %v2883
        %v2885 = vpop.f32.mrb[0].mxu0
        %2886 = vmatprep.mubr.f32.mxu0 0.0
        %2887 = vmatmul.mubr.f32.gmra.mrb[0].mxu0 %v2797
        %v2888 = vpop.f32.mrb[0].mxu0
        %v2889 = vadd.f32 0.0, %v2888
        %v2890 = vpop.f32.mrb[0].mxu0
        %2891 = vmatprep.mubr.f32.mxu0 0.0
        %2892 = vmatmul.mubr.f32.gmra.mrb[0].mxu0 %v2799
        %v2893 = vpop.f32.mrb[0].mxu0
        %v2894 = vadd.f32 0.0, %v2893
        %v2895 = vpop.f32.mrb[0].mxu0
        %2896 = vmatprep.mubr.f32.mxu0 0.0
        %2897 = vmatmul.mubr.f32.gmra.mrb[0].mxu0 %v2801
        %v2898 = vpop.f32.mrb[0].mxu0
        %v2899 = vadd.f32 0.0, %v2898
        %v2900 = vpop.f32.mrb[0].mxu0
        %2901 = vmatprep.mubr.f32.mxu0 0.0
        %2902 = vmatmul.mubr.f32.gmra.mrb[0].mxu0 %v2803
        %v2903 = vpop.f32.mrb[0].mxu0
        %v2904 = vadd.f32 0.0, %v2903
        %v2905 = vpop.f32.mrb[0].mxu0
        %2906 = vmatprep.mubr.f32.mxu0 0.0
        %2907 = vmatmul.mubr.f32.gmra.mrb[0].mxu0 %v2805
        %v2908 = vpop.f32.mrb[0].mxu0
        %v2909 = vadd.f32 0.0, %v2908
        %v2910 = vpop.f32.mrb[0].mxu0
        %2911 = vdwg.mxu0
        %v2912 = vsel %vm344, %v2874, -inf
        %2913 = vmax.xlane.f32.xlu0 %v2912
        %v2914 = vpop.xlane.xlu0 %2913
        %v2915 = vsel %vm344, %v2879, -inf
        %2916 = vmax.xlane.f32.xlu0 %v2915
        %v2917 = vpop.xlane.xlu0 %2916
        %v2918 = vsel %vm344, %v2884, -inf
        %2919 = vmax.xlane.f32.xlu0 %v2918
        %v2920 = vpop.xlane.xlu0 %2919
        %v2921 = vsel %vm344, %v2889, -inf
        %2922 = vmax.xlane.f32.xlu0 %v2921
        %v2923 = vpop.xlane.xlu0 %2922
        %v2924 = vsel %vm344, %v2894, -inf
        %2925 = vmax.xlane.f32.xlu0 %v2924
        %v2926 = vpop.xlane.xlu0 %2925
        %v2927 = vsel %vm344, %v2899, -inf
        %2928 = vmax.xlane.f32.xlu0 %v2927
        %v2929 = vpop.xlane.xlu0 %2928
        %v2930 = vsel %vm344, %v2904, -inf
        %2931 = vmax.xlane.f32.xlu0 %v2930
        %v2932 = vpop.xlane.xlu0 %2931
        %v2933 = vsel %vm344, %v2909, -inf
        %2934 = vmax.xlane.f32.xlu0 %v2933
        %v2935 = vpop.xlane.xlu0 %2934
        %v2936 = vsub.f32 %v2874, %v2914
        %v2937 = vsub.f32 %v2879, %v2917
        %v2938 = vsub.f32 %v2884, %v2920
        %v2939 = vsub.f32 %v2889, %v2923
        %v2940 = vsub.f32 %v2894, %v2926
        %v2941 = vsub.f32 %v2899, %v2929
        %v2942 = vsub.f32 %v2904, %v2932
        %v2943 = vsub.f32 %v2909, %v2935
        %v2944 = vmul.f32 %v2936, 1.442695
        %v2945 = vpow.pop %v2944
        %v2946 = vmul.f32 %v2937, 1.442695
        %v2947 = vpow.pop %v2946
        %v2948 = vmul.f32 %v2938, 1.442695
        %v2949 = vpow.pop %v2948
        %v2950 = vmul.f32 %v2939, 1.442695
        %v2951 = vpow.pop %v2950
        %v2952 = vmul.f32 %v2940, 1.442695
        %v2953 = vpow.pop %v2952
        %v2954 = vmul.f32 %v2941, 1.442695
        %v2955 = vpow.pop %v2954
        %v2956 = vmul.f32 %v2942, 1.442695
        %v2957 = vpow.pop %v2956
        %v2958 = vmul.f32 %v2943, 1.442695
        %v2959 = vpow.pop %v2958
        %v2960 = vsel %vm344, %v2945, 0.0
        %2961 = vadd.xlane.f32.xlu0 %v2960
        %v2962 = vpop.xlane.xlu0 %2961
        %v2963 = vsel %vm344, %v2947, 0.0
        %2964 = vadd.xlane.f32.xlu0 %v2963
        %v2965 = vpop.xlane.xlu0 %2964
        %v2966 = vsel %vm344, %v2949, 0.0
        %2967 = vadd.xlane.f32.xlu0 %v2966
        %v2968 = vpop.xlane.xlu0 %2967
        %v2969 = vsel %vm344, %v2951, 0.0
        %2970 = vadd.xlane.f32.xlu0 %v2969
        %v2971 = vpop.xlane.xlu0 %2970
        %v2972 = vsel %vm344, %v2953, 0.0
        %2973 = vadd.xlane.f32.xlu0 %v2972
        %v2974 = vpop.xlane.xlu0 %2973
        %v2975 = vsel %vm344, %v2955, 0.0
        %2976 = vadd.xlane.f32.xlu0 %v2975
        %v2977 = vpop.xlane.xlu0 %2976
        %v2978 = vsel %vm344, %v2957, 0.0
        %2979 = vadd.xlane.f32.xlu0 %v2978
        %v2980 = vpop.xlane.xlu0 %2979
        %v2981 = vsel %vm344, %v2959, 0.0
        %2982 = vadd.xlane.f32.xlu0 %v2981
        %v2983 = vpop.xlane.xlu0 %2982
        %2992 = vrot.lane.b32.xlu0 %v2759, 88
        %v2993 = vpop.permute.xlu0 %2992
        %2994 = vrot.lane.b32.xlu0 %v2760, 88
        %v2995 = vpop.permute.xlu0 %2994
        %2996 = vrot.lane.b32.xlu0 %v2761, 88
        %v2997 = vpop.permute.xlu0 %2996
        %2998 = vrot.lane.b32.xlu0 %v2762, 88
        %v2999 = vpop.permute.xlu0 %2998
        %3000 = vrot.lane.b32.xlu0 %v2763, 88
        %v3001 = vpop.permute.xlu0 %3000
        %3002 = vrot.lane.b32.xlu0 %v2764, 88
        %v3003 = vpop.permute.xlu0 %3002
        %3004 = vrot.lane.b32.xlu0 %v2765, 88
        %v3005 = vpop.permute.xlu0 %3004
        %3006 = vrot.lane.b32.xlu0 %v2766, 88
        %v3007 = vpop.permute.xlu0 %3006
        %v3017 = vsel %vm344, %v2945, 0
        %v3020 = vsel %vm344, %v2947, 0
        %v3023 = vsel %vm344, %v2949, 0
        %v3026 = vsel %vm344, %v2951, 0
        %v3029 = vsel %vm344, %v2953, 0
        %v3032 = vsel %vm344, %v2955, 0
        %v3035 = vsel %vm344, %v2957, 0
        %v3038 = vsel %vm344, %v2959, 0
        %3040 = vmatprep.subr.mxu0 0.0
        %3041 = vmatpush1.msra.mxu0 %v2993
        %3042 = vmatprep.subr.mxu0 0.0
        %3043 = vmatpush1.msra.mxu0 %v2995
        %3044 = vmatprep.subr.mxu0 0.0
        %3045 = vmatpush1.msra.mxu0 %v2997
        %3046 = vmatprep.subr.mxu0 0.0
        %3047 = vmatpush1.msra.mxu0 %v2999
        %3048 = vmatprep.subr.mxu0 0.0
        %3049 = vmatpush1.msra.mxu0 %v3001
        %3050 = vmatprep.subr.mxu0 0.0
        %3051 = vmatpush1.msra.mxu0 %v3003
        %3052 = vmatprep.subr.mxu0 0.0
        %3053 = vmatpush1.msra.mxu0 %v3005
        %3054 = vmatprep.subr.mxu0 0.0
        %3055 = vmatpush1.msra.mxu0 %v3007
        %3056 = vmatprep.subr.mxu0 0.0
        %3057 = vmatpush1.msra.mxu0 0.0
        %3058 = vmatprep.subr.mxu0 0.0
        %3059 = vmatpush1.msra.mxu0 0.0
        %3060 = vmatprep.subr.mxu0 0.0
        %3061 = vmatpush1.msra.mxu0 0.0
        %3062 = vmatprep.subr.mxu0 0.0
        %3063 = vmatpush1.msra.mxu0 0.0
        %3064 = vmatprep.subr.mxu0 0.0
        %3065 = vmatpush1.msra.mxu0 0.0
        %3066 = vmatprep.subr.mxu0 0.0
        %3067 = vmatpush1.msra.mxu0 0.0
        %3068 = vmatprep.subr.mxu0 0.0
        %3069 = vmatpush1.msra.mxu0 0.0
        %3070 = vmatprep.subr.mxu0 0.0
        %3071 = vmatpush1.msra.mxu0 0.0
        %3072 = vmatprep.subr.mxu0 0.0
        %3073 = vmatpush1.msra.mxu0 0.0
        %3074 = vmatprep.subr.mxu0 0.0
        %3075 = vmatpush1.msra.mxu0 0.0
        %3076 = vmatprep.subr.mxu0 0.0
        %3077 = vmatpush1.msra.mxu0 0.0
        %3078 = vmatprep.subr.mxu0 0.0
        %3079 = vmatpush1.msra.mxu0 0.0
        %3080 = vmatprep.subr.mxu0 0.0
        %3081 = vmatpush1.msra.mxu0 0.0
        %3082 = vmatprep.subr.mxu0 0.0
        %3083 = vmatpush1.msra.mxu0 0.0
        %3084 = vmatprep.subr.mxu0 0.0
        %3085 = vmatpush1.msra.mxu0 0.0
        %3086 = vmatprep.subr.mxu0 0.0
        %3087 = vmatpush1.msra.mxu0 0.0
        %3088 = vmatprep.subr.mxu0 0.0
        %3089 = vmatpush1.msra.mxu0 0.0
        %3090 = vmatprep.subr.mxu0 0.0
        %3091 = vmatpush1.msra.mxu0 0.0
        %3092 = vmatprep.subr.mxu0 0.0
        %3093 = vmatpush1.msra.mxu0 0.0
        %3094 = vmatprep.subr.mxu0 0.0
        %3095 = vmatpush1.msra.mxu0 0.0
        %3096 = vmatprep.subr.mxu0 0.0
        %3097 = vmatpush1.msra.mxu0 0.0
        %3098 = vmatprep.subr.mxu0 0.0
        %3099 = vmatpush1.msra.mxu0 0.0
        %3100 = vmatprep.subr.mxu0 0.0
        %3101 = vmatpush1.msra.mxu0 0.0
        %3102 = vmatprep.subr.mxu0 0.0
        %3103 = vmatpush1.msra.mxu0 0.0
        %3104 = vmatprep.mubr.f32.mxu0 0.0
        %3105 = vmatmul.mubr.f32.gmra.mrb[0].mxu0 %v3017
        %v3106 = vpop.f32.mrb[0].mxu0
        %v3107 = vadd.f32 0.0, %v3106
        %v3108 = vpop.f32.mrb[0].mxu0
        %3109 = vmatprep.mubr.f32.mxu0 0.0
        %3110 = vmatmul.mubr.f32.gmra.mrb[0].mxu0 %v3020
        %v3111 = vpop.f32.mrb[0].mxu0
        %v3112 = vadd.f32 0.0, %v3111
        %v3113 = vpop.f32.mrb[0].mxu0
        %3114 = vmatprep.mubr.f32.mxu0 0.0
        %3115 = vmatmul.mubr.f32.gmra.mrb[0].mxu0 %v3023
        %v3116 = vpop.f32.mrb[0].mxu0
        %v3117 = vadd.f32 0.0, %v3116
        %v3118 = vpop.f32.mrb[0].mxu0
        %3119 = vmatprep.mubr.f32.mxu0 0.0
        %3120 = vmatmul.mubr.f32.gmra.mrb[0].mxu0 %v3026
        %v3121 = vpop.f32.mrb[0].mxu0
        %v3122 = vadd.f32 0.0, %v3121
        %v3123 = vpop.f32.mrb[0].mxu0
        %3124 = vmatprep.mubr.f32.mxu0 0.0
        %3125 = vmatmul.mubr.f32.gmra.mrb[0].mxu0 %v3029
        %v3126 = vpop.f32.mrb[0].mxu0
        %v3127 = vadd.f32 0.0, %v3126
        %v3128 = vpop.f32.mrb[0].mxu0
        %3129 = vmatprep.mubr.f32.mxu0 0.0
        %3130 = vmatmul.mubr.f32.gmra.mrb[0].mxu0 %v3032
        %v3131 = vpop.f32.mrb[0].mxu0
        %v3132 = vadd.f32 0.0, %v3131
        %v3133 = vpop.f32.mrb[0].mxu0
        %3134 = vmatprep.mubr.f32.mxu0 0.0
        %3135 = vmatmul.mubr.f32.gmra.mrb[0].mxu0 %v3035
        %v3136 = vpop.f32.mrb[0].mxu0
        %v3137 = vadd.f32 0.0, %v3136
        %v3138 = vpop.f32.mrb[0].mxu0
        %3139 = vmatprep.mubr.f32.mxu0 0.0
        %3140 = vmatmul.mubr.f32.gmra.mrb[0].mxu0 %v3038
        %v3141 = vpop.f32.mrb[0].mxu0
        %v3142 = vadd.f32 0.0, %v3141
        %v3143 = vpop.f32.mrb[0].mxu0
        %3144 = vdwg.mxu0
        %v3145 = vrcp.pop %v2962
        %v3146 = vrcp.pop %v2965
        %v3147 = vrcp.pop %v2968
        %v3148 = vrcp.pop %v2971
        %v3149 = vrcp.pop %v2974
        %v3150 = vrcp.pop %v2977
        %v3151 = vrcp.pop %v2980
        %v3152 = vrcp.pop %v2983
        %v3153 = vmul.f32 %v3107, %v3145
        %v3154 = vmul.f32 %v3112, %v3146
        %v3155 = vmul.f32 %v3117, %v3147
        %v3156 = vmul.f32 %v3122, %v3148
        %v3157 = vmul.f32 %v3127, %v3149
        %v3158 = vmul.f32 %v3132, %v3150
        %v3159 = vmul.f32 %v3137, %v3151
        %v3160 = vmul.f32 %v3142, %v3152
        %3169 = vrot.lane.b32.xlu0 %v3153, 40
        %v3170 = vpop.permute.xlu0 %3169
        %3171 = vrot.lane.b32.xlu0 %v3154, 40
        %v3172 = vpop.permute.xlu0 %3171
        %3173 = vrot.lane.b32.xlu0 %v3155, 40
        %v3174 = vpop.permute.xlu0 %3173
        %3175 = vrot.lane.b32.xlu0 %v3156, 40
        %v3176 = vpop.permute.xlu0 %3175
        %3177 = vrot.lane.b32.xlu0 %v3157, 40
        %v3178 = vpop.permute.xlu0 %3177
        %3179 = vrot.lane.b32.xlu0 %v3158, 40
        %v3180 = vpop.permute.xlu0 %3179
        %3181 = vrot.lane.b32.xlu0 %v3159, 40
        %v3182 = vpop.permute.xlu0 %3181
        %3183 = vrot.lane.b32.xlu0 %v3160, 40
        %v3184 = vpop.permute.xlu0 %3183
        %vm3193 = vcmask 392512
        %3194 = vst.msk [vmem:[#allocation4] sm:$0xff] %vm3193, %v3170
        %3195 = vst.msk [vmem:[#allocation4 + $0x8] sm:$0xff] %vm3193, %v3172
        %3196 = vst.msk [vmem:[#allocation4 + $0x10] sm:$0xff] %vm3193, %v3174
        %3197 = vst.msk [vmem:[#allocation4 + $0x18] sm:$0xff] %vm3193, %v3176
        %3198 = vst.msk [vmem:[#allocation4 + $0x20] sm:$0xff] %vm3193, %v3178
        %3199 = vst.msk [vmem:[#allocation4 + $0x28] sm:$0xff] %vm3193, %v3180
        %3200 = vst.msk [vmem:[#allocation4 + $0x30] sm:$0xff] %vm3193, %v3182
        %3201 = vst.msk [vmem:[#allocation4 + $0x38] sm:$0xff] %vm3193, %v3184
        %v3202 = vld [vmem:[#allocation2] sm:$0xff]
        %v3203 = vld [vmem:[#allocation2 + $0x10] sm:$0xff]
        %v3204 = vld [vmem:[#allocation2 + $0x20] sm:$0xff]
        %v3205 = vld [vmem:[#allocation2 + $0x30] sm:$0xff]
        %v3206 = vld [vmem:[#allocation2 + $0x40] sm:$0xff]
        %v3207 = vld [vmem:[#allocation2 + $0x50] sm:$0xff]
        %v3208 = vld [vmem:[#allocation2 + $0x60] sm:$0xff]
        %v3209 = vld [vmem:[#allocation2 + $0x70] sm:$0xff]
        %v3210 = vld [vmem:[#allocation3 + $0x30] sm:$0xff]
        %v3211 = vld [vmem:[#allocation2 + $0x8] sm:$0xff]
        %v3212 = vld [vmem:[#allocation2 + $0x18] sm:$0xff]
        %v3213 = vld [vmem:[#allocation2 + $0x28] sm:$0xff]
        %v3214 = vld [vmem:[#allocation2 + $0x38] sm:$0xff]
        %v3215 = vld [vmem:[#allocation2 + $0x48] sm:$0xff]
        %v3216 = vld [vmem:[#allocation2 + $0x58] sm:$0xff]
        %v3217 = vld [vmem:[#allocation2 + $0x68] sm:$0xff]
        %v3218 = vld [vmem:[#allocation2 + $0x78] sm:$0xff]
        %3227 = vrot.lane.b32.xlu0 %v3202, 80
        %v3228 = vpop.permute.xlu0 %3227
        %3229 = vrot.lane.b32.xlu0 %v3203, 80
        %v3230 = vpop.permute.xlu0 %3229
        %3231 = vrot.lane.b32.xlu0 %v3204, 80
        %v3232 = vpop.permute.xlu0 %3231
        %3233 = vrot.lane.b32.xlu0 %v3205, 80
        %v3234 = vpop.permute.xlu0 %3233
        %3235 = vrot.lane.b32.xlu0 %v3206, 80
        %v3236 = vpop.permute.xlu0 %3235
        %3237 = vrot.lane.b32.xlu0 %v3207, 80
        %v3238 = vpop.permute.xlu0 %3237
        %3239 = vrot.lane.b32.xlu0 %v3208, 80
        %v3240 = vpop.permute.xlu0 %3239
        %3241 = vrot.lane.b32.xlu0 %v3209, 80
        %v3242 = vpop.permute.xlu0 %3241
        %v3243 = vsel %vm587, %v3228, 0
        %v3245 = vsel %vm587, %v3230, 0
        %v3247 = vsel %vm587, %v3232, 0
        %v3249 = vsel %vm587, %v3234, 0
        %v3251 = vsel %vm587, %v3236, 0
        %v3253 = vsel %vm587, %v3238, 0
        %v3255 = vsel %vm587, %v3240, 0
        %v3257 = vsel %vm587, %v3242, 0
        %3259 = vmatprep.subr.mxu0 0.0
        %3260 = vmatpush1.msra.mxu0 %v3210
        %3261 = vmatprep.subr.mxu0 0.0
        %3262 = vmatpush1.msra.mxu0 0.0
        %3263 = vmatprep.subr.mxu0 0.0
        %3264 = vmatpush1.msra.mxu0 0.0
        %3265 = vmatprep.subr.mxu0 0.0
        %3266 = vmatpush1.msra.mxu0 0.0
        %3267 = vmatprep.subr.mxu0 0.0
        %3268 = vmatpush1.msra.mxu0 0.0
        %3269 = vmatprep.subr.mxu0 0.0
        %3270 = vmatpush1.msra.mxu0 0.0
        %3271 = vmatprep.subr.mxu0 0.0
        %3272 = vmatpush1.msra.mxu0 0.0
        %3273 = vmatprep.subr.mxu0 0.0
        %3274 = vmatpush1.msra.mxu0 0.0
        %3275 = vmatprep.subr.mxu0 0.0
        %3276 = vmatpush1.msra.mxu0 0.0
        %3277 = vmatprep.subr.mxu0 0.0
        %3278 = vmatpush1.msra.mxu0 0.0
        %3279 = vmatprep.subr.mxu0 0.0
        %3280 = vmatpush1.msra.mxu0 0.0
        %3281 = vmatprep.subr.mxu0 0.0
        %3282 = vmatpush1.msra.mxu0 0.0
        %3283 = vmatprep.subr.mxu0 0.0
        %3284 = vmatpush1.msra.mxu0 0.0
        %3285 = vmatprep.subr.mxu0 0.0
        %3286 = vmatpush1.msra.mxu0 0.0
        %3287 = vmatprep.subr.mxu0 0.0
        %3288 = vmatpush1.msra.mxu0 0.0
        %3289 = vmatprep.subr.mxu0 0.0
        %3290 = vmatpush1.msra.mxu0 0.0
        %3291 = vmatprep.subr.mxu0 0.0
        %3292 = vmatpush1.msra.mxu0 0.0
        %3293 = vmatprep.subr.mxu0 0.0
        %3294 = vmatpush1.msra.mxu0 0.0
        %3295 = vmatprep.subr.mxu0 0.0
        %3296 = vmatpush1.msra.mxu0 0.0
        %3297 = vmatprep.subr.mxu0 0.0
        %3298 = vmatpush1.msra.mxu0 0.0
        %3299 = vmatprep.subr.mxu0 0.0
        %3300 = vmatpush1.msra.mxu0 0.0
        %3301 = vmatprep.subr.mxu0 0.0
        %3302 = vmatpush1.msra.mxu0 0.0
        %3303 = vmatprep.subr.mxu0 0.0
        %3304 = vmatpush1.msra.mxu0 0.0
        %3305 = vmatprep.subr.mxu0 0.0
        %3306 = vmatpush1.msra.mxu0 0.0
        %3307 = vmatprep.subr.mxu0 0.0
        %3308 = vmatpush1.msra.mxu0 0.0
        %3309 = vmatprep.subr.mxu0 0.0
        %3310 = vmatpush1.msra.mxu0 0.0
        %3311 = vmatprep.subr.mxu0 0.0
        %3312 = vmatpush1.msra.mxu0 0.0
        %3313 = vmatprep.subr.mxu0 0.0
        %3314 = vmatpush1.msra.mxu0 0.0
        %3315 = vmatprep.subr.mxu0 0.0
        %3316 = vmatpush1.msra.mxu0 0.0
        %3317 = vmatprep.subr.mxu0 0.0
        %3318 = vmatpush1.msra.mxu0 0.0
        %3319 = vmatprep.subr.mxu0 0.0
        %3320 = vmatpush1.msra.mxu0 0.0
        %3321 = vmatprep.subr.mxu0 0.0
        %3322 = vmatpush1.msra.mxu0 0.0
        %3323 = vmatprep.mubr.f32.mxu0 0.0
        %3324 = vmatmul.mubr.f32.gmra.mrb[0].mxu0 %v3243
        %v3325 = vpop.f32.mrb[0].mxu0
        %v3326 = vadd.f32 0.0, %v3325
        %v3327 = vpop.f32.mrb[0].mxu0
        %3328 = vmatprep.mubr.f32.mxu0 0.0
        %3329 = vmatmul.mubr.f32.gmra.mrb[0].mxu0 %v3245
        %v3330 = vpop.f32.mrb[0].mxu0
        %v3331 = vadd.f32 0.0, %v3330
        %v3332 = vpop.f32.mrb[0].mxu0
        %3333 = vmatprep.mubr.f32.mxu0 0.0
        %3334 = vmatmul.mubr.f32.gmra.mrb[0].mxu0 %v3247
        %v3335 = vpop.f32.mrb[0].mxu0
        %v3336 = vadd.f32 0.0, %v3335
        %v3337 = vpop.f32.mrb[0].mxu0
        %3338 = vmatprep.mubr.f32.mxu0 0.0
        %3339 = vmatmul.mubr.f32.gmra.mrb[0].mxu0 %v3249
        %v3340 = vpop.f32.mrb[0].mxu0
        %v3341 = vadd.f32 0.0, %v3340
        %v3342 = vpop.f32.mrb[0].mxu0
        %3343 = vmatprep.mubr.f32.mxu0 0.0
        %3344 = vmatmul.mubr.f32.gmra.mrb[0].mxu0 %v3251
        %v3345 = vpop.f32.mrb[0].mxu0
        %v3346 = vadd.f32 0.0, %v3345
        %v3347 = vpop.f32.mrb[0].mxu0
        %3348 = vmatprep.mubr.f32.mxu0 0.0
        %3349 = vmatmul.mubr.f32.gmra.mrb[0].mxu0 %v3253
        %v3350 = vpop.f32.mrb[0].mxu0
        %v3351 = vadd.f32 0.0, %v3350
        %v3352 = vpop.f32.mrb[0].mxu0
        %3353 = vmatprep.mubr.f32.mxu0 0.0
        %3354 = vmatmul.mubr.f32.gmra.mrb[0].mxu0 %v3255
        %v3355 = vpop.f32.mrb[0].mxu0
        %v3356 = vadd.f32 0.0, %v3355
        %v3357 = vpop.f32.mrb[0].mxu0
        %3358 = vmatprep.mubr.f32.mxu0 0.0
        %3359 = vmatmul.mubr.f32.gmra.mrb[0].mxu0 %v3257
        %v3360 = vpop.f32.mrb[0].mxu0
        %v3361 = vadd.f32 0.0, %v3360
        %v3362 = vpop.f32.mrb[0].mxu0
        %3363 = vdwg.mxu0
        %v3364 = vsel %vm344, %v3326, -inf
        %3365 = vmax.xlane.f32.xlu0 %v3364
        %v3366 = vpop.xlane.xlu0 %3365
        %v3367 = vsel %vm344, %v3331, -inf
        %3368 = vmax.xlane.f32.xlu0 %v3367
        %v3369 = vpop.xlane.xlu0 %3368
        %v3370 = vsel %vm344, %v3336, -inf
        %3371 = vmax.xlane.f32.xlu0 %v3370
        %v3372 = vpop.xlane.xlu0 %3371
        %v3373 = vsel %vm344, %v3341, -inf
        %3374 = vmax.xlane.f32.xlu0 %v3373
        %v3375 = vpop.xlane.xlu0 %3374
        %v3376 = vsel %vm344, %v3346, -inf
        %3377 = vmax.xlane.f32.xlu0 %v3376
        %v3378 = vpop.xlane.xlu0 %3377
        %v3379 = vsel %vm344, %v3351, -inf
        %3380 = vmax.xlane.f32.xlu0 %v3379
        %v3381 = vpop.xlane.xlu0 %3380
        %v3382 = vsel %vm344, %v3356, -inf
        %3383 = vmax.xlane.f32.xlu0 %v3382
        %v3384 = vpop.xlane.xlu0 %3383
        %v3385 = vsel %vm344, %v3361, -inf
        %3386 = vmax.xlane.f32.xlu0 %v3385
        %v3387 = vpop.xlane.xlu0 %3386
        %v3388 = vsub.f32 %v3326, %v3366
        %v3389 = vsub.f32 %v3331, %v3369
        %v3390 = vsub.f32 %v3336, %v3372
        %v3391 = vsub.f32 %v3341, %v3375
        %v3392 = vsub.f32 %v3346, %v3378
        %v3393 = vsub.f32 %v3351, %v3381
        %v3394 = vsub.f32 %v3356, %v3384
        %v3395 = vsub.f32 %v3361, %v3387
        %v3396 = vmul.f32 %v3388, 1.442695
        %v3397 = vpow.pop %v3396
        %v3398 = vmul.f32 %v3389, 1.442695
        %v3399 = vpow.pop %v3398
        %v3400 = vmul.f32 %v3390, 1.442695
        %v3401 = vpow.pop %v3400
        %v3402 = vmul.f32 %v3391, 1.442695
        %v3403 = vpow.pop %v3402
        %v3404 = vmul.f32 %v3392, 1.442695
        %v3405 = vpow.pop %v3404
        %v3406 = vmul.f32 %v3393, 1.442695
        %v3407 = vpow.pop %v3406
        %v3408 = vmul.f32 %v3394, 1.442695
        %v3409 = vpow.pop %v3408
        %v3410 = vmul.f32 %v3395, 1.442695
        %v3411 = vpow.pop %v3410
        %v3412 = vsel %vm344, %v3397, 0.0
        %3413 = vadd.xlane.f32.xlu0 %v3412
        %v3414 = vpop.xlane.xlu0 %3413
        %v3415 = vsel %vm344, %v3399, 0.0
        %3416 = vadd.xlane.f32.xlu0 %v3415
        %v3417 = vpop.xlane.xlu0 %3416
        %v3418 = vsel %vm344, %v3401, 0.0
        %3419 = vadd.xlane.f32.xlu0 %v3418
        %v3420 = vpop.xlane.xlu0 %3419
        %v3421 = vsel %vm344, %v3403, 0.0
        %3422 = vadd.xlane.f32.xlu0 %v3421
        %v3423 = vpop.xlane.xlu0 %3422
        %v3424 = vsel %vm344, %v3405, 0.0
        %3425 = vadd.xlane.f32.xlu0 %v3424
        %v3426 = vpop.xlane.xlu0 %3425
        %v3427 = vsel %vm344, %v3407, 0.0
        %3428 = vadd.xlane.f32.xlu0 %v3427
        %v3429 = vpop.xlane.xlu0 %3428
        %v3430 = vsel %vm344, %v3409, 0.0
        %3431 = vadd.xlane.f32.xlu0 %v3430
        %v3432 = vpop.xlane.xlu0 %3431
        %v3433 = vsel %vm344, %v3411, 0.0
        %3434 = vadd.xlane.f32.xlu0 %v3433
        %v3435 = vpop.xlane.xlu0 %3434
        %3444 = vrot.lane.b32.xlu0 %v3211, 80
        %v3445 = vpop.permute.xlu0 %3444
        %3446 = vrot.lane.b32.xlu0 %v3212, 80
        %v3447 = vpop.permute.xlu0 %3446
        %3448 = vrot.lane.b32.xlu0 %v3213, 80
        %v3449 = vpop.permute.xlu0 %3448
        %3450 = vrot.lane.b32.xlu0 %v3214, 80
        %v3451 = vpop.permute.xlu0 %3450
        %3452 = vrot.lane.b32.xlu0 %v3215, 80
        %v3453 = vpop.permute.xlu0 %3452
        %3454 = vrot.lane.b32.xlu0 %v3216, 80
        %v3455 = vpop.permute.xlu0 %3454
        %3456 = vrot.lane.b32.xlu0 %v3217, 80
        %v3457 = vpop.permute.xlu0 %3456
        %3458 = vrot.lane.b32.xlu0 %v3218, 80
        %v3459 = vpop.permute.xlu0 %3458
        %v3469 = vsel %vm344, %v3397, 0
        %v3472 = vsel %vm344, %v3399, 0
        %v3475 = vsel %vm344, %v3401, 0
        %v3478 = vsel %vm344, %v3403, 0
        %v3481 = vsel %vm344, %v3405, 0
        %v3484 = vsel %vm344, %v3407, 0
        %v3487 = vsel %vm344, %v3409, 0
        %v3490 = vsel %vm344, %v3411, 0
        %3492 = vmatprep.subr.mxu0 0.0
        %3493 = vmatpush1.msra.mxu0 %v3445
        %3494 = vmatprep.subr.mxu0 0.0
        %3495 = vmatpush1.msra.mxu0 %v3447
        %3496 = vmatprep.subr.mxu0 0.0
        %3497 = vmatpush1.msra.mxu0 %v3449
        %3498 = vmatprep.subr.mxu0 0.0
        %3499 = vmatpush1.msra.mxu0 %v3451
        %3500 = vmatprep.subr.mxu0 0.0
        %3501 = vmatpush1.msra.mxu0 %v3453
        %3502 = vmatprep.subr.mxu0 0.0
        %3503 = vmatpush1.msra.mxu0 %v3455
        %3504 = vmatprep.subr.mxu0 0.0
        %3505 = vmatpush1.msra.mxu0 %v3457
        %3506 = vmatprep.subr.mxu0 0.0
        %3507 = vmatpush1.msra.mxu0 %v3459
        %3508 = vmatprep.subr.mxu0 0.0
        %3509 = vmatpush1.msra.mxu0 0.0
        %3510 = vmatprep.subr.mxu0 0.0
        %3511 = vmatpush1.msra.mxu0 0.0
        %3512 = vmatprep.subr.mxu0 0.0
        %3513 = vmatpush1.msra.mxu0 0.0
        %3514 = vmatprep.subr.mxu0 0.0
        %3515 = vmatpush1.msra.mxu0 0.0
        %3516 = vmatprep.subr.mxu0 0.0
        %3517 = vmatpush1.msra.mxu0 0.0
        %3518 = vmatprep.subr.mxu0 0.0
        %3519 = vmatpush1.msra.mxu0 0.0
        %3520 = vmatprep.subr.mxu0 0.0
        %3521 = vmatpush1.msra.mxu0 0.0
        %3522 = vmatprep.subr.mxu0 0.0
        %3523 = vmatpush1.msra.mxu0 0.0
        %3524 = vmatprep.subr.mxu0 0.0
        %3525 = vmatpush1.msra.mxu0 0.0
        %3526 = vmatprep.subr.mxu0 0.0
        %3527 = vmatpush1.msra.mxu0 0.0
        %3528 = vmatprep.subr.mxu0 0.0
        %3529 = vmatpush1.msra.mxu0 0.0
        %3530 = vmatprep.subr.mxu0 0.0
        %3531 = vmatpush1.msra.mxu0 0.0
        %3532 = vmatprep.subr.mxu0 0.0
        %3533 = vmatpush1.msra.mxu0 0.0
        %3534 = vmatprep.subr.mxu0 0.0
        %3535 = vmatpush1.msra.mxu0 0.0
        %3536 = vmatprep.subr.mxu0 0.0
        %3537 = vmatpush1.msra.mxu0 0.0
        %3538 = vmatprep.subr.mxu0 0.0
        %3539 = vmatpush1.msra.mxu0 0.0
        %3540 = vmatprep.subr.mxu0 0.0
        %3541 = vmatpush1.msra.mxu0 0.0
        %3542 = vmatprep.subr.mxu0 0.0
        %3543 = vmatpush1.msra.mxu0 0.0
        %3544 = vmatprep.subr.mxu0 0.0
        %3545 = vmatpush1.msra.mxu0 0.0
        %3546 = vmatprep.subr.mxu0 0.0
        %3547 = vmatpush1.msra.mxu0 0.0
        %3548 = vmatprep.subr.mxu0 0.0
        %3549 = vmatpush1.msra.mxu0 0.0
        %3550 = vmatprep.subr.mxu0 0.0
        %3551 = vmatpush1.msra.mxu0 0.0
        %3552 = vmatprep.subr.mxu0 0.0
        %3553 = vmatpush1.msra.mxu0 0.0
        %3554 = vmatprep.subr.mxu0 0.0
        %3555 = vmatpush1.msra.mxu0 0.0
        %3556 = vmatprep.mubr.f32.mxu0 0.0
        %3557 = vmatmul.mubr.f32.gmra.mrb[0].mxu0 %v3469
        %v3558 = vpop.f32.mrb[0].mxu0
        %v3559 = vadd.f32 0.0, %v3558
        %v3560 = vpop.f32.mrb[0].mxu0
        %3561 = vmatprep.mubr.f32.mxu0 0.0
        %3562 = vmatmul.mubr.f32.gmra.mrb[0].mxu0 %v3472
        %v3563 = vpop.f32.mrb[0].mxu0
        %v3564 = vadd.f32 0.0, %v3563
        %v3565 = vpop.f32.mrb[0].mxu0
        %3566 = vmatprep.mubr.f32.mxu0 0.0
        %3567 = vmatmul.mubr.f32.gmra.mrb[0].mxu0 %v3475
        %v3568 = vpop.f32.mrb[0].mxu0
        %v3569 = vadd.f32 0.0, %v3568
        %v3570 = vpop.f32.mrb[0].mxu0
        %3571 = vmatprep.mubr.f32.mxu0 0.0
        %3572 = vmatmul.mubr.f32.gmra.mrb[0].mxu0 %v3478
        %v3573 = vpop.f32.mrb[0].mxu0
        %v3574 = vadd.f32 0.0, %v3573
        %v3575 = vpop.f32.mrb[0].mxu0
        %3576 = vmatprep.mubr.f32.mxu0 0.0
        %3577 = vmatmul.mubr.f32.gmra.mrb[0].mxu0 %v3481
        %v3578 = vpop.f32.mrb[0].mxu0
        %v3579 = vadd.f32 0.0, %v3578
        %v3580 = vpop.f32.mrb[0].mxu0
        %3581 = vmatprep.mubr.f32.mxu0 0.0
        %3582 = vmatmul.mubr.f32.gmra.mrb[0].mxu0 %v3484
        %v3583 = vpop.f32.mrb[0].mxu0
        %v3584 = vadd.f32 0.0, %v3583
        %v3585 = vpop.f32.mrb[0].mxu0
        %3586 = vmatprep.mubr.f32.mxu0 0.0
        %3587 = vmatmul.mubr.f32.gmra.mrb[0].mxu0 %v3487
        %v3588 = vpop.f32.mrb[0].mxu0
        %v3589 = vadd.f32 0.0, %v3588
        %v3590 = vpop.f32.mrb[0].mxu0
        %3591 = vmatprep.mubr.f32.mxu0 0.0
        %3592 = vmatmul.mubr.f32.gmra.mrb[0].mxu0 %v3490
        %v3593 = vpop.f32.mrb[0].mxu0
        %v3594 = vadd.f32 0.0, %v3593
        %v3595 = vpop.f32.mrb[0].mxu0
        %3596 = vdwg.mxu0
        %v3597 = vrcp.pop %v3414
        %v3598 = vrcp.pop %v3417
        %v3599 = vrcp.pop %v3420
        %v3600 = vrcp.pop %v3423
        %v3601 = vrcp.pop %v3426
        %v3602 = vrcp.pop %v3429
        %v3603 = vrcp.pop %v3432
        %v3604 = vrcp.pop %v3435
        %v3605 = vmul.f32 %v3559, %v3597
        %v3606 = vmul.f32 %v3564, %v3598
        %v3607 = vmul.f32 %v3569, %v3599
        %v3608 = vmul.f32 %v3574, %v3600
        %v3609 = vmul.f32 %v3579, %v3601
        %v3610 = vmul.f32 %v3584, %v3602
        %v3611 = vmul.f32 %v3589, %v3603
        %v3612 = vmul.f32 %v3594, %v3604
        %3621 = vrot.lane.b32.xlu0 %v3605, 48
        %v3622 = vpop.permute.xlu0 %3621
        %3623 = vrot.lane.b32.xlu0 %v3606, 48
        %v3624 = vpop.permute.xlu0 %3623
        %3625 = vrot.lane.b32.xlu0 %v3607, 48
        %v3626 = vpop.permute.xlu0 %3625
        %3627 = vrot.lane.b32.xlu0 %v3608, 48
        %v3628 = vpop.permute.xlu0 %3627
        %3629 = vrot.lane.b32.xlu0 %v3609, 48
        %v3630 = vpop.permute.xlu0 %3629
        %3631 = vrot.lane.b32.xlu0 %v3610, 48
        %v3632 = vpop.permute.xlu0 %3631
        %3633 = vrot.lane.b32.xlu0 %v3611, 48
        %v3634 = vpop.permute.xlu0 %3633
        %3635 = vrot.lane.b32.xlu0 %v3612, 48
        %v3636 = vpop.permute.xlu0 %3635
        %vm3645 = vcmask 458112
        %3646 = vst.msk [vmem:[#allocation4] sm:$0xff] %vm3645, %v3622
        %3647 = vst.msk [vmem:[#allocation4 + $0x8] sm:$0xff] %vm3645, %v3624
        %3648 = vst.msk [vmem:[#allocation4 + $0x10] sm:$0xff] %vm3645, %v3626
        %3649 = vst.msk [vmem:[#allocation4 + $0x18] sm:$0xff] %vm3645, %v3628
        %3650 = vst.msk [vmem:[#allocation4 + $0x20] sm:$0xff] %vm3645, %v3630
        %3651 = vst.msk [vmem:[#allocation4 + $0x28] sm:$0xff] %vm3645, %v3632
        %3652 = vst.msk [vmem:[#allocation4 + $0x30] sm:$0xff] %vm3645, %v3634
        %3653 = vst.msk [vmem:[#allocation4 + $0x38] sm:$0xff] %vm3645, %v3636
        %v3654 = vld [vmem:[#allocation2] sm:$0xff]
        %v3655 = vld [vmem:[#allocation2 + $0x10] sm:$0xff]
        %v3656 = vld [vmem:[#allocation2 + $0x20] sm:$0xff]
        %v3657 = vld [vmem:[#allocation2 + $0x30] sm:$0xff]
        %v3658 = vld [vmem:[#allocation2 + $0x40] sm:$0xff]
        %v3659 = vld [vmem:[#allocation2 + $0x50] sm:$0xff]
        %v3660 = vld [vmem:[#allocation2 + $0x60] sm:$0xff]
        %v3661 = vld [vmem:[#allocation2 + $0x70] sm:$0xff]
        %v3662 = vld [vmem:[#allocation3 + $0x38] sm:$0xff]
        %v3663 = vld [vmem:[#allocation2 + $0x8] sm:$0xff]
        %v3664 = vld [vmem:[#allocation2 + $0x18] sm:$0xff]
        %v3665 = vld [vmem:[#allocation2 + $0x28] sm:$0xff]
        %v3666 = vld [vmem:[#allocation2 + $0x38] sm:$0xff]
        %v3667 = vld [vmem:[#allocation2 + $0x48] sm:$0xff]
        %v3668 = vld [vmem:[#allocation2 + $0x58] sm:$0xff]
        %v3669 = vld [vmem:[#allocation2 + $0x68] sm:$0xff]
        %v3670 = vld [vmem:[#allocation2 + $0x78] sm:$0xff]
        %3679 = vrot.lane.b32.xlu0 %v3654, 72
        %v3680 = vpop.permute.xlu0 %3679
        %3681 = vrot.lane.b32.xlu0 %v3655, 72
        %v3682 = vpop.permute.xlu0 %3681
        %3683 = vrot.lane.b32.xlu0 %v3656, 72
        %v3684 = vpop.permute.xlu0 %3683
        %3685 = vrot.lane.b32.xlu0 %v3657, 72
        %v3686 = vpop.permute.xlu0 %3685
        %3687 = vrot.lane.b32.xlu0 %v3658, 72
        %v3688 = vpop.permute.xlu0 %3687
        %3689 = vrot.lane.b32.xlu0 %v3659, 72
        %v3690 = vpop.permute.xlu0 %3689
        %3691 = vrot.lane.b32.xlu0 %v3660, 72
        %v3692 = vpop.permute.xlu0 %3691
        %3693 = vrot.lane.b32.xlu0 %v3661, 72
        %v3694 = vpop.permute.xlu0 %3693
        %v3695 = vsel %vm587, %v3680, 0
        %v3697 = vsel %vm587, %v3682, 0
        %v3699 = vsel %vm587, %v3684, 0
        %v3701 = vsel %vm587, %v3686, 0
        %v3703 = vsel %vm587, %v3688, 0
        %v3705 = vsel %vm587, %v3690, 0
        %v3707 = vsel %vm587, %v3692, 0
        %v3709 = vsel %vm587, %v3694, 0
        %3711 = vmatprep.subr.mxu0 0.0
        %3712 = vmatpush1.msra.mxu0 %v3662
        %3713 = vmatprep.subr.mxu0 0.0
        %3714 = vmatpush1.msra.mxu0 0.0
        %3715 = vmatprep.subr.mxu0 0.0
        %3716 = vmatpush1.msra.mxu0 0.0
        %3717 = vmatprep.subr.mxu0 0.0
        %3718 = vmatpush1.msra.mxu0 0.0
        %3719 = vmatprep.subr.mxu0 0.0
        %3720 = vmatpush1.msra.mxu0 0.0
        %3721 = vmatprep.subr.mxu0 0.0
        %3722 = vmatpush1.msra.mxu0 0.0
        %3723 = vmatprep.subr.mxu0 0.0
        %3724 = vmatpush1.msra.mxu0 0.0
        %3725 = vmatprep.subr.mxu0 0.0
        %3726 = vmatpush1.msra.mxu0 0.0
        %3727 = vmatprep.subr.mxu0 0.0
        %3728 = vmatpush1.msra.mxu0 0.0
        %3729 = vmatprep.subr.mxu0 0.0
        %3730 = vmatpush1.msra.mxu0 0.0
        %3731 = vmatprep.subr.mxu0 0.0
        %3732 = vmatpush1.msra.mxu0 0.0
        %3733 = vmatprep.subr.mxu0 0.0
        %3734 = vmatpush1.msra.mxu0 0.0
        %3735 = vmatprep.subr.mxu0 0.0
        %3736 = vmatpush1.msra.mxu0 0.0
        %3737 = vmatprep.subr.mxu0 0.0
        %3738 = vmatpush1.msra.mxu0 0.0
        %3739 = vmatprep.subr.mxu0 0.0
        %3740 = vmatpush1.msra.mxu0 0.0
        %3741 = vmatprep.subr.mxu0 0.0
        %3742 = vmatpush1.msra.mxu0 0.0
        %3743 = vmatprep.subr.mxu0 0.0
        %3744 = vmatpush1.msra.mxu0 0.0
        %3745 = vmatprep.subr.mxu0 0.0
        %3746 = vmatpush1.msra.mxu0 0.0
        %3747 = vmatprep.subr.mxu0 0.0
        %3748 = vmatpush1.msra.mxu0 0.0
        %3749 = vmatprep.subr.mxu0 0.0
        %3750 = vmatpush1.msra.mxu0 0.0
        %3751 = vmatprep.subr.mxu0 0.0
        %3752 = vmatpush1.msra.mxu0 0.0
        %3753 = vmatprep.subr.mxu0 0.0
        %3754 = vmatpush1.msra.mxu0 0.0
        %3755 = vmatprep.subr.mxu0 0.0
        %3756 = vmatpush1.msra.mxu0 0.0
        %3757 = vmatprep.subr.mxu0 0.0
        %3758 = vmatpush1.msra.mxu0 0.0
        %3759 = vmatprep.subr.mxu0 0.0
        %3760 = vmatpush1.msra.mxu0 0.0
        %3761 = vmatprep.subr.mxu0 0.0
        %3762 = vmatpush1.msra.mxu0 0.0
        %3763 = vmatprep.subr.mxu0 0.0
        %3764 = vmatpush1.msra.mxu0 0.0
        %3765 = vmatprep.subr.mxu0 0.0
        %3766 = vmatpush1.msra.mxu0 0.0
        %3767 = vmatprep.subr.mxu0 0.0
        %3768 = vmatpush1.msra.mxu0 0.0
        %3769 = vmatprep.subr.mxu0 0.0
        %3770 = vmatpush1.msra.mxu0 0.0
        %3771 = vmatprep.subr.mxu0 0.0
        %3772 = vmatpush1.msra.mxu0 0.0
        %3773 = vmatprep.subr.mxu0 0.0
        %3774 = vmatpush1.msra.mxu0 0.0
        %3775 = vmatprep.mubr.f32.mxu0 0.0
        %3776 = vmatmul.mubr.f32.gmra.mrb[0].mxu0 %v3695
        %v3777 = vpop.f32.mrb[0].mxu0
        %v3778 = vadd.f32 0.0, %v3777
        %v3779 = vpop.f32.mrb[0].mxu0
        %3780 = vmatprep.mubr.f32.mxu0 0.0
        %3781 = vmatmul.mubr.f32.gmra.mrb[0].mxu0 %v3697
        %v3782 = vpop.f32.mrb[0].mxu0
        %v3783 = vadd.f32 0.0, %v3782
        %v3784 = vpop.f32.mrb[0].mxu0
        %3785 = vmatprep.mubr.f32.mxu0 0.0
        %3786 = vmatmul.mubr.f32.gmra.mrb[0].mxu0 %v3699
        %v3787 = vpop.f32.mrb[0].mxu0
        %v3788 = vadd.f32 0.0, %v3787
        %v3789 = vpop.f32.mrb[0].mxu0
        %3790 = vmatprep.mubr.f32.mxu0 0.0
        %3791 = vmatmul.mubr.f32.gmra.mrb[0].mxu0 %v3701
        %v3792 = vpop.f32.mrb[0].mxu0
        %v3793 = vadd.f32 0.0, %v3792
        %v3794 = vpop.f32.mrb[0].mxu0
        %3795 = vmatprep.mubr.f32.mxu0 0.0
        %3796 = vmatmul.mubr.f32.gmra.mrb[0].mxu0 %v3703
        %v3797 = vpop.f32.mrb[0].mxu0
        %v3798 = vadd.f32 0.0, %v3797
        %v3799 = vpop.f32.mrb[0].mxu0
        %3800 = vmatprep.mubr.f32.mxu0 0.0
        %3801 = vmatmul.mubr.f32.gmra.mrb[0].mxu0 %v3705
        %v3802 = vpop.f32.mrb[0].mxu0
        %v3803 = vadd.f32 0.0, %v3802
        %v3804 = vpop.f32.mrb[0].mxu0
        %3805 = vmatprep.mubr.f32.mxu0 0.0
        %3806 = vmatmul.mubr.f32.gmra.mrb[0].mxu0 %v3707
        %v3807 = vpop.f32.mrb[0].mxu0
        %v3808 = vadd.f32 0.0, %v3807
        %v3809 = vpop.f32.mrb[0].mxu0
        %3810 = vmatprep.mubr.f32.mxu0 0.0
        %3811 = vmatmul.mubr.f32.gmra.mrb[0].mxu0 %v3709
        %v3812 = vpop.f32.mrb[0].mxu0
        %v3813 = vadd.f32 0.0, %v3812
        %v3814 = vpop.f32.mrb[0].mxu0
        %3815 = vdwg.mxu0
        %v3816 = vsel %vm344, %v3778, -inf
        %3817 = vmax.xlane.f32.xlu0 %v3816
        %v3818 = vpop.xlane.xlu0 %3817
        %v3819 = vsel %vm344, %v3783, -inf
        %3820 = vmax.xlane.f32.xlu0 %v3819
        %v3821 = vpop.xlane.xlu0 %3820
        %v3822 = vsel %vm344, %v3788, -inf
        %3823 = vmax.xlane.f32.xlu0 %v3822
        %v3824 = vpop.xlane.xlu0 %3823
        %v3825 = vsel %vm344, %v3793, -inf
        %3826 = vmax.xlane.f32.xlu0 %v3825
        %v3827 = vpop.xlane.xlu0 %3826
        %v3828 = vsel %vm344, %v3798, -inf
        %3829 = vmax.xlane.f32.xlu0 %v3828
        %v3830 = vpop.xlane.xlu0 %3829
        %v3831 = vsel %vm344, %v3803, -inf
        %3832 = vmax.xlane.f32.xlu0 %v3831
        %v3833 = vpop.xlane.xlu0 %3832
        %v3834 = vsel %vm344, %v3808, -inf
        %3835 = vmax.xlane.f32.xlu0 %v3834
        %v3836 = vpop.xlane.xlu0 %3835
        %v3837 = vsel %vm344, %v3813, -inf
        %3838 = vmax.xlane.f32.xlu0 %v3837
        %v3839 = vpop.xlane.xlu0 %3838
        %v3840 = vsub.f32 %v3778, %v3818
        %v3841 = vsub.f32 %v3783, %v3821
        %v3842 = vsub.f32 %v3788, %v3824
        %v3843 = vsub.f32 %v3793, %v3827
        %v3844 = vsub.f32 %v3798, %v3830
        %v3845 = vsub.f32 %v3803, %v3833
        %v3846 = vsub.f32 %v3808, %v3836
        %v3847 = vsub.f32 %v3813, %v3839
        %v3848 = vmul.f32 %v3840, 1.442695
        %v3849 = vpow.pop %v3848
        %v3850 = vmul.f32 %v3841, 1.442695
        %v3851 = vpow.pop %v3850
        %v3852 = vmul.f32 %v3842, 1.442695
        %v3853 = vpow.pop %v3852
        %v3854 = vmul.f32 %v3843, 1.442695
        %v3855 = vpow.pop %v3854
        %v3856 = vmul.f32 %v3844, 1.442695
        %v3857 = vpow.pop %v3856
        %v3858 = vmul.f32 %v3845, 1.442695
        %v3859 = vpow.pop %v3858
        %v3860 = vmul.f32 %v3846, 1.442695
        %v3861 = vpow.pop %v3860
        %v3862 = vmul.f32 %v3847, 1.442695
        %v3863 = vpow.pop %v3862
        %v3864 = vsel %vm344, %v3849, 0.0
        %3865 = vadd.xlane.f32.xlu0 %v3864
        %v3866 = vpop.xlane.xlu0 %3865
        %v3867 = vsel %vm344, %v3851, 0.0
        %3868 = vadd.xlane.f32.xlu0 %v3867
        %v3869 = vpop.xlane.xlu0 %3868
        %v3870 = vsel %vm344, %v3853, 0.0
        %3871 = vadd.xlane.f32.xlu0 %v3870
        %v3872 = vpop.xlane.xlu0 %3871
        %v3873 = vsel %vm344, %v3855, 0.0
        %3874 = vadd.xlane.f32.xlu0 %v3873
        %v3875 = vpop.xlane.xlu0 %3874
        %v3876 = vsel %vm344, %v3857, 0.0
        %3877 = vadd.xlane.f32.xlu0 %v3876
        %v3878 = vpop.xlane.xlu0 %3877
        %v3879 = vsel %vm344, %v3859, 0.0
        %3880 = vadd.xlane.f32.xlu0 %v3879
        %v3881 = vpop.xlane.xlu0 %3880
        %v3882 = vsel %vm344, %v3861, 0.0
        %3883 = vadd.xlane.f32.xlu0 %v3882
        %v3884 = vpop.xlane.xlu0 %3883
        %v3885 = vsel %vm344, %v3863, 0.0
        %3886 = vadd.xlane.f32.xlu0 %v3885
        %v3887 = vpop.xlane.xlu0 %3886
        %3896 = vrot.lane.b32.xlu0 %v3663, 72
        %v3897 = vpop.permute.xlu0 %3896
        %3898 = vrot.lane.b32.xlu0 %v3664, 72
        %v3899 = vpop.permute.xlu0 %3898
        %3900 = vrot.lane.b32.xlu0 %v3665, 72
        %v3901 = vpop.permute.xlu0 %3900
        %3902 = vrot.lane.b32.xlu0 %v3666, 72
        %v3903 = vpop.permute.xlu0 %3902
        %3904 = vrot.lane.b32.xlu0 %v3667, 72
        %v3905 = vpop.permute.xlu0 %3904
        %3906 = vrot.lane.b32.xlu0 %v3668, 72
        %v3907 = vpop.permute.xlu0 %3906
        %3908 = vrot.lane.b32.xlu0 %v3669, 72
        %v3909 = vpop.permute.xlu0 %3908
        %3910 = vrot.lane.b32.xlu0 %v3670, 72
        %v3911 = vpop.permute.xlu0 %3910
        %v3921 = vsel %vm344, %v3849, 0
        %v3924 = vsel %vm344, %v3851, 0
        %v3927 = vsel %vm344, %v3853, 0
        %v3930 = vsel %vm344, %v3855, 0
        %v3933 = vsel %vm344, %v3857, 0
        %v3936 = vsel %vm344, %v3859, 0
        %v3939 = vsel %vm344, %v3861, 0
        %v3942 = vsel %vm344, %v3863, 0
        %3944 = vmatprep.subr.mxu0 0.0
        %3945 = vmatpush1.msra.mxu0 %v3897
        %3946 = vmatprep.subr.mxu0 0.0
        %3947 = vmatpush1.msra.mxu0 %v3899
        %3948 = vmatprep.subr.mxu0 0.0
        %3949 = vmatpush1.msra.mxu0 %v3901
        %3950 = vmatprep.subr.mxu0 0.0
        %3951 = vmatpush1.msra.mxu0 %v3903
        %3952 = vmatprep.subr.mxu0 0.0
        %3953 = vmatpush1.msra.mxu0 %v3905
        %3954 = vmatprep.subr.mxu0 0.0
        %3955 = vmatpush1.msra.mxu0 %v3907
        %3956 = vmatprep.subr.mxu0 0.0
        %3957 = vmatpush1.msra.mxu0 %v3909
        %3958 = vmatprep.subr.mxu0 0.0
        %3959 = vmatpush1.msra.mxu0 %v3911
        %3960 = vmatprep.subr.mxu0 0.0
        %3961 = vmatpush1.msra.mxu0 0.0
        %3962 = vmatprep.subr.mxu0 0.0
        %3963 = vmatpush1.msra.mxu0 0.0
        %3964 = vmatprep.subr.mxu0 0.0
        %3965 = vmatpush1.msra.mxu0 0.0
        %3966 = vmatprep.subr.mxu0 0.0
        %3967 = vmatpush1.msra.mxu0 0.0
        %3968 = vmatprep.subr.mxu0 0.0
        %3969 = vmatpush1.msra.mxu0 0.0
        %3970 = vmatprep.subr.mxu0 0.0
        %3971 = vmatpush1.msra.mxu0 0.0
        %3972 = vmatprep.subr.mxu0 0.0
        %3973 = vmatpush1.msra.mxu0 0.0
        %3974 = vmatprep.subr.mxu0 0.0
        %3975 = vmatpush1.msra.mxu0 0.0
        %3976 = vmatprep.subr.mxu0 0.0
        %3977 = vmatpush1.msra.mxu0 0.0
        %3978 = vmatprep.subr.mxu0 0.0
        %3979 = vmatpush1.msra.mxu0 0.0
        %3980 = vmatprep.subr.mxu0 0.0
        %3981 = vmatpush1.msra.mxu0 0.0
        %3982 = vmatprep.subr.mxu0 0.0
        %3983 = vmatpush1.msra.mxu0 0.0
        %3984 = vmatprep.subr.mxu0 0.0
        %3985 = vmatpush1.msra.mxu0 0.0
        %3986 = vmatprep.subr.mxu0 0.0
        %3987 = vmatpush1.msra.mxu0 0.0
        %3988 = vmatprep.subr.mxu0 0.0
        %3989 = vmatpush1.msra.mxu0 0.0
        %3990 = vmatprep.subr.mxu0 0.0
        %3991 = vmatpush1.msra.mxu0 0.0
        %3992 = vmatprep.subr.mxu0 0.0
        %3993 = vmatpush1.msra.mxu0 0.0
        %3994 = vmatprep.subr.mxu0 0.0
        %3995 = vmatpush1.msra.mxu0 0.0
        %3996 = vmatprep.subr.mxu0 0.0
        %3997 = vmatpush1.msra.mxu0 0.0
        %3998 = vmatprep.subr.mxu0 0.0
        %3999 = vmatpush1.msra.mxu0 0.0
        %4000 = vmatprep.subr.mxu0 0.0
        %4001 = vmatpush1.msra.mxu0 0.0
        %4002 = vmatprep.subr.mxu0 0.0
        %4003 = vmatpush1.msra.mxu0 0.0
        %4004 = vmatprep.subr.mxu0 0.0
        %4005 = vmatpush1.msra.mxu0 0.0
        %4006 = vmatprep.subr.mxu0 0.0
        %4007 = vmatpush1.msra.mxu0 0.0
        %4008 = vmatprep.mubr.f32.mxu0 0.0
        %4009 = vmatmul.mubr.f32.gmra.mrb[0].mxu0 %v3921
        %v4010 = vpop.f32.mrb[0].mxu0
        %v4011 = vadd.f32 0.0, %v4010
        %v4012 = vpop.f32.mrb[0].mxu0
        %4013 = vmatprep.mubr.f32.mxu0 0.0
        %4014 = vmatmul.mubr.f32.gmra.mrb[0].mxu0 %v3924
        %v4015 = vpop.f32.mrb[0].mxu0
        %v4016 = vadd.f32 0.0, %v4015
        %v4017 = vpop.f32.mrb[0].mxu0
        %4018 = vmatprep.mubr.f32.mxu0 0.0
        %4019 = vmatmul.mubr.f32.gmra.mrb[0].mxu0 %v3927
        %v4020 = vpop.f32.mrb[0].mxu0
        %v4021 = vadd.f32 0.0, %v4020
        %v4022 = vpop.f32.mrb[0].mxu0
        %4023 = vmatprep.mubr.f32.mxu0 0.0
        %4024 = vmatmul.mubr.f32.gmra.mrb[0].mxu0 %v3930
        %v4025 = vpop.f32.mrb[0].mxu0
        %v4026 = vadd.f32 0.0, %v4025
        %v4027 = vpop.f32.mrb[0].mxu0
        %4028 = vmatprep.mubr.f32.mxu0 0.0
        %4029 = vmatmul.mubr.f32.gmra.mrb[0].mxu0 %v3933
        %v4030 = vpop.f32.mrb[0].mxu0
        %v4031 = vadd.f32 0.0, %v4030
        %v4032 = vpop.f32.mrb[0].mxu0
        %4033 = vmatprep.mubr.f32.mxu0 0.0
        %4034 = vmatmul.mubr.f32.gmra.mrb[0].mxu0 %v3936
        %v4035 = vpop.f32.mrb[0].mxu0
        %v4036 = vadd.f32 0.0, %v4035
        %v4037 = vpop.f32.mrb[0].mxu0
        %4038 = vmatprep.mubr.f32.mxu0 0.0
        %4039 = vmatmul.mubr.f32.gmra.mrb[0].mxu0 %v3939
        %v4040 = vpop.f32.mrb[0].mxu0
        %v4041 = vadd.f32 0.0, %v4040
        %v4042 = vpop.f32.mrb[0].mxu0
        %4043 = vmatprep.mubr.f32.mxu0 0.0
        %4044 = vmatmul.mubr.f32.gmra.mrb[0].mxu0 %v3942
        %v4045 = vpop.f32.mrb[0].mxu0
        %v4046 = vadd.f32 0.0, %v4045
        %v4047 = vpop.f32.mrb[0].mxu0
        %4048 = vdwg.mxu0
        %v4049 = vrcp.pop %v3866
        %v4050 = vrcp.pop %v3869
        %v4051 = vrcp.pop %v3872
        %v4052 = vrcp.pop %v3875
        %v4053 = vrcp.pop %v3878
        %v4054 = vrcp.pop %v3881
        %v4055 = vrcp.pop %v3884
        %v4056 = vrcp.pop %v3887
        %v4057 = vmul.f32 %v4011, %v4049
        %v4058 = vmul.f32 %v4016, %v4050
        %v4059 = vmul.f32 %v4021, %v4051
        %v4060 = vmul.f32 %v4026, %v4052
        %v4061 = vmul.f32 %v4031, %v4053
        %v4062 = vmul.f32 %v4036, %v4054
        %v4063 = vmul.f32 %v4041, %v4055
        %v4064 = vmul.f32 %v4046, %v4056
        %4073 = vrot.lane.b32.xlu0 %v4057, 56
        %v4074 = vpop.permute.xlu0 %4073
        %4075 = vrot.lane.b32.xlu0 %v4058, 56
        %v4076 = vpop.permute.xlu0 %4075
        %4077 = vrot.lane.b32.xlu0 %v4059, 56
        %v4078 = vpop.permute.xlu0 %4077
        %4079 = vrot.lane.b32.xlu0 %v4060, 56
        %v4080 = vpop.permute.xlu0 %4079
        %4081 = vrot.lane.b32.xlu0 %v4061, 56
        %v4082 = vpop.permute.xlu0 %4081
        %4083 = vrot.lane.b32.xlu0 %v4062, 56
        %v4084 = vpop.permute.xlu0 %4083
        %4085 = vrot.lane.b32.xlu0 %v4063, 56
        %v4086 = vpop.permute.xlu0 %4085
        %4087 = vrot.lane.b32.xlu0 %v4064, 56
        %v4088 = vpop.permute.xlu0 %4087
        %vm4097 = vcmask 523712
        %4098 = vst.msk [vmem:[#allocation4] sm:$0xff] %vm4097, %v4074
        %4099 = vst.msk [vmem:[#allocation4 + $0x8] sm:$0xff] %vm4097, %v4076
        %4100 = vst.msk [vmem:[#allocation4 + $0x10] sm:$0xff] %vm4097, %v4078
        %4101 = vst.msk [vmem:[#allocation4 + $0x18] sm:$0xff] %vm4097, %v4080
        %4102 = vst.msk [vmem:[#allocation4 + $0x20] sm:$0xff] %vm4097, %v4082
        %4103 = vst.msk [vmem:[#allocation4 + $0x28] sm:$0xff] %vm4097, %v4084
        %4104 = vst.msk [vmem:[#allocation4 + $0x30] sm:$0xff] %vm4097, %v4086
        %4105 = vst.msk [vmem:[#allocation4 + $0x38] sm:$0xff] %vm4097, %v4088
        %v4106 = vld [vmem:[#allocation4] sm:$0xff]
        %v4107 = vld [vmem:[#allocation4 + $0x8] sm:$0xff]
        %v4108 = vld [vmem:[#allocation4 + $0x10] sm:$0xff]
        %v4109 = vld [vmem:[#allocation4 + $0x18] sm:$0xff]
        %v4110 = vld [vmem:[#allocation4 + $0x20] sm:$0xff]
        %v4111 = vld [vmem:[#allocation4 + $0x28] sm:$0xff]
        %v4112 = vld [vmem:[#allocation4 + $0x30] sm:$0xff]
        %v4113 = vld [vmem:[#allocation4 + $0x38] sm:$0xff]
        %v4114 = vsel %vm344, %v4106, 0.0
        %4115 = vadd.xlane.f32.xlu0 %v4114
        %v4116 = vpop.xlane.xlu0 %4115
        %v4117 = vsel %vm344, %v4107, 0.0
        %4118 = vadd.xlane.f32.xlu0 %v4117
        %v4119 = vpop.xlane.xlu0 %4118
        %v4120 = vsel %vm344, %v4108, 0.0
        %4121 = vadd.xlane.f32.xlu0 %v4120
        %v4122 = vpop.xlane.xlu0 %4121
        %v4123 = vsel %vm344, %v4109, 0.0
        %4124 = vadd.xlane.f32.xlu0 %v4123
        %v4125 = vpop.xlane.xlu0 %4124
        %v4126 = vsel %vm344, %v4110, 0.0
        %4127 = vadd.xlane.f32.xlu0 %v4126
        %v4128 = vpop.xlane.xlu0 %4127
        %v4129 = vsel %vm344, %v4111, 0.0
        %4130 = vadd.xlane.f32.xlu0 %v4129
        %v4131 = vpop.xlane.xlu0 %4130
        %v4132 = vsel %vm344, %v4112, 0.0
        %4133 = vadd.xlane.f32.xlu0 %v4132
        %v4134 = vpop.xlane.xlu0 %4133
        %v4135 = vsel %vm344, %v4113, 0.0
        %4136 = vadd.xlane.f32.xlu0 %v4135
        %v4137 = vpop.xlane.xlu0 %4136
        %v4138 = vrcp.pop 64.0
        %v4139 = vmul.f32 %v4116, %v4138
        %v4140 = vmul.f32 %v4119, %v4138
        %v4141 = vmul.f32 %v4122, %v4138
        %v4142 = vmul.f32 %v4125, %v4138
        %v4143 = vmul.f32 %v4128, %v4138
        %v4144 = vmul.f32 %v4131, %v4138
        %v4145 = vmul.f32 %v4134, %v4138
        %v4146 = vmul.f32 %v4137, %v4138
        %v4147 = vsub.f32 %v4106, %v4139
        %v4148 = vsub.f32 %v4107, %v4140
        %v4149 = vsub.f32 %v4108, %v4141
        %v4150 = vsub.f32 %v4109, %v4142
        %v4151 = vsub.f32 %v4110, %v4143
        %v4152 = vsub.f32 %v4111, %v4144
        %v4153 = vsub.f32 %v4112, %v4145
        %v4154 = vsub.f32 %v4113, %v4146
        %v4155 = vmul.f32 %v4147, %v4147
        %v4156 = vmul.f32 %v4148, %v4148
        %v4157 = vmul.f32 %v4149, %v4149
        %v4158 = vmul.f32 %v4150, %v4150
        %v4159 = vmul.f32 %v4151, %v4151
        %v4160 = vmul.f32 %v4152, %v4152
        %v4161 = vmul.f32 %v4153, %v4153
        %v4162 = vmul.f32 %v4154, %v4154
        %v4163 = vsel %vm344, %v4155, 0.0
        %4164 = vadd.xlane.f32.xlu0 %v4163
        %v4165 = vpop.xlane.xlu0 %4164
        %v4166 = vsel %vm344, %v4156, 0.0
        %4167 = vadd.xlane.f32.xlu0 %v4166
        %v4168 = vpop.xlane.xlu0 %4167
        %v4169 = vsel %vm344, %v4157, 0.0
        %4170 = vadd.xlane.f32.xlu0 %v4169
        %v4171 = vpop.xlane.xlu0 %4170
        %v4172 = vsel %vm344, %v4158, 0.0
        %4173 = vadd.xlane.f32.xlu0 %v4172
        %v4174 = vpop.xlane.xlu0 %4173
        %v4175 = vsel %vm344, %v4159, 0.0
        %4176 = vadd.xlane.f32.xlu0 %v4175
        %v4177 = vpop.xlane.xlu0 %4176
        %v4178 = vsel %vm344, %v4160, 0.0
        %4179 = vadd.xlane.f32.xlu0 %v4178
        %v4180 = vpop.xlane.xlu0 %4179
        %v4181 = vsel %vm344, %v4161, 0.0
        %4182 = vadd.xlane.f32.xlu0 %v4181
        %v4183 = vpop.xlane.xlu0 %4182
        %v4184 = vsel %vm344, %v4162, 0.0
        %4185 = vadd.xlane.f32.xlu0 %v4184
        %v4186 = vpop.xlane.xlu0 %4185
        %v4187 = vmul.f32 %v4165, %v4138
        %v4188 = vmul.f32 %v4168, %v4138
        %v4189 = vmul.f32 %v4171, %v4138
        %v4190 = vmul.f32 %v4174, %v4138
        %v4191 = vmul.f32 %v4177, %v4138
        %v4192 = vmul.f32 %v4180, %v4138
        %v4193 = vmul.f32 %v4183, %v4138
        %v4194 = vmul.f32 %v4186, %v4138
        %v4195 = vadd.f32 %v4187, 1e-05
        %v4196 = vadd.f32 %v4188, 1e-05
        %v4197 = vadd.f32 %v4189, 1e-05
        %v4198 = vadd.f32 %v4190, 1e-05
        %v4199 = vadd.f32 %v4191, 1e-05
        %v4200 = vadd.f32 %v4192, 1e-05
        %v4201 = vadd.f32 %v4193, 1e-05
        %v4202 = vadd.f32 %v4194, 1e-05
        %v4203 = vrsqrt.pop %v4195
        %v4204 = vrsqrt.pop %v4196
        %v4205 = vrsqrt.pop %v4197
        %v4206 = vrsqrt.pop %v4198
        %v4207 = vrsqrt.pop %v4199
        %v4208 = vrsqrt.pop %v4200
        %v4209 = vrsqrt.pop %v4201
        %v4210 = vrsqrt.pop %v4202
        %v4211 = vmul.f32 %v4147, %v4203
        %v4212 = vmul.f32 %v4148, %v4204
        %v4213 = vmul.f32 %v4149, %v4205
        %v4214 = vmul.f32 %v4150, %v4206
        %v4215 = vmul.f32 %v4151, %v4207
        %v4216 = vmul.f32 %v4152, %v4208
        %v4217 = vmul.f32 %v4153, %v4209
        %v4218 = vmul.f32 %v4154, %v4210
        %v4219 = vld [vmem:[%s3] sm:$0x1]
        %v4221 = vlaneseq
        %v4222 = vshrl.u32 %v4221, 7
        %v4223 = vsub.s32 0, %v4222
        %v4224 = vrot.slane %v4219, %v4223
        %v4226 = vmul.f32 %v4211, %v4224
        %v4227 = vmul.f32 %v4212, %v4224
        %v4228 = vmul.f32 %v4213, %v4224
        %v4229 = vmul.f32 %v4214, %v4224
        %v4230 = vmul.f32 %v4215, %v4224
        %v4231 = vmul.f32 %v4216, %v4224
        %v4232 = vmul.f32 %v4217, %v4224
        %v4233 = vmul.f32 %v4218, %v4224
        %v4234 = vld [vmem:[%s4] sm:$0x1]
        %v4236 = vlaneseq
        %v4237 = vshrl.u32 %v4236, 7
        %v4238 = vsub.s32 0, %v4237
        %v4239 = vrot.slane %v4234, %v4238
        %v4241 = vadd.f32 %v4226, %v4239
        %v4242 = vadd.f32 %v4227, %v4239
        %v4243 = vadd.f32 %v4228, %v4239
        %v4244 = vadd.f32 %v4229, %v4239
        %v4245 = vadd.f32 %v4230, %v4239
        %v4246 = vadd.f32 %v4231, %v4239
        %v4247 = vadd.f32 %v4232, %v4239
        %v4248 = vadd.f32 %v4233, %v4239
        %v4249 = vxor.u32 %v4241, 2147483648
        %v4250 = vxor.u32 %v4242, 2147483648
        %v4251 = vxor.u32 %v4243, 2147483648
        %v4252 = vxor.u32 %v4244, 2147483648
        %v4253 = vxor.u32 %v4245, 2147483648
        %v4254 = vxor.u32 %v4246, 2147483648
        %v4255 = vxor.u32 %v4247, 2147483648
        %v4256 = vxor.u32 %v4248, 2147483648
        %v4257 = vmul.f32 %v4249, 1.442695
        %v4258 = vpow.pop %v4257
        %v4259 = vmul.f32 %v4250, 1.442695
        %v4260 = vpow.pop %v4259
        %v4261 = vmul.f32 %v4251, 1.442695
        %v4262 = vpow.pop %v4261
        %v4263 = vmul.f32 %v4252, 1.442695
        %v4264 = vpow.pop %v4263
        %v4265 = vmul.f32 %v4253, 1.442695
        %v4266 = vpow.pop %v4265
        %v4267 = vmul.f32 %v4254, 1.442695
        %v4268 = vpow.pop %v4267
        %v4269 = vmul.f32 %v4255, 1.442695
        %v4270 = vpow.pop %v4269
        %v4271 = vmul.f32 %v4256, 1.442695
        %v4272 = vpow.pop %v4271
        %v4273 = vadd.f32 %v4258, 1.0
        %v4274 = vadd.f32 %v4260, 1.0
        %v4275 = vadd.f32 %v4262, 1.0
        %v4276 = vadd.f32 %v4264, 1.0
        %v4277 = vadd.f32 %v4266, 1.0
        %v4278 = vadd.f32 %v4268, 1.0
        %v4279 = vadd.f32 %v4270, 1.0
        %v4280 = vadd.f32 %v4272, 1.0
        %v4281 = vrcp.pop %v4273
        %v4282 = vmul.f32 1.0, %v4281
        %v4283 = vrcp.pop %v4274
        %v4284 = vmul.f32 1.0, %v4283
        %v4285 = vrcp.pop %v4275
        %v4286 = vmul.f32 1.0, %v4285
        %v4287 = vrcp.pop %v4276
        %v4288 = vmul.f32 1.0, %v4287
        %v4289 = vrcp.pop %v4277
        %v4290 = vmul.f32 1.0, %v4289
        %v4291 = vrcp.pop %v4278
        %v4292 = vmul.f32 1.0, %v4291
        %v4293 = vrcp.pop %v4279
        %v4294 = vmul.f32 1.0, %v4293
        %v4295 = vrcp.pop %v4280
        %v4296 = vmul.f32 1.0, %v4295
        %4297 = vxpose.xlu0.b32.start [1/16] %v4282, 128
        %4298 = vxpose.xlu0.b32.cont [2/16] %v4284, 128
        %4299 = vxpose.xlu0.b32.cont [3/16] %v4286, 128
        %4300 = vxpose.xlu0.b32.cont [4/16] %v4288, 128
        %4301 = vxpose.xlu0.b32.cont [5/16] %v4290, 128
        %4302 = vxpose.xlu0.b32.cont [6/16] %v4292, 128
        %4303 = vxpose.xlu0.b32.cont [7/16] %v4294, 128
        %4304 = vxpose.xlu0.b32.cont [8/16] %v4296, 128
        %4305 = vxpose.xlu0.b32.cont [9/16] 0.0, 128
        %4306 = vxpose.xlu0.b32.cont [10/16] 0.0, 128
        %4307 = vxpose.xlu0.b32.cont [11/16] 0.0, 128
        %4308 = vxpose.xlu0.b32.cont [12/16] 0.0, 128
        %4309 = vxpose.xlu0.b32.cont [13/16] 0.0, 128
        %4310 = vxpose.xlu0.b32.cont [14/16] 0.0, 128
        %4311 = vxpose.xlu0.b32.cont [15/16] 0.0, 128
        %4312 = vxpose.xlu0.b32.end [16/16] 0.0, 128
        %v4313 = vpop.trf.xlu0
        %v4314 = vpop.trf.xlu0
        %v4315 = vpop.trf.xlu0
        %v4316 = vpop.trf.xlu0
        %v4317 = vpop.trf.xlu0
        %v4318 = vpop.trf.xlu0
        %v4319 = vpop.trf.xlu0
        %v4320 = vpop.trf.xlu0
        %v4321 = vpop.trf.xlu0
        %v4322 = vpop.trf.xlu0
        %v4323 = vpop.trf.xlu0
        %v4324 = vpop.trf.xlu0
        %v4325 = vpop.trf.xlu0
        %v4326 = vpop.trf.xlu0
        %v4327 = vpop.trf.xlu0
        %v4328 = vpop.trf.xlu0
        %4329 = vst.msk [vmem:[%s271] sm:$0xff] %vm344, %v4313
        %4330 = vst.msk [vmem:[%s271 + $0x8] sm:$0xff] %vm344, %v4314
        %4331 = vst.msk [vmem:[%s271 + $0x10] sm:$0xff] %vm344, %v4315
        %4332 = vst.msk [vmem:[%s271 + $0x18] sm:$0xff] %vm344, %v4316
        %4333 = vst.msk [vmem:[%s271 + $0x20] sm:$0xff] %vm344, %v4317
        %4334 = vst.msk [vmem:[%s271 + $0x28] sm:$0xff] %vm344, %v4318
        %4335 = vst.msk [vmem:[%s271 + $0x30] sm:$0xff] %vm344, %v4319
        %4336 = vst.msk [vmem:[%s271 + $0x38] sm:$0xff] %vm344, %v4320
        %s4337 = sand.u32 %s141, 1
        %s4338 = scalar_lea.sflag [#allocation7], %s4337
        %s4339 = sand.u32 %s141, 1
        %s4340 = smul.addr %s4339, 64
        %s4341 = scalar_lea.vmem [#allocation11], %s4340
        // Predicated region
        $region53: #{tpu_custom_call.1} parent=39 // pred_check
          %p4342 = pneg %p151
        $region54: #{tpu_custom_call.1} parent=39 // pred_check_branch
          %4344 = sbr.rel (%p4342) target = $region56
        $region55: #{tpu_custom_call.1} parent=39 // pred_region
          %s4346 = ssub.s32 1024, 1024
          %4347 = vsyncadd %s4338, %s4346
          %s4348 = smul.addr %s23, 8
          %s4349 = smul.addr %s4348, 128
          %s4350 = scalar_lea.hbm %s5, %s4349
          %s4351 = sshll.u32 %s4341, 4
          %s4352 = int_to_ptr.vmem [resolvable:$true] %s4351
          %4357 = dma.vmem_to_hbm [thread:$0]  %s4352, 1024, %s4350, %s4338, 128, 128, 8
        $region56: #{tpu_custom_call.1} parent=39 // pred_fallthru
          _
      $region40: #{tpu_custom_call.1} parent=5 // pred_fallthru
        _
      %p4358 = scmp.le.s32.totalorder 2, %s18
      // Predicated region
      $region57: #{tpu_custom_call.1} parent=5 // pred_check
        %p4359 = pneg %p4358
      $region58: #{tpu_custom_call.1} parent=5 // pred_check_branch
        %4361 = sbr.rel (%p4359) target = $region60
      $region59: #{tpu_custom_call.1} parent=5 // pred_region
        %s4362 = ssub.s32 %s18, 2
        // Predicated region
        $region61: #{tpu_custom_call.1} parent=59 // pred_check
          %p4363 = pneg %p157
        $region62: #{tpu_custom_call.1} parent=59 // pred_check_branch
          %4365 = sbr.rel (%p4363) target = $region64
        $region63: #{tpu_custom_call.1} parent=59 // pred_region
          %s4366 = sand.u32 %s142, 1
          %s4367 = scalar_lea.sflag [#allocation7], %s4366
          %s4368 = sand.u32 %s142, 1
          %s4369 = smul.addr %s4368, 64
          %s4370 = scalar_lea.vmem [#allocation11], %s4369
          %4371 = dma.done %s4367, 1024
        $region64: #{tpu_custom_call.1} parent=59 // pred_fallthru
          _
      $region60: #{tpu_custom_call.1} parent=5 // pred_fallthru
        _
    $region6: #{tpu_custom_call.1} parent=1 // loop_footer
      %s22 = sadd.s32 1, %s18
    $region7: #{tpu_custom_call.1} parent=1 // loop_footer_branch
      %17 = sbr.rel target = $region3
    $region8: #{tpu_custom_call.1} parent=1 // loop_exit
      _
    %4372 = vsyncpa [#allocation6], 1
    %s4373 = scalar_lea.sflag [#allocation6], 1
    %4374 = vsyncpa %s4373, 1
    %4375 = vsyncpa [#allocation9], 1
    %4376 = vsyncpa [#allocation7], 1
    %s4377 = scalar_lea.sflag [#allocation7], 1
    %4378 = vsyncpa %s4377, 1

</llo_original>
